<compile_context>
chip_gen: v6e
topology: v6e:2x2x1
jax: 0.10.0
libtpu: 0.0.40
codegen_flags: <defaults>
</compile_context>

<pallas_src>
import jax
import jax.numpy as jnp
from jax import lax
from jax.experimental import pallas as pl
from jax.experimental.pallas import tpu as pltpu


def bottleneck_kernel(x_top_ref, x_ref, x_bot_ref,
                      w1_ref, w2_ref, w3_ref,
                      b1_ref, b2_ref, b3_ref,
                      out_ref):
    # x_top_ref: (1, 1,  W, Cin)   row above this H-tile (clamped at the border)
    # x_ref:     (1, TH, W, Cin)   main H-tile
    # x_bot_ref: (1, 1,  W, Cin)   row below this H-tile (clamped at the border)
    # w1_ref:    (Cin, P)   bf16   1x1 conv1 weights (BN1 scale folded in)
    # w2_ref:    (9*P, P)   bf16   3x3 conv2 weights, taps along K (BN2 scale folded)
    # w3_ref:    (P, Cout)  bf16   1x1 conv3 weights (BN3 scale folded in)
    # b*_ref:    (1, C)     f32    folded BN biases
    # out_ref:   (1, TH, W, Cout)
    TH = out_ref.shape[1]
    W = out_ref.shape[2]
    Cout = out_ref.shape[3]
    Cin = x_ref.shape[3]
    P = w1_ref.shape[1]
    M = TH * W                      # pixels in this tile
    EM = (TH + 2) * W               # pixels incl. 1-row halo above and below

    t = pl.program_id(1)
    n_tiles = pl.num_programs(1)

    # Pixel-major slabs (layout-preserving leading-dim merges).
    x_mid = x_ref[0].reshape(M, Cin)
    x_top = x_top_ref[0, 0]                                   # (W, Cin)
    x_bot = x_bot_ref[0, 0]                                   # (W, Cin)
    x_ext = jnp.concatenate([x_top, x_mid, x_bot], axis=0)    # (EM, Cin), W%8 offsets

    # ---- conv1 (1x1) + bn1(bias) + relu on the extended slab (halo rows included,
    #      conv1 is pointwise so recomputing 2 rows is cheap) ----
    y1 = jnp.dot(x_ext.astype(jnp.bfloat16), w1_ref[...],
                 preferred_element_type=jnp.float32)          # (EM, P) f32
    y1 = jnp.maximum(y1 + b1_ref[0], 0.0)

    # Halo rows at the image border are conv2's zero padding -> zero them *after*
    # conv1+bn+relu (padding lives in the activation space of conv2's input).
    row = lax.broadcasted_iota(jnp.int32, (EM, 1), 0)
    top_keep = jnp.where(t == 0, 0.0, 1.0)
    bot_keep = jnp.where(t == n_tiles - 1, 0.0, 1.0)
    halo_mask = (jnp.where(row < W, top_keep, 1.0) *
                 jnp.where(row >= EM - W, bot_keep, 1.0))
    y1 = y1 * halo_mask

    # Column masks for the +/-1 horizontal shifts (left/right zero padding).  In the
    # flat (rows, P) layout a dx shift is a sublane roll by 1; the rows that wrap
    # across a W boundary are exactly the column-OOB positions, which the mask zeroes.
    w_idx = row % W
    right_mask = jnp.where(w_idx == W - 1, 0.0, 1.0)          # for kx = 0 (reads w-1)
    left_mask = jnp.where(w_idx == 0, 0.0, 1.0)               # for kx = 2 (reads w+1)

    base_kx = [
        pltpu.roll(y1 * right_mask, shift=1, axis=0).astype(jnp.bfloat16),      # kx=0
        y1.astype(jnp.bfloat16),                                                # kx=1
        pltpu.roll(y1 * left_mask, shift=EM - 1, axis=0).astype(jnp.bfloat16),  # kx=2
    ]

    # ---- conv2 (3x3, pad=1, stride=1): 9 tap-accumulated matmuls, K=P each.
    #      The dy shift is a W-aligned static slice of the extended base. ----
    acc = jnp.zeros((M, P), jnp.float32)
    for ky in range(3):
        for kx in range(3):
            tap = ky * 3 + kx
            shifted = base_kx[kx][ky * W: ky * W + M]          # (M, P) bf16
            w_tap = w2_ref[tap * P:(tap + 1) * P, :]           # (P, P) bf16
            acc = acc + jnp.dot(shifted, w_tap,
                                preferred_element_type=jnp.float32)
    y2 = jnp.maximum(acc + b2_ref[0], 0.0)

    # ---- conv3 (1x1) + bn3(bias) + identity residual + relu (all f32) ----
    y3 = jnp.dot(y2.astype(jnp.bfloat16), w3_ref[...],
                 preferred_element_type=jnp.float32)           # (M, Cout) f32
    out = jnp.maximum(y3 + b3_ref[0] + x_mid.astype(jnp.float32), 0.0)
    out_ref[0] = out.reshape(TH, W, Cout).astype(out_ref.dtype)


def _fold_bn(bn, eps):
    gamma, beta, mean, var = bn
    scale = (gamma / jnp.sqrt(var + eps)).astype(jnp.float32)
    bias = (beta - mean * scale).astype(jnp.float32)
    return scale, bias


def bottleneck_pallas_nhwc(x_nhwc, w1_oihw, w2_oihw, w3_oihw, bn1, bn2, bn3,
                           eps=1e-5, tile_h=None):
    """Bottleneck forward (eval mode), NHWC in / NHWC out, stride=1, downsample=None.

    x_nhwc: (N, H, W, Cin) f32 or bf16.  Returns (N, H, W, planes*4), same dtype.
    Keep activations NHWC across consecutive blocks to avoid HBM relayouts.
    """
    N, H, W, Cin = x_nhwc.shape
    P = w1_oihw.shape[0]            # planes
    Cout = w3_oihw.shape[0]         # planes * expansion
    assert Cin == Cout, "identity residual requires inplanes == planes * 4"
    assert W % 8 == 0, "W must be a multiple of 8 for aligned row-offset slices"

    if tile_h is None:
        # Largest divisor of H giving roughly <= 4096 pixels per tile (keeps the
        # double-buffered tile well under VMEM while M = TH*W stays MXU-friendly).
        target = max(1, 4096 // W)
        tile_h = 1
        for d in range(1, H + 1):
            if H % d == 0 and d <= target:
                tile_h = d
    assert H % tile_h == 0
    n_tiles = H // tile_h

    s1, b1 = _fold_bn(bn1, eps)
    s2, b2 = _fold_bn(bn2, eps)
    s3, b3 = _fold_bn(bn3, eps)

    # Fold BN scales into the bf16 MXU weights; kernel only adds biases.
    w1_m = (jnp.transpose(w1_oihw[:, :, 0, 0], (1, 0)) * s1[None, :]).astype(jnp.bfloat16)
    w3_m = (jnp.transpose(w3_oihw[:, :, 0, 0], (1, 0)) * s3[None, :]).astype(jnp.bfloat16)
    w2_m = (jnp.transpose(w2_oihw, (2, 3, 1, 0)).reshape(9 * P, P)
            * s2[None, :]).astype(jnp.bfloat16)
    b1 = b1.reshape(1, P)
    b2 = b2.reshape(1, P)
    b3 = b3.reshape(1, Cout)

    def xmain_map(n, t):
        return (n, t, 0, 0)

    def xtop_map(n, t):
        return (n, jnp.maximum(t * tile_h - 1, 0), 0, 0)

    def xbot_map(n, t):
        return (n, jnp.minimum((t + 1) * tile_h, H - 1), 0, 0)

    const = lambda n, t: (0, 0)   # weights/biases stay VMEM-resident across the grid

    # Cost estimate (lets XLA overlap the custom call with neighboring ops).
    flops = 2 * N * H * W * (Cin * P + 9 * P * P + P * Cout)
    weight_bytes = (Cin * P + 9 * P * P + P * Cout) * 2 + (2 * P + Cout) * 4
    bytes_accessed = (x_nhwc.size + N * H * W * Cout) * x_nhwc.dtype.itemsize + weight_bytes
    cost = pl.CostEstimate(flops=flops, transcendentals=0, bytes_accessed=bytes_accessed)

    # VMEM limit sized to the double-buffered tile footprint + intermediates.
    itemsize = x_nhwc.dtype.itemsize
    tile_in = (tile_h + 2) * W * Cin * itemsize
    tile_out = tile_h * W * Cout * itemsize
    ext_rows = (tile_h + 2) * W
    interm = ext_rows * P * 4 * 6 + tile_h * W * max(P, Cout) * 4 * 3
    vmem_limit = int(2 * (tile_in + tile_out) + weight_bytes + interm + (8 << 20))
    vmem_limit = min(max(vmem_limit, 32 << 20), 64 << 20)

    out = pl.pallas_call(
        bottleneck_kernel,
        out_shape=jax.ShapeDtypeStruct((N, H, W, Cout), x_nhwc.dtype),
        grid_spec=pltpu.PrefetchScalarGridSpec(
            num_scalar_prefetch=0,
            grid=(N, n_tiles),
            in_specs=[
                pl.BlockSpec((1, 1, W, Cin), xtop_map),
                pl.BlockSpec((1, tile_h, W, Cin), xmain_map),
                pl.BlockSpec((1, 1, W, Cin), xbot_map),
                pl.BlockSpec((Cin, P), const),
                pl.BlockSpec((9 * P, P), const),
                pl.BlockSpec((P, Cout), const),
                pl.BlockSpec((1, P), const),
                pl.BlockSpec((1, P), const),
                pl.BlockSpec((1, Cout), const),
            ],
            out_specs=pl.BlockSpec((1, tile_h, W, Cout), xmain_map),
        ),
        compiler_params=pltpu.CompilerParams(
            dimension_semantics=("parallel", "parallel"),
            vmem_limit_bytes=vmem_limit),
        cost_estimate=cost,
    )(x_nhwc, x_nhwc, x_nhwc, w1_m, w2_m, w3_m, b1, b2, b3)
    return out


def bottleneck_ref(x, w1, w2, w3, bn1, bn2, bn3, eps=1e-5):
    """Pure-JAX f32 reference (lax conv), NCHW semantics like PyTorch eval mode."""
    def bn(y, p):
        gamma, beta, mean, var = p
        s = gamma / jnp.sqrt(var + eps)
        b = beta - mean * s
        return y * s.reshape(1, -1, 1, 1) + b.reshape(1, -1, 1, 1)

    dn = ('NCHW', 'OIHW', 'NCHW')
    y = lax.conv_general_dilated(x, w1, (1, 1), 'SAME', dimension_numbers=dn)
    y = jnp.maximum(bn(y, bn1), 0.0)
    y = lax.conv_general_dilated(y, w2, (1, 1), 'SAME', dimension_numbers=dn)
    y = jnp.maximum(bn(y, bn2), 0.0)
    y = lax.conv_general_dilated(y, w3, (1, 1), 'SAME', dimension_numbers=dn)
    y = bn(y, bn3) + x
    return jnp.maximum(y, 0.0)


if __name__ == "__main__":
    key = jax.random.PRNGKey(0)
    keys = jax.random.split(key, 16)

    # Small but lane-friendly Bottleneck config: planes=32 -> out channels 128,
    # inplanes = planes*4 = 128 (identity residual), stride=1, downsample=None.
    N, planes, H, W = 2, 32, 16, 16
    Cin = planes * 4
    Cout = planes * 4

    x_nchw = jax.random.normal(keys[0], (N, Cin, H, W), jnp.float32)
    w1 = jax.random.normal(keys[1], (planes, Cin, 1, 1), jnp.float32) * 0.1
    w2 = jax.random.normal(keys[2], (planes, planes, 3, 3), jnp.float32) * 0.1
    w3 = jax.random.normal(keys[3], (Cout, planes, 1, 1), jnp.float32) * 0.1

    def mk_bn(kg, kb, km, kv, c):
        return (jax.random.normal(kg, (c,), jnp.float32) * 0.1 + 1.0,           # gamma
                jax.random.normal(kb, (c,), jnp.float32) * 0.1,                 # beta
                jax.random.normal(km, (c,), jnp.float32) * 0.1,                 # running_mean
                jnp.abs(jax.random.normal(kv, (c,), jnp.float32)) * 0.1 + 1.0)  # running_var

    bn1 = mk_bn(keys[4], keys[5], keys[6], keys[7], planes)
    bn2 = mk_bn(keys[8], keys[9], keys[10], keys[11], planes)
    bn3 = mk_bn(keys[12], keys[13], keys[14], keys[15], Cout)

    # Network keeps NHWC; this transpose represents the one-time layout choice at
    # the model boundary, not a per-block cost.
    x_nhwc = jnp.transpose(x_nchw, (0, 2, 3, 1))

    # tile_h=8 -> 2 H-tiles per image: exercises the halo / border-padding paths
    # and gives a (N, H_tiles) = (2, 2) parallel grid.
    out_nhwc = bottleneck_pallas_nhwc(x_nhwc, w1, w2, w3, bn1, bn2, bn3, tile_h=8)
    out_nhwc = jax.block_until_ready(out_nhwc)

    ref_nhwc = jnp.transpose(bottleneck_ref(x_nchw, w1, w2, w3, bn1, bn2, bn3),
                             (0, 2, 3, 1))
    assert out_nhwc.shape == (N, H, W, Cout)
    # bf16 MXU operands (with BN scale folded before the bf16 cast) vs f32 reference.
    max_err = float(jnp.max(jnp.abs(out_nhwc - ref_nhwc)))
    assert jnp.allclose(out_nhwc, ref_nhwc, atol=5e-2, rtol=5e-2), max_err

    print("KERNEL_OK")
</pallas_src>

<mosaic_0001>
module attributes {stable_mosaic.version = 11 : i64} {
  func.func @bottleneck_kernel(%arg0: i32, %arg1: i32, %arg2: memref<1x1x16x128xf32, #tpu.memory_space<vmem>>, %arg3: memref<1x8x16x128xf32, #tpu.memory_space<vmem>>, %arg4: memref<1x1x16x128xf32, #tpu.memory_space<vmem>>, %arg5: memref<128x32xbf16, #tpu.memory_space<vmem>>, %arg6: memref<288x32xbf16, #tpu.memory_space<vmem>>, %arg7: memref<32x128xbf16, #tpu.memory_space<vmem>>, %arg8: memref<1x32xf32, #tpu.memory_space<vmem>>, %arg9: memref<1x32xf32, #tpu.memory_space<vmem>>, %arg10: memref<1x128xf32, #tpu.memory_space<vmem>>, %arg11: memref<1x8x16x128xf32, #tpu.memory_space<vmem>>) attributes {dimension_semantics = [#tpu.dimension_semantics<parallel>, #tpu.dimension_semantics<parallel>], iteration_bounds = array<i64: 2, 2>, scalar_prefetch = 0 : i64, scratch_operands = 0 : i64, tpu.core_type = #tpu.core_type<tc>, window_params = [{transform_indices = @transform_0, window_bounds = array<i64: 1, 1, 16, 128>}, {transform_indices = @transform_1, window_bounds = array<i64: 1, 8, 16, 128>}, {transform_indices = @transform_2, window_bounds = array<i64: 1, 1, 16, 128>}, {pipeline_mode = #tpu.pipeline_mode<synchronous>, transform_indices = @transform_3, window_bounds = array<i64: 128, 32>}, {pipeline_mode = #tpu.pipeline_mode<synchronous>, transform_indices = @transform_4, window_bounds = array<i64: 288, 32>}, {pipeline_mode = #tpu.pipeline_mode<synchronous>, transform_indices = @transform_5, window_bounds = array<i64: 32, 128>}, {pipeline_mode = #tpu.pipeline_mode<synchronous>, transform_indices = @transform_6, window_bounds = array<i64: 1, 32>}, {pipeline_mode = #tpu.pipeline_mode<synchronous>, transform_indices = @transform_7, window_bounds = array<i64: 1, 32>}, {pipeline_mode = #tpu.pipeline_mode<synchronous>, transform_indices = @transform_8, window_bounds = array<i64: 1, 128>}, {transform_indices = @transform_9, window_bounds = array<i64: 1, 8, 16, 128>}]} {
    %c0 = arith.constant 0 : index
    %c0_0 = arith.constant 0 : index
    %c0_1 = arith.constant 0 : index
    %c0_2 = arith.constant 0 : index
    %0 = vector.load %arg3[%c0, %c0_0, %c0_1, %c0_2] : memref<1x8x16x128xf32, #tpu.memory_space<vmem>>, vector<1x8x16x128xf32>
    %1 = vector.shape_cast %0 : vector<1x8x16x128xf32> to vector<8x16x128xf32>
    %2 = vector.shape_cast %1 : vector<8x16x128xf32> to vector<128x128xf32>
    %c0_3 = arith.constant 0 : index
    %c0_4 = arith.constant 0 : index
    %c0_5 = arith.constant 0 : index
    %c0_6 = arith.constant 0 : index
    %3 = vector.load %arg2[%c0_3, %c0_4, %c0_5, %c0_6] : memref<1x1x16x128xf32, #tpu.memory_space<vmem>>, vector<1x1x16x128xf32>
    %4 = vector.shape_cast %3 : vector<1x1x16x128xf32> to vector<16x128xf32>
    %c0_7 = arith.constant 0 : index
    %c0_8 = arith.constant 0 : index
    %c0_9 = arith.constant 0 : index
    %c0_10 = arith.constant 0 : index
    %5 = vector.load %arg4[%c0_7, %c0_8, %c0_9, %c0_10] : memref<1x1x16x128xf32, #tpu.memory_space<vmem>>, vector<1x1x16x128xf32>
    %6 = vector.shape_cast %5 : vector<1x1x16x128xf32> to vector<16x128xf32>
    %7 = tpu.concatenate %4, %2, %6 in 0 : vector<16x128xf32>, vector<128x128xf32>, vector<16x128xf32> -> vector<160x128xf32>
    %8 = arith.truncf %7 : vector<160x128xf32> to vector<160x128xbf16>
    %c0_11 = arith.constant 0 : index
    %c0_12 = arith.constant 0 : index
    %9 = vector.load %arg5[%c0_11, %c0_12] : memref<128x32xbf16, #tpu.memory_space<vmem>>, vector<128x32xbf16>
    %cst = arith.constant dense<0.000000e+00> : vector<160x32xf32>
    %10 = tpu.matmul %8, %9, %cst {dimension_numbers = #tpu.dot_dimension_numbers<[1], [0], [0], [1], [0, 0, 1, 1], [], []>} : vector<160x128xbf16>, vector<128x32xbf16>, vector<160x32xf32> -> vector<160x32xf32>
    %c0_13 = arith.constant 0 : index
    %c0_14 = arith.constant 0 : index
    %11 = vector.load %arg8[%c0_13, %c0_14] : memref<1x32xf32, #tpu.memory_space<vmem>>, vector<1x32xf32>
    %12 = vector.shape_cast %11 : vector<1x32xf32> to vector<32xf32>
    %13 = vector.shape_cast %12 : vector<32xf32> to vector<1x32xf32>
    %14 = vector.broadcast %13 : vector<1x32xf32> to vector<160x32xf32>
    %15 = arith.addf %10, %14 : vector<160x32xf32>
    %cst_15 = arith.constant 0.000000e+00 : f32
    %16 = vector.broadcast %cst_15 : f32 to vector<160x32xf32>
    %17 = arith.maximumf %15, %16 : vector<160x32xf32>
    %18 = tpu.iota {dimensions = array<i32: 0>} : vector<160x1xi32>
    %c0_i32 = arith.constant 0 : i32
    %19 = arith.cmpi eq, %arg1, %c0_i32 : i32
    %cst_16 = arith.constant 0.000000e+00 : f32
    %cst_17 = arith.constant 1.000000e+00 : f32
    %20 = arith.select %19, %cst_16, %cst_17 : f32
    %c1_i32 = arith.constant 1 : i32
    %21 = arith.cmpi eq, %arg1, %c1_i32 : i32
    %cst_18 = arith.constant 0.000000e+00 : f32
    %cst_19 = arith.constant 1.000000e+00 : f32
    %22 = arith.select %21, %cst_18, %cst_19 : f32
    %c16_i32 = arith.constant 16 : i32
    %23 = vector.broadcast %c16_i32 : i32 to vector<160x1xi32>
    %24 = arith.cmpi slt, %18, %23 : vector<160x1xi32>
    %cst_20 = arith.constant 1.000000e+00 : f32
    %25 = vector.broadcast %20 : f32 to vector<160x1xf32>
    %26 = vector.broadcast %cst_20 : f32 to vector<160x1xf32>
    %27 = arith.select %24, %25, %26 : vector<160x1xi1>, vector<160x1xf32>
    %c144_i32 = arith.constant 144 : i32
    %28 = vector.broadcast %c144_i32 : i32 to vector<160x1xi32>
    %29 = arith.cmpi sge, %18, %28 : vector<160x1xi32>
    %cst_21 = arith.constant 1.000000e+00 : f32
    %30 = vector.broadcast %22 : f32 to vector<160x1xf32>
    %31 = vector.broadcast %cst_21 : f32 to vector<160x1xf32>
    %32 = arith.select %29, %30, %31 : vector<160x1xi1>, vector<160x1xf32>
    %33 = arith.mulf %27, %32 : vector<160x1xf32>
    %34 = vector.broadcast %33 : vector<160x1xf32> to vector<160x32xf32>
    %35 = arith.mulf %17, %34 : vector<160x32xf32>
    %c16_i32_22 = arith.constant 16 : i32
    %c0_i32_23 = arith.constant 0 : i32
    %36 = arith.cmpi eq, %c16_i32_22, %c0_i32_23 : i32
    %c1_i32_24 = arith.constant 1 : i32
    %37 = arith.select %36, %c1_i32_24, %c16_i32_22 : i32
    %38 = vector.broadcast %37 : i32 to vector<160x1xi32>
    %39 = arith.remsi %18, %38 : vector<160x1xi32>
    %c0_i32_25 = arith.constant 0 : i32
    %40 = vector.broadcast %c0_i32_25 : i32 to vector<160x1xi32>
    %41 = arith.cmpi ne, %39, %40 : vector<160x1xi32>
    %c0_i32_26 = arith.constant 0 : i32
    %42 = vector.broadcast %c0_i32_26 : i32 to vector<160x1xi32>
    %43 = arith.cmpi slt, %39, %42 : vector<160x1xi32>
    %c0_i32_27 = arith.constant 0 : i32
    %44 = arith.cmpi slt, %37, %c0_i32_27 : i32
    %45 = vector.broadcast %44 : i1 to vector<160x1xi1>
    %46 = vector.broadcast %45 : vector<160x1xi1> to vector<160x1xi1>
    %47 = arith.xori %43, %46 : vector<160x1xi1>
    %48 = arith.andi %47, %41 : vector<160x1xi1>
    %49 = vector.broadcast %37 : i32 to vector<160x1xi32>
    %50 = arith.addi %39, %49 : vector<160x1xi32>
    %51 = arith.select %48, %50, %39 : vector<160x1xi1>, vector<160x1xi32>
    %c15_i32 = arith.constant 15 : i32
    %52 = vector.broadcast %c15_i32 : i32 to vector<160x1xi32>
    %53 = arith.cmpi eq, %51, %52 : vector<160x1xi32>
    %cst_28 = arith.constant 0.000000e+00 : f32
    %cst_29 = arith.constant 1.000000e+00 : f32
    %54 = vector.broadcast %cst_28 : f32 to vector<160x1xf32>
    %55 = vector.broadcast %cst_29 : f32 to vector<160x1xf32>
    %56 = arith.select %53, %54, %55 : vector<160x1xi1>, vector<160x1xf32>
    %c0_i32_30 = arith.constant 0 : i32
    %57 = vector.broadcast %c0_i32_30 : i32 to vector<160x1xi32>
    %58 = arith.cmpi eq, %51, %57 : vector<160x1xi32>
    %cst_31 = arith.constant 0.000000e+00 : f32
    %cst_32 = arith.constant 1.000000e+00 : f32
    %59 = vector.broadcast %cst_31 : f32 to vector<160x1xf32>
    %60 = vector.broadcast %cst_32 : f32 to vector<160x1xf32>
    %61 = arith.select %58, %59, %60 : vector<160x1xi1>, vector<160x1xf32>
    %62 = vector.broadcast %56 : vector<160x1xf32> to vector<160x32xf32>
    %63 = arith.mulf %35, %62 : vector<160x32xf32>
    %c1_i32_33 = arith.constant 1 : i32
    %64 = tpu.dynamic_rotate %63 by %c1_i32_33 dim 0 : vector<160x32xf32>, i32 -> vector<160x32xf32>
    %65 = arith.truncf %64 : vector<160x32xf32> to vector<160x32xbf16>
    %66 = arith.truncf %35 : vector<160x32xf32> to vector<160x32xbf16>
    %67 = vector.broadcast %61 : vector<160x1xf32> to vector<160x32xf32>
    %68 = arith.mulf %35, %67 : vector<160x32xf32>
    %c159_i32 = arith.constant 159 : i32
    %69 = tpu.dynamic_rotate %68 by %c159_i32 dim 0 : vector<160x32xf32>, i32 -> vector<160x32xf32>
    %70 = arith.truncf %69 : vector<160x32xf32> to vector<160x32xbf16>
    %cst_34 = arith.constant 0.000000e+00 : f32
    %71 = vector.broadcast %cst_34 : f32 to vector<128x32xf32>
    %72 = vector.extract_strided_slice %65 {offsets = [0, 0], sizes = [128, 32], strides = [1, 1]} : vector<160x32xbf16> to vector<128x32xbf16>
    %c0_35 = arith.constant 0 : index
    %c0_36 = arith.constant 0 : index
    %73 = vector.load %arg6[%c0_35, %c0_36] : memref<288x32xbf16, #tpu.memory_space<vmem>>, vector<32x32xbf16>
    %cst_37 = arith.constant dense<0.000000e+00> : vector<128x32xf32>
    %74 = tpu.matmul %72, %73, %cst_37 {dimension_numbers = #tpu.dot_dimension_numbers<[1], [0], [0], [1], [0, 0, 1, 1], [], []>} : vector<128x32xbf16>, vector<32x32xbf16>, vector<128x32xf32> -> vector<128x32xf32>
    %75 = arith.addf %71, %74 : vector<128x32xf32>
    %76 = vector.extract_strided_slice %66 {offsets = [0, 0], sizes = [128, 32], strides = [1, 1]} : vector<160x32xbf16> to vector<128x32xbf16>
    %c32 = arith.constant 32 : index
    %c0_38 = arith.constant 0 : index
    %77 = vector.load %arg6[%c32, %c0_38] : memref<288x32xbf16, #tpu.memory_space<vmem>>, vector<32x32xbf16>
    %cst_39 = arith.constant dense<0.000000e+00> : vector<128x32xf32>
    %78 = tpu.matmul %76, %77, %cst_39 {dimension_numbers = #tpu.dot_dimension_numbers<[1], [0], [0], [1], [0, 0, 1, 1], [], []>} : vector<128x32xbf16>, vector<32x32xbf16>, vector<128x32xf32> -> vector<128x32xf32>
    %79 = arith.addf %75, %78 : vector<128x32xf32>
    %80 = vector.extract_strided_slice %70 {offsets = [0, 0], sizes = [128, 32], strides = [1, 1]} : vector<160x32xbf16> to vector<128x32xbf16>
    %c64 = arith.constant 64 : index
    %c0_40 = arith.constant 0 : index
    %81 = vector.load %arg6[%c64, %c0_40] : memref<288x32xbf16, #tpu.memory_space<vmem>>, vector<32x32xbf16>
    %cst_41 = arith.constant dense<0.000000e+00> : vector<128x32xf32>
    %82 = tpu.matmul %80, %81, %cst_41 {dimension_numbers = #tpu.dot_dimension_numbers<[1], [0], [0], [1], [0, 0, 1, 1], [], []>} : vector<128x32xbf16>, vector<32x32xbf16>, vector<128x32xf32> -> vector<128x32xf32>
    %83 = arith.addf %79, %82 : vector<128x32xf32>
    %84 = vector.extract_strided_slice %65 {offsets = [16, 0], sizes = [128, 32], strides = [1, 1]} : vector<160x32xbf16> to vector<128x32xbf16>
    %c96 = arith.constant 96 : index
    %c0_42 = arith.constant 0 : index
    %85 = vector.load %arg6[%c96, %c0_42] : memref<288x32xbf16, #tpu.memory_space<vmem>>, vector<32x32xbf16>
    %cst_43 = arith.constant dense<0.000000e+00> : vector<128x32xf32>
    %86 = tpu.matmul %84, %85, %cst_43 {dimension_numbers = #tpu.dot_dimension_numbers<[1], [0], [0], [1], [0, 0, 1, 1], [], []>} : vector<128x32xbf16>, vector<32x32xbf16>, vector<128x32xf32> -> vector<128x32xf32>
    %87 = arith.addf %83, %86 : vector<128x32xf32>
    %88 = vector.extract_strided_slice %66 {offsets = [16, 0], sizes = [128, 32], strides = [1, 1]} : vector<160x32xbf16> to vector<128x32xbf16>
    %c128 = arith.constant 128 : index
    %c0_44 = arith.constant 0 : index
    %89 = vector.load %arg6[%c128, %c0_44] : memref<288x32xbf16, #tpu.memory_space<vmem>>, vector<32x32xbf16>
    %cst_45 = arith.constant dense<0.000000e+00> : vector<128x32xf32>
    %90 = tpu.matmul %88, %89, %cst_45 {dimension_numbers = #tpu.dot_dimension_numbers<[1], [0], [0], [1], [0, 0, 1, 1], [], []>} : vector<128x32xbf16>, vector<32x32xbf16>, vector<128x32xf32> -> vector<128x32xf32>
    %91 = arith.addf %87, %90 : vector<128x32xf32>
    %92 = vector.extract_strided_slice %70 {offsets = [16, 0], sizes = [128, 32], strides = [1, 1]} : vector<160x32xbf16> to vector<128x32xbf16>
    %c160 = arith.constant 160 : index
    %c0_46 = arith.constant 0 : index
    %93 = vector.load %arg6[%c160, %c0_46] : memref<288x32xbf16, #tpu.memory_space<vmem>>, vector<32x32xbf16>
    %cst_47 = arith.constant dense<0.000000e+00> : vector<128x32xf32>
    %94 = tpu.matmul %92, %93, %cst_47 {dimension_numbers = #tpu.dot_dimension_numbers<[1], [0], [0], [1], [0, 0, 1, 1], [], []>} : vector<128x32xbf16>, vector<32x32xbf16>, vector<128x32xf32> -> vector<128x32xf32>
    %95 = arith.addf %91, %94 : vector<128x32xf32>
    %96 = vector.extract_strided_slice %65 {offsets = [32, 0], sizes = [128, 32], strides = [1, 1]} : vector<160x32xbf16> to vector<128x32xbf16>
    %c192 = arith.constant 192 : index
    %c0_48 = arith.constant 0 : index
    %97 = vector.load %arg6[%c192, %c0_48] : memref<288x32xbf16, #tpu.memory_space<vmem>>, vector<32x32xbf16>
    %cst_49 = arith.constant dense<0.000000e+00> : vector<128x32xf32>
    %98 = tpu.matmul %96, %97, %cst_49 {dimension_numbers = #tpu.dot_dimension_numbers<[1], [0], [0], [1], [0, 0, 1, 1], [], []>} : vector<128x32xbf16>, vector<32x32xbf16>, vector<128x32xf32> -> vector<128x32xf32>
    %99 = arith.addf %95, %98 : vector<128x32xf32>
    %100 = vector.extract_strided_slice %66 {offsets = [32, 0], sizes = [128, 32], strides = [1, 1]} : vector<160x32xbf16> to vector<128x32xbf16>
    %c224 = arith.constant 224 : index
    %c0_50 = arith.constant 0 : index
    %101 = vector.load %arg6[%c224, %c0_50] : memref<288x32xbf16, #tpu.memory_space<vmem>>, vector<32x32xbf16>
    %cst_51 = arith.constant dense<0.000000e+00> : vector<128x32xf32>
    %102 = tpu.matmul %100, %101, %cst_51 {dimension_numbers = #tpu.dot_dimension_numbers<[1], [0], [0], [1], [0, 0, 1, 1], [], []>} : vector<128x32xbf16>, vector<32x32xbf16>, vector<128x32xf32> -> vector<128x32xf32>
    %103 = arith.addf %99, %102 : vector<128x32xf32>
    %104 = vector.extract_strided_slice %70 {offsets = [32, 0], sizes = [128, 32], strides = [1, 1]} : vector<160x32xbf16> to vector<128x32xbf16>
    %c256 = arith.constant 256 : index
    %c0_52 = arith.constant 0 : index
    %105 = vector.load %arg6[%c256, %c0_52] : memref<288x32xbf16, #tpu.memory_space<vmem>>, vector<32x32xbf16>
    %cst_53 = arith.constant dense<0.000000e+00> : vector<128x32xf32>
    %106 = tpu.matmul %104, %105, %cst_53 {dimension_numbers = #tpu.dot_dimension_numbers<[1], [0], [0], [1], [0, 0, 1, 1], [], []>} : vector<128x32xbf16>, vector<32x32xbf16>, vector<128x32xf32> -> vector<128x32xf32>
    %107 = arith.addf %103, %106 : vector<128x32xf32>
    %c0_54 = arith.constant 0 : index
    %c0_55 = arith.constant 0 : index
    %108 = vector.load %arg9[%c0_54, %c0_55] : memref<1x32xf32, #tpu.memory_space<vmem>>, vector<1x32xf32>
    %109 = vector.shape_cast %108 : vector<1x32xf32> to vector<32xf32>
    %110 = vector.shape_cast %109 : vector<32xf32> to vector<1x32xf32>
    %111 = vector.broadcast %110 : vector<1x32xf32> to vector<128x32xf32>
    %112 = arith.addf %107, %111 : vector<128x32xf32>
    %cst_56 = arith.constant 0.000000e+00 : f32
    %113 = vector.broadcast %cst_56 : f32 to vector<128x32xf32>
    %114 = arith.maximumf %112, %113 : vector<128x32xf32>
    %115 = arith.truncf %114 : vector<128x32xf32> to vector<128x32xbf16>
    %c0_57 = arith.constant 0 : index
    %c0_58 = arith.constant 0 : index
    %116 = vector.load %arg7[%c0_57, %c0_58] : memref<32x128xbf16, #tpu.memory_space<vmem>>, vector<32x128xbf16>
    %cst_59 = arith.constant dense<0.000000e+00> : vector<128x128xf32>
    %117 = tpu.matmul %115, %116, %cst_59 {dimension_numbers = #tpu.dot_dimension_numbers<[1], [0], [0], [1], [0, 0, 1, 1], [], []>} : vector<128x32xbf16>, vector<32x128xbf16>, vector<128x128xf32> -> vector<128x128xf32>
    %c0_60 = arith.constant 0 : index
    %c0_61 = arith.constant 0 : index
    %118 = vector.load %arg10[%c0_60, %c0_61] : memref<1x128xf32, #tpu.memory_space<vmem>>, vector<1x128xf32>
    %119 = vector.shape_cast %118 : vector<1x128xf32> to vector<128xf32>
    %120 = vector.shape_cast %119 : vector<128xf32> to vector<1x128xf32>
    %121 = vector.broadcast %120 : vector<1x128xf32> to vector<128x128xf32>
    %122 = arith.addf %117, %121 : vector<128x128xf32>
    %123 = arith.addf %122, %2 : vector<128x128xf32>
    %cst_62 = arith.constant 0.000000e+00 : f32
    %124 = vector.broadcast %cst_62 : f32 to vector<128x128xf32>
    %125 = arith.maximumf %123, %124 : vector<128x128xf32>
    %126 = vector.shape_cast %125 : vector<128x128xf32> to vector<8x16x128xf32>
    %c0_63 = arith.constant 0 : index
    %c0_64 = arith.constant 0 : index
    %c0_65 = arith.constant 0 : index
    %c0_66 = arith.constant 0 : index
    %127 = vector.load %arg11[%c0_63, %c0_64, %c0_65, %c0_66] : memref<1x8x16x128xf32, #tpu.memory_space<vmem>>, vector<1x8x16x128xf32>
    %128 = vector.shape_cast %127 : vector<1x8x16x128xf32> to vector<8x16x128xf32>
    %129 = vector.shape_cast %126 : vector<8x16x128xf32> to vector<1x8x16x128xf32>
    tpu.vector_store %arg11[%c0_63, %c0_64, %c0_65, %c0_66], %129 {strides = array<i32>} : memref<1x8x16x128xf32, #tpu.memory_space<vmem>>, vector<1x8x16x128xf32>,
    return
  }
  func.func @transform_0(%arg0: i32, %arg1: i32) -> (i32, i32, i32, i32) {
    %c8_i32 = arith.constant 8 : i32
    %0 = arith.muli %arg1, %c8_i32 : i32
    %c1_i32 = arith.constant 1 : i32
    %1 = arith.subi %0, %c1_i32 : i32
    %c0_i32 = arith.constant 0 : i32
    %2 = arith.maxsi %1, %c0_i32 : i32
    %c0_i32_0 = arith.constant 0 : i32
    %c0_i32_1 = arith.constant 0 : i32
    %c0_i32_2 = arith.constant 0 : i32
    return %arg0, %2, %c0_i32_0, %c0_i32_1 : i32, i32, i32, i32
  }
  func.func @transform_1(%arg0: i32, %arg1: i32) -> (i32, i32, i32, i32) {
    %c0_i32 = arith.constant 0 : i32
    %c0_i32_0 = arith.constant 0 : i32
    %c0_i32_1 = arith.constant 0 : i32
    return %arg0, %arg1, %c0_i32, %c0_i32_0 : i32, i32, i32, i32
  }
  func.func @transform_2(%arg0: i32, %arg1: i32) -> (i32, i32, i32, i32) {
    %c1_i32 = arith.constant 1 : i32
    %0 = arith.addi %arg1, %c1_i32 : i32
    %c8_i32 = arith.constant 8 : i32
    %1 = arith.muli %0, %c8_i32 : i32
    %c15_i32 = arith.constant 15 : i32
    %2 = arith.minsi %1, %c15_i32 : i32
    %c0_i32 = arith.constant 0 : i32
    %c0_i32_0 = arith.constant 0 : i32
    %c0_i32_1 = arith.constant 0 : i32
    return %arg0, %2, %c0_i32, %c0_i32_0 : i32, i32, i32, i32
  }
  func.func @transform_3(%arg0: i32, %arg1: i32) -> (i32, i32) {
    %c0_i32 = arith.constant 0 : i32
    %c0_i32_0 = arith.constant 0 : i32
    %c0_i32_1 = arith.constant 0 : i32
    return %c0_i32, %c0_i32_0 : i32, i32
  }
  func.func @transform_4(%arg0: i32, %arg1: i32) -> (i32, i32) {
    %c0_i32 = arith.constant 0 : i32
    %c0_i32_0 = arith.constant 0 : i32
    %c0_i32_1 = arith.constant 0 : i32
    return %c0_i32, %c0_i32_0 : i32, i32
  }
  func.func @transform_5(%arg0: i32, %arg1: i32) -> (i32, i32) {
    %c0_i32 = arith.constant 0 : i32
    %c0_i32_0 = arith.constant 0 : i32
    %c0_i32_1 = arith.constant 0 : i32
    return %c0_i32, %c0_i32_0 : i32, i32
  }
  func.func @transform_6(%arg0: i32, %arg1: i32) -> (i32, i32) {
    %c0_i32 = arith.constant 0 : i32
    %c0_i32_0 = arith.constant 0 : i32
    %c0_i32_1 = arith.constant 0 : i32
    return %c0_i32, %c0_i32_0 : i32, i32
  }
  func.func @transform_7(%arg0: i32, %arg1: i32) -> (i32, i32) {
    %c0_i32 = arith.constant 0 : i32
    %c0_i32_0 = arith.constant 0 : i32
    %c0_i32_1 = arith.constant 0 : i32
    return %c0_i32, %c0_i32_0 : i32, i32
  }
  func.func @transform_8(%arg0: i32, %arg1: i32) -> (i32, i32) {
    %c0_i32 = arith.constant 0 : i32
    %c0_i32_0 = arith.constant 0 : i32
    %c0_i32_1 = arith.constant 0 : i32
    return %c0_i32, %c0_i32_0 : i32, i32
  }
  func.func @transform_9(%arg0: i32, %arg1: i32) -> (i32, i32, i32, i32) {
    %c0_i32 = arith.constant 0 : i32
    %c0_i32_0 = arith.constant 0 : i32
    %c0_i32_1 = arith.constant 0 : i32
    return %arg0, %arg1, %c0_i32, %c0_i32_0 : i32, i32, i32, i32
  }
}

</mosaic_0001>

<llo_original>
// kernel: tpu_custom_call.1
$region0: #{tpu_custom_call.1}
  #allocation0 [shape = 'u32[]', space=smem, size = 0x4, offset = 0x4, fixed_abs, tag = 'smem constant byte address 0x4 - core index']
  #allocation1 [shape = 'u32[144,128]{1,0:T(1,128)}', space=vmem, size = 0x12000, scoped, tag = 'internal scratch']
  %s0 = inlined_call_operand.hbm [shape: f32[2,16,16,128], index: 0, kind: input, shape index: {}]
  %s1 = inlined_call_operand.hbm [shape: f32[2,16,16,128], index: 1, kind: input, shape index: {}]
  %s2 = inlined_call_operand.hbm [shape: f32[2,16,16,128], index: 2, kind: input, shape index: {}]
  %s3 = inlined_call_operand.vmem [shape: bf16[128,32], index: 3, kind: input, shape index: {}]
  %s4 = inlined_call_operand.vmem [shape: bf16[288,32], index: 4, kind: input, shape index: {}]
  %s5 = inlined_call_operand.vmem [shape: bf16[32,128], index: 5, kind: input, shape index: {}]
  %s6 = inlined_call_operand.vmem [shape: f32[1,32], index: 6, kind: input, shape index: {}]
  %s7 = inlined_call_operand.vmem [shape: f32[1,32], index: 7, kind: input, shape index: {}]
  %s8 = inlined_call_operand.vmem [shape: f32[1,128], index: 8, kind: input, shape index: {}]
  %s9 = inlined_call_operand.hbm [shape: f32[2,16,16,128], index: 9, kind: output, shape index: {}]
  %s10 = sld [smem:[#allocation0]]
  $region81: #{tpu_custom_call.1} parent=0
    _
  %s12 = ssub.s32 1, %s10
  %s13 = scalar_select 0, %s12, %s10
  $region1: #{tpu_custom_call.1} parent=0
    #allocation2 [shape = 'u8[16384]{0}', space=vmem, size = 0x4000, scoped, tag = 'input window, operand 0']
    #allocation3 [shape = 's32[2]{0}', space=sflag, size = 0x8, scoped, tag = 'scoped memory for tpu_custom_call.1']
    #allocation4 [shape = 's32[2]{0}', space=sflag, size = 0x8, scoped, tag = 'scoped memory for tpu_custom_call.1']
    #allocation5 [shape = 'u8[131072]{0}', space=vmem, size = 0x20000, scoped, tag = 'input window, operand 1']
    #allocation6 [shape = 's32[2]{0}', space=sflag, size = 0x8, scoped, tag = 'scoped memory for tpu_custom_call.1']
    #allocation7 [shape = 'u8[16384]{0}', space=vmem, size = 0x4000, scoped, tag = 'input window, operand 2']
    #allocation8 [shape = 'u8[131072]{0}', space=vmem, size = 0x20000, scoped, tag = 'output window, operand 0']
    %14 = vsyncpa [#allocation3], 0
    %s15 = scalar_lea.sflag [#allocation3], 1
    %16 = vsyncpa %s15, 0
    %17 = vsyncpa [#allocation6], 0
    %s18 = scalar_lea.sflag [#allocation6], 1
    %19 = vsyncpa %s18, 0
    %20 = vsyncpa [#allocation4], 0
    %s21 = scalar_lea.sflag [#allocation4], 1
    %22 = vsyncpa %s21, 0
    loop: start=0, step=1, limit=6
    $region2: #{tpu_custom_call.1} parent=1 // loop_pre_header
      _
    $region3: #{tpu_custom_call.1} parent=1 // loop_header
      %s24 = sphi 0, %s28
      %p25 = scmp.ge.s32.totalorder %s24, 6
      %s31 = sphi 0, %s43
      %s32 = sphi 0, %s39
      %s33 = sphi 0, %s31
      %s34 = sphi 0, %s32
      %s35 = sphi 0, %s33
      %s36 = sphi 0, %s34
      %s56 = sphi 0, %s58
      %s59 = sphi 0, %s56
      %s60 = sphi 0, %s59
      %s76 = sphi 0, %s60
      %s84 = sphi 0, %s86
      %s87 = sphi 0, %s84
      %s88 = sphi 0, %s87
      %s104 = sphi 0, %s88
      %s120 = sphi 0, %s122
      %s123 = sphi 0, %s120
      %s124 = sphi 0, %s123
      %s140 = sphi 0, %s124
      %s144 = sphi 0, %s144
      %s146 = sphi 0, %s144
      %s147 = sphi 0, %s146
      %s161 = sphi 0, %s147
      %s165 = sphi 0, %s165
      %s167 = sphi 0, %s165
      %s168 = sphi 0, %s167
      %s182 = sphi 0, %s168
      %s186 = sphi 0, %s186
      %s188 = sphi 0, %s186
      %s189 = sphi 0, %s188
      %s203 = sphi 0, %s189
      %s207 = sphi 0, %s207
      %s209 = sphi 0, %s207
      %s210 = sphi 0, %s209
      %s224 = sphi 0, %s210
      %s228 = sphi 0, %s228
      %s230 = sphi 0, %s228
      %s231 = sphi 0, %s230
      %s245 = sphi 0, %s231
      %s249 = sphi 0, %s249
      %s251 = sphi 0, %s249
      %s252 = sphi 0, %s251
      %s266 = sphi 0, %s252
      %s274 = sphi 0, %s276
      %s277 = sphi 0, %s274
      %s278 = sphi 0, %s277
      %s294 = sphi 0, %s278
    $region4: #{tpu_custom_call.1} parent=1 // loop_header_branch
      %27 = sbr.rel (%p25) target = $region8
    $region5: #{tpu_custom_call.1} parent=1 // loop_body
      %s29 = ssub.s32 %s24, 1
      %s30 = ssub.s32 %s24, 2
      %s37 = sadd.s32 1, %s32
      %p38 = scmp.ge.s32.totalorder %s37, 2
      %s39 = scalar_select %p38, 0, %s37
      %s40 = sadd.s32 1, %s31
      %s41 = scalar_select %p38, %s40, %s31
      %p42 = scmp.ge.s32.totalorder %s41, 2
      %s43 = scalar_select %p42, 0, %s41
      %s44 = smul.u32 %s32, 8
      %s45 = ssub.s32 %s44, 1
      %p46 = scmp.gt.s32.totalorder %s45, 0
      %s47 = scalar_select %p46, %s45, 0
      %s48 = smul.u32 %s39, 8
      %s49 = ssub.s32 %s48, 1
      %p50 = scmp.gt.s32.totalorder %s49, 0
      %s51 = scalar_select %p50, %s49, 0
      %s52 = ssub.s32 %s31, %s43
      %s53 = ssub.s32 %s47, %s51
      %s54 = sor.u32 %s52, %s53
      %p55 = scmp.eq.s32.totalorder %s54, 0
      %s57 = sadd.s32 %s56, 1
      %s58 = scalar_select %p55, %s56, %s57
      %p61 = pneg %p55
      %p62 = scmp.eq.s32.totalorder %s24, 3
      %p63 = por %p61, %p62
      %p64 = scmp.ne.s32.totalorder %s56, %s59
      %p65 = scmp.eq.s32.totalorder %s24, 0
      %p66 = por %p64, %p65
      %p67 = scmp.ne.s32.totalorder %s56, %s59
      %p68 = scmp.eq.s32.totalorder %s29, 3
      %p69 = por %p67, %p68
      %p70 = scmp.ne.s32.totalorder %s59, %s60
      %p71 = scmp.eq.s32.totalorder %s29, 0
      %p72 = por %p70, %p71
      %p73 = scmp.ne.s32.totalorder %s59, %s60
      %p74 = scmp.eq.s32.totalorder %s30, 3
      %p75 = por %p73, %p74
      %p77 = scmp.ne.s32.totalorder %s60, %s76
      %p78 = scmp.eq.s32.totalorder %s30, 0
      %p79 = por %p77, %p78
      %s80 = ssub.s32 %s31, %s43
      %s81 = ssub.s32 %s32, %s39
      %s82 = sor.u32 %s80, %s81
      %p83 = scmp.eq.s32.totalorder %s82, 0
      %s85 = sadd.s32 %s84, 1
      %s86 = scalar_select %p83, %s84, %s85
      %p89 = pneg %p83
      %p90 = scmp.eq.s32.totalorder %s24, 3
      %p91 = por %p89, %p90
      %p92 = scmp.ne.s32.totalorder %s84, %s87
      %p93 = scmp.eq.s32.totalorder %s24, 0
      %p94 = por %p92, %p93
      %p95 = scmp.ne.s32.totalorder %s84, %s87
      %p96 = scmp.eq.s32.totalorder %s29, 3
      %p97 = por %p95, %p96
      %p98 = scmp.ne.s32.totalorder %s87, %s88
      %p99 = scmp.eq.s32.totalorder %s29, 0
      %p100 = por %p98, %p99
      %p101 = scmp.ne.s32.totalorder %s87, %s88
      %p102 = scmp.eq.s32.totalorder %s30, 3
      %p103 = por %p101, %p102
      %p105 = scmp.ne.s32.totalorder %s88, %s104
      %p106 = scmp.eq.s32.totalorder %s30, 0
      %p107 = por %p105, %p106
      %s108 = sadd.s32 %s32, 1
      %s109 = smul.u32 %s108, 8
      %p110 = scmp.lt.s32.totalorder %s109, 15
      %s111 = scalar_select %p110, %s109, 15
      %s112 = sadd.s32 %s39, 1
      %s113 = smul.u32 %s112, 8
      %p114 = scmp.lt.s32.totalorder %s113, 15
      %s115 = scalar_select %p114, %s113, 15
      %s116 = ssub.s32 %s31, %s43
      %s117 = ssub.s32 %s111, %s115
      %s118 = sor.u32 %s116, %s117
      %p119 = scmp.eq.s32.totalorder %s118, 0
      %s121 = sadd.s32 %s120, 1
      %s122 = scalar_select %p119, %s120, %s121
      %p125 = pneg %p119
      %p126 = scmp.eq.s32.totalorder %s24, 3
      %p127 = por %p125, %p126
      %p128 = scmp.ne.s32.totalorder %s120, %s123
      %p129 = scmp.eq.s32.totalorder %s24, 0
      %p130 = por %p128, %p129
      %p131 = scmp.ne.s32.totalorder %s120, %s123
      %p132 = scmp.eq.s32.totalorder %s29, 3
      %p133 = por %p131, %p132
      %p134 = scmp.ne.s32.totalorder %s123, %s124
      %p135 = scmp.eq.s32.totalorder %s29, 0
      %p136 = por %p134, %p135
      %p137 = scmp.ne.s32.totalorder %s123, %s124
      %p138 = scmp.eq.s32.totalorder %s30, 3
      %p139 = por %p137, %p138
      %p141 = scmp.ne.s32.totalorder %s124, %s140
      %p142 = scmp.eq.s32.totalorder %s30, 0
      %p143 = por %p141, %p142
      %s145 = sadd.s32 %s144, 1
      %p148 = scmp.eq.s32.totalorder %s24, 3
      %p149 = scmp.ne.s32.totalorder %s144, %s146
      %p150 = scmp.eq.s32.totalorder %s24, 0
      %p151 = por %p149, %p150
      %p152 = scmp.ne.s32.totalorder %s144, %s146
      %p153 = scmp.eq.s32.totalorder %s29, 3
      %p154 = por %p152, %p153
      %p155 = scmp.ne.s32.totalorder %s146, %s147
      %p156 = scmp.eq.s32.totalorder %s29, 0
      %p157 = por %p155, %p156
      %p158 = scmp.ne.s32.totalorder %s146, %s147
      %p159 = scmp.eq.s32.totalorder %s30, 3
      %p160 = por %p158, %p159
      %p162 = scmp.ne.s32.totalorder %s147, %s161
      %p163 = scmp.eq.s32.totalorder %s30, 0
      %p164 = por %p162, %p163
      %s166 = sadd.s32 %s165, 1
      %p169 = scmp.eq.s32.totalorder %s24, 3
      %p170 = scmp.ne.s32.totalorder %s165, %s167
      %p171 = scmp.eq.s32.totalorder %s24, 0
      %p172 = por %p170, %p171
      %p173 = scmp.ne.s32.totalorder %s165, %s167
      %p174 = scmp.eq.s32.totalorder %s29, 3
      %p175 = por %p173, %p174
      %p176 = scmp.ne.s32.totalorder %s167, %s168
      %p177 = scmp.eq.s32.totalorder %s29, 0
      %p178 = por %p176, %p177
      %p179 = scmp.ne.s32.totalorder %s167, %s168
      %p180 = scmp.eq.s32.totalorder %s30, 3
      %p181 = por %p179, %p180
      %p183 = scmp.ne.s32.totalorder %s168, %s182
      %p184 = scmp.eq.s32.totalorder %s30, 0
      %p185 = por %p183, %p184
      %s187 = sadd.s32 %s186, 1
      %p190 = scmp.eq.s32.totalorder %s24, 3
      %p191 = scmp.ne.s32.totalorder %s186, %s188
      %p192 = scmp.eq.s32.totalorder %s24, 0
      %p193 = por %p191, %p192
      %p194 = scmp.ne.s32.totalorder %s186, %s188
      %p195 = scmp.eq.s32.totalorder %s29, 3
      %p196 = por %p194, %p195
      %p197 = scmp.ne.s32.totalorder %s188, %s189
      %p198 = scmp.eq.s32.totalorder %s29, 0
      %p199 = por %p197, %p198
      %p200 = scmp.ne.s32.totalorder %s188, %s189
      %p201 = scmp.eq.s32.totalorder %s30, 3
      %p202 = por %p200, %p201
      %p204 = scmp.ne.s32.totalorder %s189, %s203
      %p205 = scmp.eq.s32.totalorder %s30, 0
      %p206 = por %p204, %p205
      %s208 = sadd.s32 %s207, 1
      %p211 = scmp.eq.s32.totalorder %s24, 3
      %p212 = scmp.ne.s32.totalorder %s207, %s209
      %p213 = scmp.eq.s32.totalorder %s24, 0
      %p214 = por %p212, %p213
      %p215 = scmp.ne.s32.totalorder %s207, %s209
      %p216 = scmp.eq.s32.totalorder %s29, 3
      %p217 = por %p215, %p216
      %p218 = scmp.ne.s32.totalorder %s209, %s210
      %p219 = scmp.eq.s32.totalorder %s29, 0
      %p220 = por %p218, %p219
      %p221 = scmp.ne.s32.totalorder %s209, %s210
      %p222 = scmp.eq.s32.totalorder %s30, 3
      %p223 = por %p221, %p222
      %p225 = scmp.ne.s32.totalorder %s210, %s224
      %p226 = scmp.eq.s32.totalorder %s30, 0
      %p227 = por %p225, %p226
      %s229 = sadd.s32 %s228, 1
      %p232 = scmp.eq.s32.totalorder %s24, 3
      %p233 = scmp.ne.s32.totalorder %s228, %s230
      %p234 = scmp.eq.s32.totalorder %s24, 0
      %p235 = por %p233, %p234
      %p236 = scmp.ne.s32.totalorder %s228, %s230
      %p237 = scmp.eq.s32.totalorder %s29, 3
      %p238 = por %p236, %p237
      %p239 = scmp.ne.s32.totalorder %s230, %s231
      %p240 = scmp.eq.s32.totalorder %s29, 0
      %p241 = por %p239, %p240
      %p242 = scmp.ne.s32.totalorder %s230, %s231
      %p243 = scmp.eq.s32.totalorder %s30, 3
      %p244 = por %p242, %p243
      %p246 = scmp.ne.s32.totalorder %s231, %s245
      %p247 = scmp.eq.s32.totalorder %s30, 0
      %p248 = por %p246, %p247
      %s250 = sadd.s32 %s249, 1
      %p253 = scmp.eq.s32.totalorder %s24, 3
      %p254 = scmp.ne.s32.totalorder %s249, %s251
      %p255 = scmp.eq.s32.totalorder %s24, 0
      %p256 = por %p254, %p255
      %p257 = scmp.ne.s32.totalorder %s249, %s251
      %p258 = scmp.eq.s32.totalorder %s29, 3
      %p259 = por %p257, %p258
      %p260 = scmp.ne.s32.totalorder %s251, %s252
      %p261 = scmp.eq.s32.totalorder %s29, 0
      %p262 = por %p260, %p261
      %p263 = scmp.ne.s32.totalorder %s251, %s252
      %p264 = scmp.eq.s32.totalorder %s30, 3
      %p265 = por %p263, %p264
      %p267 = scmp.ne.s32.totalorder %s252, %s266
      %p268 = scmp.eq.s32.totalorder %s30, 0
      %p269 = por %p267, %p268
      %s270 = ssub.s32 %s31, %s43
      %s271 = ssub.s32 %s32, %s39
      %s272 = sor.u32 %s270, %s271
      %p273 = scmp.eq.s32.totalorder %s272, 0
      %s275 = sadd.s32 %s274, 1
      %s276 = scalar_select %p273, %s274, %s275
      %p279 = pneg %p273
      %p280 = scmp.eq.s32.totalorder %s24, 3
      %p281 = por %p279, %p280
      %p282 = scmp.ne.s32.totalorder %s274, %s277
      %p283 = scmp.eq.s32.totalorder %s24, 0
      %p284 = por %p282, %p283
      %p285 = scmp.ne.s32.totalorder %s274, %s277
      %p286 = scmp.eq.s32.totalorder %s29, 3
      %p287 = por %p285, %p286
      %p288 = scmp.ne.s32.totalorder %s277, %s278
      %p289 = scmp.eq.s32.totalorder %s29, 0
      %p290 = por %p288, %p289
      %p291 = scmp.ne.s32.totalorder %s277, %s278
      %p292 = scmp.eq.s32.totalorder %s30, 3
      %p293 = por %p291, %p292
      %p295 = scmp.ne.s32.totalorder %s278, %s294
      %p296 = scmp.eq.s32.totalorder %s30, 0
      %p297 = por %p295, %p296
      %p298 = scmp.le.s32.totalorder 1, %s24
      %p299 = scmp.lt.s32.totalorder %s24, 5
      %p300 = pnand %p298, %p299
      %p301 = pneg %p300
      // Predicated region
      $region9: #{tpu_custom_call.1} parent=5 // pred_check
        _
      $region10: #{tpu_custom_call.1} parent=5 // pred_check_branch
        %303 = sbr.rel (%p300) target = $region12
      $region11: #{tpu_custom_call.1} parent=5 // pred_region
        %s304 = ssub.s32 %s24, 1
        // Predicated region
        $region13: #{tpu_custom_call.1} parent=11 // pred_check
          %p305 = pneg %p157
        $region14: #{tpu_custom_call.1} parent=11 // pred_check_branch
          %307 = sbr.rel (%p305) target = $region16
        $region15: #{tpu_custom_call.1} parent=11 // pred_region
          _
        $region16: #{tpu_custom_call.1} parent=11 // pred_fallthru
          _
        // Predicated region
        $region17: #{tpu_custom_call.1} parent=11 // pred_check
          %p308 = pneg %p178
        $region18: #{tpu_custom_call.1} parent=11 // pred_check_branch
          %310 = sbr.rel (%p308) target = $region20
        $region19: #{tpu_custom_call.1} parent=11 // pred_region
          _
        $region20: #{tpu_custom_call.1} parent=11 // pred_fallthru
          _
        // Predicated region
        $region21: #{tpu_custom_call.1} parent=11 // pred_check
          %p311 = pneg %p199
        $region22: #{tpu_custom_call.1} parent=11 // pred_check_branch
          %313 = sbr.rel (%p311) target = $region24
        $region23: #{tpu_custom_call.1} parent=11 // pred_region
          _
        $region24: #{tpu_custom_call.1} parent=11 // pred_fallthru
          _
        // Predicated region
        $region25: #{tpu_custom_call.1} parent=11 // pred_check
          %p314 = pneg %p220
        $region26: #{tpu_custom_call.1} parent=11 // pred_check_branch
          %316 = sbr.rel (%p314) target = $region28
        $region27: #{tpu_custom_call.1} parent=11 // pred_region
          _
        $region28: #{tpu_custom_call.1} parent=11 // pred_fallthru
          _
        // Predicated region
        $region29: #{tpu_custom_call.1} parent=11 // pred_check
          %p317 = pneg %p241
        $region30: #{tpu_custom_call.1} parent=11 // pred_check_branch
          %319 = sbr.rel (%p317) target = $region32
        $region31: #{tpu_custom_call.1} parent=11 // pred_region
          _
        $region32: #{tpu_custom_call.1} parent=11 // pred_fallthru
          _
        // Predicated region
        $region33: #{tpu_custom_call.1} parent=11 // pred_check
          %p320 = pneg %p262
        $region34: #{tpu_custom_call.1} parent=11 // pred_check_branch
          %322 = sbr.rel (%p320) target = $region36
        $region35: #{tpu_custom_call.1} parent=11 // pred_region
          _
        $region36: #{tpu_custom_call.1} parent=11 // pred_fallthru
          _
      $region12: #{tpu_custom_call.1} parent=5 // pred_fallthru
        _
      %p323 = scmp.lt.s32.totalorder %s24, 4
      // Predicated region
      $region37: #{tpu_custom_call.1} parent=5 // pred_check
        %p324 = pneg %p323
      $region38: #{tpu_custom_call.1} parent=5 // pred_check_branch
        %326 = sbr.rel (%p324) target = $region40
      $region39: #{tpu_custom_call.1} parent=5 // pred_region
        // Predicated region
        $region41: #{tpu_custom_call.1} parent=39 // pred_check
          %p327 = pneg %p66
        $region42: #{tpu_custom_call.1} parent=39 // pred_check_branch
          %329 = sbr.rel (%p327) target = $region44
        $region43: #{tpu_custom_call.1} parent=39 // pred_region
          %s330 = sand.u32 %s56, 1
          %s331 = scalar_lea.sflag [#allocation3], %s330
          %s332 = sand.u32 %s56, 1
          %s333 = smul.addr %s332, 16
          %s334 = scalar_lea.vmem [#allocation2], %s333
          %s335 = smul.u32 %s32, 8
          %s336 = ssub.s32 %s335, 1
          %p337 = scmp.gt.s32.totalorder %s336, 0
          %s338 = scalar_select %p337, %s336, 0
          %s340 = ssub.s32 256, 256
          %341 = vsyncadd %s331, %s340
          %s342 = smul.addr %s338, 2
          %s343 = smul.addr %s31, 32
          %s344 = sadd.s32 %s342, %s343
          %s345 = smul.addr %s344, 128
          %s346 = scalar_lea.hbm %s0, %s345
          %s347 = sshll.u32 %s334, 4
          %s348 = int_to_ptr.vmem [resolvable:$true] %s347
          %353 = dma.hbm_to_vmem [thread:$0]  %s346, 256, %s348, %s331, 128, 128, 8
        $region44: #{tpu_custom_call.1} parent=39 // pred_fallthru
          _
        // Predicated region
        $region45: #{tpu_custom_call.1} parent=39 // pred_check
          %p354 = pneg %p94
        $region46: #{tpu_custom_call.1} parent=39 // pred_check_branch
          %356 = sbr.rel (%p354) target = $region48
        $region47: #{tpu_custom_call.1} parent=39 // pred_region
          %s357 = sand.u32 %s24, 1
          %s358 = scalar_lea.sflag [#allocation6], %s357
          %s359 = sand.u32 %s84, 1
          %s360 = smul.addr %s359, 128
          %s361 = scalar_lea.vmem [#allocation5], %s360
          %s362 = smul.u32 8, %s32
          %s364 = ssub.s32 2048, 2048
          %365 = vsyncadd %s358, %s364
          %s366 = smul.addr %s362, 2
          %s367 = smul.addr %s31, 32
          %s368 = sadd.s32 %s366, %s367
          %s369 = smul.addr %s368, 128
          %s370 = scalar_lea.hbm %s1, %s369
          %s371 = sshll.u32 %s361, 4
          %s372 = int_to_ptr.vmem [resolvable:$true] %s371
          %377 = dma.hbm_to_vmem [thread:$0]  %s370, 2048, %s372, %s358, 128, 128, 8
        $region48: #{tpu_custom_call.1} parent=39 // pred_fallthru
          _
        // Predicated region
        $region49: #{tpu_custom_call.1} parent=39 // pred_check
          %p378 = pneg %p130
        $region50: #{tpu_custom_call.1} parent=39 // pred_check_branch
          %380 = sbr.rel (%p378) target = $region52
        $region51: #{tpu_custom_call.1} parent=39 // pred_region
          %s381 = sand.u32 %s24, 1
          %s382 = scalar_lea.sflag [#allocation6], %s381
          %s383 = sand.u32 %s120, 1
          %s384 = smul.addr %s383, 16
          %s385 = scalar_lea.vmem [#allocation7], %s384
          %s386 = sadd.s32 %s32, 1
          %s387 = smul.u32 %s386, 8
          %p388 = scmp.lt.s32.totalorder %s387, 15
          %s389 = scalar_select %p388, %s387, 15
          %s391 = ssub.s32 256, 256
          %392 = vsyncadd %s382, %s391
          %s393 = smul.addr %s389, 2
          %s394 = smul.addr %s31, 32
          %s395 = sadd.s32 %s393, %s394
          %s396 = smul.addr %s395, 128
          %s397 = scalar_lea.hbm %s2, %s396
          %s398 = sshll.u32 %s385, 4
          %s399 = int_to_ptr.vmem [resolvable:$true] %s398
          %404 = dma.hbm_to_vmem [thread:$0]  %s397, 256, %s399, %s382, 128, 128, 8
        $region52: #{tpu_custom_call.1} parent=39 // pred_fallthru
          _
      $region40: #{tpu_custom_call.1} parent=5 // pred_fallthru
        _
      %p405 = scmp.le.s32.totalorder 1, %s24
      %p406 = scmp.lt.s32.totalorder %s24, 5
      %p407 = pnand %p405, %p406
      %p408 = pneg %p407
      // Predicated region
      $region53: #{tpu_custom_call.1} parent=5 // pred_check
        _
      $region54: #{tpu_custom_call.1} parent=5 // pred_check_branch
        %410 = sbr.rel (%p407) target = $region56
      $region55: #{tpu_custom_call.1} parent=5 // pred_region
        %s411 = ssub.s32 %s24, 1
        %s412 = sand.u32 %s59, 1
        %s413 = scalar_lea.sflag [#allocation3], %s412
        %s414 = sand.u32 %s59, 1
        %s415 = smul.addr %s414, 16
        %s416 = scalar_lea.vmem [#allocation2], %s415
        // Predicated region
        $region57: #{tpu_custom_call.1} parent=55 // pred_check
          %p417 = pneg %p72
        $region58: #{tpu_custom_call.1} parent=55 // pred_check_branch
          %419 = sbr.rel (%p417) target = $region60
        $region59: #{tpu_custom_call.1} parent=55 // pred_region
          %420 = dma.done %s413, 256
        $region60: #{tpu_custom_call.1} parent=55 // pred_fallthru
          _
        %s421 = sand.u32 %s29, 1
        %s422 = scalar_lea.sflag [#allocation6], %s421
        %s423 = sand.u32 %s87, 1
        %s424 = smul.addr %s423, 128
        %s425 = scalar_lea.vmem [#allocation5], %s424
        // Predicated region
        $region61: #{tpu_custom_call.1} parent=55 // pred_check
          %p426 = pneg %p100
        $region62: #{tpu_custom_call.1} parent=55 // pred_check_branch
          %428 = sbr.rel (%p426) target = $region64
        $region63: #{tpu_custom_call.1} parent=55 // pred_region
          %429 = dma.done %s422, 2048
        $region64: #{tpu_custom_call.1} parent=55 // pred_fallthru
          _
        %s430 = sand.u32 %s29, 1
        %s431 = scalar_lea.sflag [#allocation6], %s430
        %s432 = sand.u32 %s123, 1
        %s433 = smul.addr %s432, 16
        %s434 = scalar_lea.vmem [#allocation7], %s433
        // Predicated region
        $region65: #{tpu_custom_call.1} parent=55 // pred_check
          %p435 = pneg %p136
        $region66: #{tpu_custom_call.1} parent=55 // pred_check_branch
          %437 = sbr.rel (%p435) target = $region68
        $region67: #{tpu_custom_call.1} parent=55 // pred_region
          %438 = dma.done %s431, 256
        $region68: #{tpu_custom_call.1} parent=55 // pred_fallthru
          _
        %s439 = sand.u32 %s59, 1
        %s440 = scalar_lea.sflag [#allocation3], %s439
        %s441 = sand.u32 %s59, 1
        %s442 = smul.addr %s441, 16
        %s443 = scalar_lea.vmem [#allocation2], %s442
        %p444 = pneg %p72
        %p445 = pneg %p69
        %s446 = sand.u32 %s29, 1
        %s447 = scalar_lea.sflag [#allocation6], %s446
        %s448 = sand.u32 %s87, 1
        %s449 = smul.addr %s448, 128
        %s450 = scalar_lea.vmem [#allocation5], %s449
        %p451 = pneg %p100
        %p452 = pneg %p97
        %s453 = sand.u32 %s29, 1
        %s454 = scalar_lea.sflag [#allocation6], %s453
        %s455 = sand.u32 %s123, 1
        %s456 = smul.addr %s455, 16
        %s457 = scalar_lea.vmem [#allocation7], %s456
        %p458 = pneg %p136
        %p459 = pneg %p133
        %p460 = pneg %p157
        %p461 = pneg %p154
        %p462 = pneg %p178
        %p463 = pneg %p175
        %p464 = pneg %p199
        %p465 = pneg %p196
        %p466 = pneg %p220
        %p467 = pneg %p217
        %p468 = pneg %p241
        %p469 = pneg %p238
        %p470 = pneg %p262
        %p471 = pneg %p259
        %p472 = pneg %p290
        %p473 = pneg %p287
        %s474 = sand.u32 %s277, 1
        %s475 = scalar_lea.sflag [#allocation4], %s474
        %s476 = sand.u32 %s277, 1
        %s477 = smul.addr %s476, 128
        %s478 = scalar_lea.vmem [#allocation8], %s477
        %s479 = smul.u32 %s34, 8
        %s480 = ssub.s32 %s479, 1
        %p481 = scmp.gt.s32.totalorder %s480, 0
        %s482 = scalar_select %p481, %s480, 0
        %s483 = smul.u32 8, %s34
        %s484 = sadd.s32 %s34, 1
        %s485 = smul.u32 %s484, 8
        %p486 = scmp.lt.s32.totalorder %s485, 15
        %s487 = scalar_select %p486, %s485, 15
        %s488 = smul.u32 8, %s34
        %v490 = vld [vmem:[%s425] sm:$0xff]
        %v491 = vld [vmem:[%s425 + $0x8] sm:$0xff]
        %v492 = vld [vmem:[%s425 + $0x10] sm:$0xff]
        %v493 = vld [vmem:[%s425 + $0x18] sm:$0xff]
        %v494 = vld [vmem:[%s425 + $0x20] sm:$0xff]
        %v495 = vld [vmem:[%s425 + $0x28] sm:$0xff]
        %v496 = vld [vmem:[%s425 + $0x30] sm:$0xff]
        %v497 = vld [vmem:[%s425 + $0x38] sm:$0xff]
        %v498 = vld [vmem:[%s425 + $0x40] sm:$0xff]
        %v499 = vld [vmem:[%s425 + $0x48] sm:$0xff]
        %v500 = vld [vmem:[%s425 + $0x50] sm:$0xff]
        %v501 = vld [vmem:[%s425 + $0x58] sm:$0xff]
        %v502 = vld [vmem:[%s425 + $0x60] sm:$0xff]
        %v503 = vld [vmem:[%s425 + $0x68] sm:$0xff]
        %v504 = vld [vmem:[%s425 + $0x70] sm:$0xff]
        %v505 = vld [vmem:[%s425 + $0x78] sm:$0xff]
        %v506 = vld [vmem:[%s416] sm:$0xff]
        %v507 = vld [vmem:[%s416 + $0x8] sm:$0xff]
        %v508 = vld [vmem:[%s434] sm:$0xff]
        %v509 = vld [vmem:[%s434 + $0x8] sm:$0xff]
        %v510 = vpack.c.bf16 %v507, %v506
        %v511 = vpack.c.bf16 %v491, %v490
        %v512 = vpack.c.bf16 %v493, %v492
        %v513 = vpack.c.bf16 %v495, %v494
        %v514 = vpack.c.bf16 %v497, %v496
        %v515 = vpack.c.bf16 %v499, %v498
        %v516 = vpack.c.bf16 %v501, %v500
        %v517 = vpack.c.bf16 %v503, %v502
        %v518 = vpack.c.bf16 %v505, %v504
        %v519 = vpack.c.bf16 %v509, %v508
        %v520 = vld [vmem:[%s3] sm:$0xf]
        %v521 = vld [vmem:[%s3 + $0x4] sm:$0xf]
        %v522 = vld [vmem:[%s3 + $0x8] sm:$0xf]
        %v523 = vld [vmem:[%s3 + $0xc] sm:$0xf]
        %v524 = vld [vmem:[%s3 + $0x10] sm:$0xf]
        %v525 = vld [vmem:[%s3 + $0x14] sm:$0xf]
        %v526 = vld [vmem:[%s3 + $0x18] sm:$0xf]
        %v527 = vld [vmem:[%s3 + $0x1c] sm:$0xf]
        %v528 = vld [vmem:[%s3 + $0x20] sm:$0xf]
        %v529 = vld [vmem:[%s3 + $0x24] sm:$0xf]
        %v530 = vld [vmem:[%s3 + $0x28] sm:$0xf]
        %v531 = vld [vmem:[%s3 + $0x2c] sm:$0xf]
        %v532 = vld [vmem:[%s3 + $0x30] sm:$0xf]
        %v533 = vld [vmem:[%s3 + $0x34] sm:$0xf]
        %v534 = vld [vmem:[%s3 + $0x38] sm:$0xf]
        %v535 = vld [vmem:[%s3 + $0x3c] sm:$0xf]
        %v536 = vld [vmem:[%s6] sm:$0x1]
        %v538 = vlaneseq
        %v539 = vshrl.u32 %v538, 7
        %v540 = vsub.s32 0, %v539
        %v541 = vrot.slane %v536, %v540
        %v559 = vunpack.c.l.b16 %v520
        %v560 = vunpack.c.l.b16 %v521
        %v561 = vunpack.c.l.b16 %v522
        %v562 = vunpack.c.l.b16 %v523
        %v563 = vunpack.c.l.b16 %v524
        %v564 = vunpack.c.l.b16 %v525
        %v565 = vunpack.c.l.b16 %v526
        %v566 = vunpack.c.l.b16 %v527
        %v567 = vunpack.c.l.b16 %v528
        %v568 = vunpack.c.l.b16 %v529
        %v569 = vunpack.c.l.b16 %v530
        %v570 = vunpack.c.l.b16 %v531
        %v571 = vunpack.c.l.b16 %v532
        %v572 = vunpack.c.l.b16 %v533
        %v573 = vunpack.c.l.b16 %v534
        %v574 = vunpack.c.l.b16 %v535
        %v575 = vpack.c.b16 %v560, %v559
        %v576 = vpack.c.b16 %v562, %v561
        %v577 = vpack.c.b16 %v564, %v563
        %v578 = vpack.c.b16 %v566, %v565
        %v579 = vpack.c.b16 %v568, %v567
        %v580 = vpack.c.b16 %v570, %v569
        %v581 = vpack.c.b16 %v572, %v571
        %v582 = vpack.c.b16 %v574, %v573
        %591 = vmatprep.subr.bf16.mxu0 0
        %592 = vmatpush1.bf16.msra.mxu0 %v582
        %593 = vmatprep.subr.bf16.mxu0 0
        %594 = vmatpush1.bf16.msra.mxu0 %v581
        %595 = vmatprep.subr.bf16.mxu0 0
        %596 = vmatpush1.bf16.msra.mxu0 %v580
        %597 = vmatprep.subr.bf16.mxu0 0
        %598 = vmatpush1.bf16.msra.mxu0 %v579
        %599 = vmatprep.subr.bf16.mxu0 0
        %600 = vmatpush1.bf16.msra.mxu0 %v578
        %601 = vmatprep.subr.bf16.mxu0 0
        %602 = vmatpush1.bf16.msra.mxu0 %v577
        %603 = vmatprep.subr.bf16.mxu0 0
        %604 = vmatpush1.bf16.msra.mxu0 %v576
        %605 = vmatprep.subr.bf16.mxu0 0
        %606 = vmatpush1.bf16.msra.mxu0 %v575
        %607 = vmatprep.subr.bf16.mxu0 0
        %608 = vmatpush2.bf16.msra.mxu0 0
        %609 = vmatprep.subr.bf16.mxu0 0
        %610 = vmatpush2.bf16.msra.mxu0 0
        %611 = vmatprep.subr.bf16.mxu0 0
        %612 = vmatpush2.bf16.msra.mxu0 0
        %613 = vmatprep.subr.bf16.mxu0 0
        %614 = vmatpush2.bf16.msra.mxu0 0
        %615 = vmatprep.subr.bf16.mxu0 0
        %616 = vmatpush2.bf16.msra.mxu0 0
        %617 = vmatprep.subr.bf16.mxu0 0
        %618 = vmatpush2.bf16.msra.mxu0 0
        %619 = vmatprep.subr.bf16.mxu0 0
        %620 = vmatpush2.bf16.msra.mxu0 0
        %621 = vmatprep.subr.bf16.mxu0 0
        %622 = vmatpush2.bf16.msra.mxu0 0
        %623 = vmatprep.mubr.bf16.mxu0 0
        %624 = vmatmul.mubr.bf16.gmra.mxu0 %v510
        %v625 = vpop.f32.mrf.mxu0
        %v626 = vadd.f32 %v541, %v625
        %v627 = vpop.f32.mrf.mxu0
        %v628 = vpop.f32.mrf.mxu0
        %v629 = vadd.f32 %v541, %v628
        %v630 = vpop.f32.mrf.mxu0
        %631 = vmatprep.mubr.bf16.mxu0 0
        %632 = vmatmul.mubr.bf16.gmra.mxu0 %v511
        %v633 = vpop.f32.mrf.mxu0
        %v634 = vadd.f32 %v541, %v633
        %v635 = vpop.f32.mrf.mxu0
        %v636 = vpop.f32.mrf.mxu0
        %v637 = vadd.f32 %v541, %v636
        %v638 = vpop.f32.mrf.mxu0
        %639 = vmatprep.mubr.bf16.mxu0 0
        %640 = vmatmul.mubr.bf16.gmra.mxu0 %v512
        %v641 = vpop.f32.mrf.mxu0
        %v642 = vadd.f32 %v541, %v641
        %v643 = vpop.f32.mrf.mxu0
        %v644 = vpop.f32.mrf.mxu0
        %v645 = vadd.f32 %v541, %v644
        %v646 = vpop.f32.mrf.mxu0
        %647 = vmatprep.mubr.bf16.mxu0 0
        %648 = vmatmul.mubr.bf16.gmra.mxu0 %v513
        %v649 = vpop.f32.mrf.mxu0
        %v650 = vadd.f32 %v541, %v649
        %v651 = vpop.f32.mrf.mxu0
        %v652 = vpop.f32.mrf.mxu0
        %v653 = vadd.f32 %v541, %v652
        %v654 = vpop.f32.mrf.mxu0
        %655 = vmatprep.mubr.bf16.mxu0 0
        %656 = vmatmul.mubr.bf16.gmra.mxu0 %v514
        %v657 = vpop.f32.mrf.mxu0
        %v658 = vadd.f32 %v541, %v657
        %v659 = vpop.f32.mrf.mxu0
        %v660 = vpop.f32.mrf.mxu0
        %v661 = vadd.f32 %v541, %v660
        %v662 = vpop.f32.mrf.mxu0
        %663 = vmatprep.mubr.bf16.mxu0 0
        %664 = vmatmul.mubr.bf16.gmra.mxu0 %v515
        %v665 = vpop.f32.mrf.mxu0
        %v666 = vadd.f32 %v541, %v665
        %v667 = vpop.f32.mrf.mxu0
        %v668 = vpop.f32.mrf.mxu0
        %v669 = vadd.f32 %v541, %v668
        %v670 = vpop.f32.mrf.mxu0
        %671 = vmatprep.mubr.bf16.mxu0 0
        %672 = vmatmul.mubr.bf16.gmra.mxu0 %v516
        %v673 = vpop.f32.mrf.mxu0
        %v674 = vadd.f32 %v541, %v673
        %v675 = vpop.f32.mrf.mxu0
        %v676 = vpop.f32.mrf.mxu0
        %v677 = vadd.f32 %v541, %v676
        %v678 = vpop.f32.mrf.mxu0
        %679 = vmatprep.mubr.bf16.mxu0 0
        %680 = vmatmul.mubr.bf16.gmra.mxu0 %v517
        %v681 = vpop.f32.mrf.mxu0
        %v682 = vadd.f32 %v541, %v681
        %v683 = vpop.f32.mrf.mxu0
        %v684 = vpop.f32.mrf.mxu0
        %v685 = vadd.f32 %v541, %v684
        %v686 = vpop.f32.mrf.mxu0
        %687 = vmatprep.mubr.bf16.mxu0 0
        %688 = vmatmul.mubr.bf16.gmra.mxu0 %v518
        %v689 = vpop.f32.mrf.mxu0
        %v690 = vadd.f32 %v541, %v689
        %v691 = vpop.f32.mrf.mxu0
        %v692 = vpop.f32.mrf.mxu0
        %v693 = vadd.f32 %v541, %v692
        %v694 = vpop.f32.mrf.mxu0
        %695 = vmatprep.mubr.bf16.mxu0 0
        %696 = vmatmul.mubr.bf16.gmra.mxu0 %v519
        %v697 = vpop.f32.mrf.mxu0
        %v698 = vadd.f32 %v541, %v697
        %v699 = vpop.f32.mrf.mxu0
        %v700 = vpop.f32.mrf.mxu0
        %v701 = vadd.f32 %v541, %v700
        %v702 = vpop.f32.mrf.mxu0
        %703 = vdwg.mxu0
        %v704 = vmax.f32 %v626, 0.0
        %v705 = vmax.f32 %v629, 0.0
        %v706 = vmax.f32 %v634, 0.0
        %v707 = vmax.f32 %v637, 0.0
        %v708 = vmax.f32 %v642, 0.0
        %v709 = vmax.f32 %v645, 0.0
        %v710 = vmax.f32 %v650, 0.0
        %v711 = vmax.f32 %v653, 0.0
        %v712 = vmax.f32 %v658, 0.0
        %v713 = vmax.f32 %v661, 0.0
        %v714 = vmax.f32 %v666, 0.0
        %v715 = vmax.f32 %v669, 0.0
        %v716 = vmax.f32 %v674, 0.0
        %v717 = vmax.f32 %v677, 0.0
        %v718 = vmax.f32 %v682, 0.0
        %v719 = vmax.f32 %v685, 0.0
        %v720 = vmax.f32 %v690, 0.0
        %v721 = vmax.f32 %v693, 0.0
        %v722 = vmax.f32 %v698, 0.0
        %v723 = vmax.f32 %v701, 0.0
        %v724 = vlaneseq
        %v725 = vshrl.u32 %v724, 7
        %v726 = vadd.s32 %v725, 8
        %v727 = vadd.s32 %v725, 16
        %v728 = vadd.s32 %v725, 24
        %v729 = vadd.s32 %v725, 32
        %v730 = vadd.s32 %v725, 40
        %v731 = vadd.s32 %v725, 48
        %v732 = vadd.s32 %v725, 56
        %v733 = vadd.s32 %v725, 64
        %v734 = vadd.s32 %v725, 72
        %v735 = vadd.s32 %v725, 80
        %v736 = vadd.s32 %v725, 88
        %v737 = vadd.s32 %v725, 96
        %v738 = vadd.s32 %v725, 104
        %v739 = vadd.s32 %v725, 112
        %v740 = vadd.s32 %v725, 120
        %v741 = vadd.s32 %v725, 128
        %v742 = vadd.s32 %v725, 136
        %v743 = vadd.s32 %v725, 144
        %v744 = vadd.s32 %v725, 152
        %p745 = scmp.eq.s32.totalorder %s34, 0
        %s746 = scalar_select %p745, 0.0, 1.0
        %p747 = scmp.eq.s32.totalorder %s34, 1
        %s748 = scalar_select %p747, 0.0, 1.0
        %vm749 = vcmp.lt.s32.totalorder %v725, 16
        %vm750 = vcmp.lt.s32.totalorder %v726, 16
        %vm751 = vcmp.lt.s32.totalorder %v727, 16
        %vm752 = vcmp.lt.s32.totalorder %v728, 16
        %vm753 = vcmp.lt.s32.totalorder %v729, 16
        %vm754 = vcmp.lt.s32.totalorder %v730, 16
        %vm755 = vcmp.lt.s32.totalorder %v731, 16
        %vm756 = vcmp.lt.s32.totalorder %v732, 16
        %vm757 = vcmp.lt.s32.totalorder %v733, 16
        %vm758 = vcmp.lt.s32.totalorder %v734, 16
        %vm759 = vcmp.lt.s32.totalorder %v735, 16
        %vm760 = vcmp.lt.s32.totalorder %v736, 16
        %vm761 = vcmp.lt.s32.totalorder %v737, 16
        %vm762 = vcmp.lt.s32.totalorder %v738, 16
        %vm763 = vcmp.lt.s32.totalorder %v739, 16
        %vm764 = vcmp.lt.s32.totalorder %v740, 16
        %vm765 = vcmp.lt.s32.totalorder %v741, 16
        %vm766 = vcmp.lt.s32.totalorder %v742, 16
        %vm767 = vcmp.lt.s32.totalorder %v743, 16
        %vm768 = vcmp.lt.s32.totalorder %v744, 16
        %v769 = vstv %s746
        %v770 = vsel %vm749, %v769, 1.0
        %v771 = vsel %vm750, %v769, 1.0
        %v772 = vsel %vm751, %v769, 1.0
        %v773 = vsel %vm752, %v769, 1.0
        %v774 = vsel %vm753, %v769, 1.0
        %v775 = vsel %vm754, %v769, 1.0
        %v776 = vsel %vm755, %v769, 1.0
        %v777 = vsel %vm756, %v769, 1.0
        %v778 = vsel %vm757, %v769, 1.0
        %v779 = vsel %vm758, %v769, 1.0
        %v780 = vsel %vm759, %v769, 1.0
        %v781 = vsel %vm760, %v769, 1.0
        %v782 = vsel %vm761, %v769, 1.0
        %v783 = vsel %vm762, %v769, 1.0
        %v784 = vsel %vm763, %v769, 1.0
        %v785 = vsel %vm764, %v769, 1.0
        %v786 = vsel %vm765, %v769, 1.0
        %v787 = vsel %vm766, %v769, 1.0
        %v788 = vsel %vm767, %v769, 1.0
        %v789 = vsel %vm768, %v769, 1.0
        %vm790 = vcmp.ge.s32.totalorder %v725, 144
        %vm791 = vcmp.ge.s32.totalorder %v726, 144
        %vm792 = vcmp.ge.s32.totalorder %v727, 144
        %vm793 = vcmp.ge.s32.totalorder %v728, 144
        %vm794 = vcmp.ge.s32.totalorder %v729, 144
        %vm795 = vcmp.ge.s32.totalorder %v730, 144
        %vm796 = vcmp.ge.s32.totalorder %v731, 144
        %vm797 = vcmp.ge.s32.totalorder %v732, 144
        %vm798 = vcmp.ge.s32.totalorder %v733, 144
        %vm799 = vcmp.ge.s32.totalorder %v734, 144
        %vm800 = vcmp.ge.s32.totalorder %v735, 144
        %vm801 = vcmp.ge.s32.totalorder %v736, 144
        %vm802 = vcmp.ge.s32.totalorder %v737, 144
        %vm803 = vcmp.ge.s32.totalorder %v738, 144
        %vm804 = vcmp.ge.s32.totalorder %v739, 144
        %vm805 = vcmp.ge.s32.totalorder %v740, 144
        %vm806 = vcmp.ge.s32.totalorder %v741, 144
        %vm807 = vcmp.ge.s32.totalorder %v742, 144
        %vm808 = vcmp.ge.s32.totalorder %v743, 144
        %vm809 = vcmp.ge.s32.totalorder %v744, 144
        %v810 = vstv %s748
        %v811 = vsel %vm790, %v810, 1.0
        %v812 = vsel %vm791, %v810, 1.0
        %v813 = vsel %vm792, %v810, 1.0
        %v814 = vsel %vm793, %v810, 1.0
        %v815 = vsel %vm794, %v810, 1.0
        %v816 = vsel %vm795, %v810, 1.0
        %v817 = vsel %vm796, %v810, 1.0
        %v818 = vsel %vm797, %v810, 1.0
        %v819 = vsel %vm798, %v810, 1.0
        %v820 = vsel %vm799, %v810, 1.0
        %v821 = vsel %vm800, %v810, 1.0
        %v822 = vsel %vm801, %v810, 1.0
        %v823 = vsel %vm802, %v810, 1.0
        %v824 = vsel %vm803, %v810, 1.0
        %v825 = vsel %vm804, %v810, 1.0
        %v826 = vsel %vm805, %v810, 1.0
        %v827 = vsel %vm806, %v810, 1.0
        %v828 = vsel %vm807, %v810, 1.0
        %v829 = vsel %vm808, %v810, 1.0
        %v830 = vsel %vm809, %v810, 1.0
        %v831 = vmul.f32 %v770, %v811
        %v832 = vmul.f32 %v771, %v812
        %v833 = vmul.f32 %v772, %v813
        %v834 = vmul.f32 %v773, %v814
        %v835 = vmul.f32 %v774, %v815
        %v836 = vmul.f32 %v775, %v816
        %v837 = vmul.f32 %v776, %v817
        %v838 = vmul.f32 %v777, %v818
        %v839 = vmul.f32 %v778, %v819
        %v840 = vmul.f32 %v779, %v820
        %v841 = vmul.f32 %v780, %v821
        %v842 = vmul.f32 %v781, %v822
        %v843 = vmul.f32 %v782, %v823
        %v844 = vmul.f32 %v783, %v824
        %v845 = vmul.f32 %v784, %v825
        %v846 = vmul.f32 %v785, %v826
        %v847 = vmul.f32 %v786, %v827
        %v848 = vmul.f32 %v787, %v828
        %v849 = vmul.f32 %v788, %v829
        %v850 = vmul.f32 %v789, %v830
        %v851 = vmul.f32 %v704, %v831
        %v852 = vmul.f32 %v705, %v832
        %v853 = vmul.f32 %v706, %v833
        %v854 = vmul.f32 %v707, %v834
        %v855 = vmul.f32 %v708, %v835
        %v856 = vmul.f32 %v709, %v836
        %v857 = vmul.f32 %v710, %v837
        %v858 = vmul.f32 %v711, %v838
        %v859 = vmul.f32 %v712, %v839
        %v860 = vmul.f32 %v713, %v840
        %v861 = vmul.f32 %v714, %v841
        %v862 = vmul.f32 %v715, %v842
        %v863 = vmul.f32 %v716, %v843
        %v864 = vmul.f32 %v717, %v844
        %v865 = vmul.f32 %v718, %v845
        %v866 = vmul.f32 %v719, %v846
        %v867 = vmul.f32 %v720, %v847
        %v868 = vmul.f32 %v721, %v848
        %v869 = vmul.f32 %v722, %v849
        %v870 = vmul.f32 %v723, %v850
        %vm871 = vcmp.lt.s32.totalorder %v725, 0
        %v872 = vsub.s32 0, %v725
        %v873 = vsel %vm871, %v872, %v725
        %v874 = vshrl.u32 %v873, 4
        %v875 = vand.u32 %v873, 15
        %v876 = vsub.s32 0, %v875
        %v877 = vsel %vm871, %v876, %v875
        %vm878 = vcmp.lt.s32.totalorder %v726, 0
        %v879 = vsub.s32 0, %v726
        %v880 = vsel %vm878, %v879, %v726
        %v881 = vshrl.u32 %v880, 4
        %v882 = vand.u32 %v880, 15
        %v883 = vsub.s32 0, %v882
        %v884 = vsel %vm878, %v883, %v882
        %vm885 = vcmp.lt.s32.totalorder %v727, 0
        %v886 = vsub.s32 0, %v727
        %v887 = vsel %vm885, %v886, %v727
        %v888 = vshrl.u32 %v887, 4
        %v889 = vand.u32 %v887, 15
        %v890 = vsub.s32 0, %v889
        %v891 = vsel %vm885, %v890, %v889
        %vm892 = vcmp.lt.s32.totalorder %v728, 0
        %v893 = vsub.s32 0, %v728
        %v894 = vsel %vm892, %v893, %v728
        %v895 = vshrl.u32 %v894, 4
        %v896 = vand.u32 %v894, 15
        %v897 = vsub.s32 0, %v896
        %v898 = vsel %vm892, %v897, %v896
        %vm899 = vcmp.lt.s32.totalorder %v729, 0
        %v900 = vsub.s32 0, %v729
        %v901 = vsel %vm899, %v900, %v729
        %v902 = vshrl.u32 %v901, 4
        %v903 = vand.u32 %v901, 15
        %v904 = vsub.s32 0, %v903
        %v905 = vsel %vm899, %v904, %v903
        %vm906 = vcmp.lt.s32.totalorder %v730, 0
        %v907 = vsub.s32 0, %v730
        %v908 = vsel %vm906, %v907, %v730
        %v909 = vshrl.u32 %v908, 4
        %v910 = vand.u32 %v908, 15
        %v911 = vsub.s32 0, %v910
        %v912 = vsel %vm906, %v911, %v910
        %vm913 = vcmp.lt.s32.totalorder %v731, 0
        %v914 = vsub.s32 0, %v731
        %v915 = vsel %vm913, %v914, %v731
        %v916 = vshrl.u32 %v915, 4
        %v917 = vand.u32 %v915, 15
        %v918 = vsub.s32 0, %v917
        %v919 = vsel %vm913, %v918, %v917
        %vm920 = vcmp.lt.s32.totalorder %v732, 0
        %v921 = vsub.s32 0, %v732
        %v922 = vsel %vm920, %v921, %v732
        %v923 = vshrl.u32 %v922, 4
        %v924 = vand.u32 %v922, 15
        %v925 = vsub.s32 0, %v924
        %v926 = vsel %vm920, %v925, %v924
        %vm927 = vcmp.lt.s32.totalorder %v733, 0
        %v928 = vsub.s32 0, %v733
        %v929 = vsel %vm927, %v928, %v733
        %v930 = vshrl.u32 %v929, 4
        %v931 = vand.u32 %v929, 15
        %v932 = vsub.s32 0, %v931
        %v933 = vsel %vm927, %v932, %v931
        %vm934 = vcmp.lt.s32.totalorder %v734, 0
        %v935 = vsub.s32 0, %v734
        %v936 = vsel %vm934, %v935, %v734
        %v937 = vshrl.u32 %v936, 4
        %v938 = vand.u32 %v936, 15
        %v939 = vsub.s32 0, %v938
        %v940 = vsel %vm934, %v939, %v938
        %vm941 = vcmp.lt.s32.totalorder %v735, 0
        %v942 = vsub.s32 0, %v735
        %v943 = vsel %vm941, %v942, %v735
        %v944 = vshrl.u32 %v943, 4
        %v945 = vand.u32 %v943, 15
        %v946 = vsub.s32 0, %v945
        %v947 = vsel %vm941, %v946, %v945
        %vm948 = vcmp.lt.s32.totalorder %v736, 0
        %v949 = vsub.s32 0, %v736
        %v950 = vsel %vm948, %v949, %v736
        %v951 = vshrl.u32 %v950, 4
        %v952 = vand.u32 %v950, 15
        %v953 = vsub.s32 0, %v952
        %v954 = vsel %vm948, %v953, %v952
        %vm955 = vcmp.lt.s32.totalorder %v737, 0
        %v956 = vsub.s32 0, %v737
        %v957 = vsel %vm955, %v956, %v737
        %v958 = vshrl.u32 %v957, 4
        %v959 = vand.u32 %v957, 15
        %v960 = vsub.s32 0, %v959
        %v961 = vsel %vm955, %v960, %v959
        %vm962 = vcmp.lt.s32.totalorder %v738, 0
        %v963 = vsub.s32 0, %v738
        %v964 = vsel %vm962, %v963, %v738
        %v965 = vshrl.u32 %v964, 4
        %v966 = vand.u32 %v964, 15
        %v967 = vsub.s32 0, %v966
        %v968 = vsel %vm962, %v967, %v966
        %vm969 = vcmp.lt.s32.totalorder %v739, 0
        %v970 = vsub.s32 0, %v739
        %v971 = vsel %vm969, %v970, %v739
        %v972 = vshrl.u32 %v971, 4
        %v973 = vand.u32 %v971, 15
        %v974 = vsub.s32 0, %v973
        %v975 = vsel %vm969, %v974, %v973
        %vm976 = vcmp.lt.s32.totalorder %v740, 0
        %v977 = vsub.s32 0, %v740
        %v978 = vsel %vm976, %v977, %v740
        %v979 = vshrl.u32 %v978, 4
        %v980 = vand.u32 %v978, 15
        %v981 = vsub.s32 0, %v980
        %v982 = vsel %vm976, %v981, %v980
        %vm983 = vcmp.lt.s32.totalorder %v741, 0
        %v984 = vsub.s32 0, %v741
        %v985 = vsel %vm983, %v984, %v741
        %v986 = vshrl.u32 %v985, 4
        %v987 = vand.u32 %v985, 15
        %v988 = vsub.s32 0, %v987
        %v989 = vsel %vm983, %v988, %v987
        %vm990 = vcmp.lt.s32.totalorder %v742, 0
        %v991 = vsub.s32 0, %v742
        %v992 = vsel %vm990, %v991, %v742
        %v993 = vshrl.u32 %v992, 4
        %v994 = vand.u32 %v992, 15
        %v995 = vsub.s32 0, %v994
        %v996 = vsel %vm990, %v995, %v994
        %vm997 = vcmp.lt.s32.totalorder %v743, 0
        %v998 = vsub.s32 0, %v743
        %v999 = vsel %vm997, %v998, %v743
        %v1000 = vshrl.u32 %v999, 4
        %v1001 = vand.u32 %v999, 15
        %v1002 = vsub.s32 0, %v1001
        %v1003 = vsel %vm997, %v1002, %v1001
        %vm1004 = vcmp.lt.s32.totalorder %v744, 0
        %v1005 = vsub.s32 0, %v744
        %v1006 = vsel %vm1004, %v1005, %v744
        %v1007 = vshrl.u32 %v1006, 4
        %v1008 = vand.u32 %v1006, 15
        %v1009 = vsub.s32 0, %v1008
        %v1010 = vsel %vm1004, %v1009, %v1008
        %vm1011 = vcmp.ne.s32.totalorder %v877, 0
        %vm1012 = vcmp.ne.s32.totalorder %v884, 0
        %vm1013 = vcmp.ne.s32.totalorder %v891, 0
        %vm1014 = vcmp.ne.s32.totalorder %v898, 0
        %vm1015 = vcmp.ne.s32.totalorder %v905, 0
        %vm1016 = vcmp.ne.s32.totalorder %v912, 0
        %vm1017 = vcmp.ne.s32.totalorder %v919, 0
        %vm1018 = vcmp.ne.s32.totalorder %v926, 0
        %vm1019 = vcmp.ne.s32.totalorder %v933, 0
        %vm1020 = vcmp.ne.s32.totalorder %v940, 0
        %vm1021 = vcmp.ne.s32.totalorder %v947, 0
        %vm1022 = vcmp.ne.s32.totalorder %v954, 0
        %vm1023 = vcmp.ne.s32.totalorder %v961, 0
        %vm1024 = vcmp.ne.s32.totalorder %v968, 0
        %vm1025 = vcmp.ne.s32.totalorder %v975, 0
        %vm1026 = vcmp.ne.s32.totalorder %v982, 0
        %vm1027 = vcmp.ne.s32.totalorder %v989, 0
        %vm1028 = vcmp.ne.s32.totalorder %v996, 0
        %vm1029 = vcmp.ne.s32.totalorder %v1003, 0
        %vm1030 = vcmp.ne.s32.totalorder %v1010, 0
        %vm1031 = vcmp.lt.s32.totalorder %v877, 0
        %vm1032 = vcmp.lt.s32.totalorder %v884, 0
        %vm1033 = vcmp.lt.s32.totalorder %v891, 0
        %vm1034 = vcmp.lt.s32.totalorder %v898, 0
        %vm1035 = vcmp.lt.s32.totalorder %v905, 0
        %vm1036 = vcmp.lt.s32.totalorder %v912, 0
        %vm1037 = vcmp.lt.s32.totalorder %v919, 0
        %vm1038 = vcmp.lt.s32.totalorder %v926, 0
        %vm1039 = vcmp.lt.s32.totalorder %v933, 0
        %vm1040 = vcmp.lt.s32.totalorder %v940, 0
        %vm1041 = vcmp.lt.s32.totalorder %v947, 0
        %vm1042 = vcmp.lt.s32.totalorder %v954, 0
        %vm1043 = vcmp.lt.s32.totalorder %v961, 0
        %vm1044 = vcmp.lt.s32.totalorder %v968, 0
        %vm1045 = vcmp.lt.s32.totalorder %v975, 0
        %vm1046 = vcmp.lt.s32.totalorder %v982, 0
        %vm1047 = vcmp.lt.s32.totalorder %v989, 0
        %vm1048 = vcmp.lt.s32.totalorder %v996, 0
        %vm1049 = vcmp.lt.s32.totalorder %v1003, 0
        %vm1050 = vcmp.lt.s32.totalorder %v1010, 0
        %vm1051 = vmand %vm1031, %vm1011
        %vm1052 = vmand %vm1032, %vm1012
        %vm1053 = vmand %vm1033, %vm1013
        %vm1054 = vmand %vm1034, %vm1014
        %vm1055 = vmand %vm1035, %vm1015
        %vm1056 = vmand %vm1036, %vm1016
        %vm1057 = vmand %vm1037, %vm1017
        %vm1058 = vmand %vm1038, %vm1018
        %vm1059 = vmand %vm1039, %vm1019
        %vm1060 = vmand %vm1040, %vm1020
        %vm1061 = vmand %vm1041, %vm1021
        %vm1062 = vmand %vm1042, %vm1022
        %vm1063 = vmand %vm1043, %vm1023
        %vm1064 = vmand %vm1044, %vm1024
        %vm1065 = vmand %vm1045, %vm1025
        %vm1066 = vmand %vm1046, %vm1026
        %vm1067 = vmand %vm1047, %vm1027
        %vm1068 = vmand %vm1048, %vm1028
        %vm1069 = vmand %vm1049, %vm1029
        %vm1070 = vmand %vm1050, %vm1030
        %v1071 = vadd.s32 %v877, 16
        %v1072 = vadd.s32 %v884, 16
        %v1073 = vadd.s32 %v891, 16
        %v1074 = vadd.s32 %v898, 16
        %v1075 = vadd.s32 %v905, 16
        %v1076 = vadd.s32 %v912, 16
        %v1077 = vadd.s32 %v919, 16
        %v1078 = vadd.s32 %v926, 16
        %v1079 = vadd.s32 %v933, 16
        %v1080 = vadd.s32 %v940, 16
        %v1081 = vadd.s32 %v947, 16
        %v1082 = vadd.s32 %v954, 16
        %v1083 = vadd.s32 %v961, 16
        %v1084 = vadd.s32 %v968, 16
        %v1085 = vadd.s32 %v975, 16
        %v1086 = vadd.s32 %v982, 16
        %v1087 = vadd.s32 %v989, 16
        %v1088 = vadd.s32 %v996, 16
        %v1089 = vadd.s32 %v1003, 16
        %v1090 = vadd.s32 %v1010, 16
        %v1091 = vsel %vm1051, %v1071, %v877
        %v1092 = vsel %vm1052, %v1072, %v884
        %v1093 = vsel %vm1053, %v1073, %v891
        %v1094 = vsel %vm1054, %v1074, %v898
        %v1095 = vsel %vm1055, %v1075, %v905
        %v1096 = vsel %vm1056, %v1076, %v912
        %v1097 = vsel %vm1057, %v1077, %v919
        %v1098 = vsel %vm1058, %v1078, %v926
        %v1099 = vsel %vm1059, %v1079, %v933
        %v1100 = vsel %vm1060, %v1080, %v940
        %v1101 = vsel %vm1061, %v1081, %v947
        %v1102 = vsel %vm1062, %v1082, %v954
        %v1103 = vsel %vm1063, %v1083, %v961
        %v1104 = vsel %vm1064, %v1084, %v968
        %v1105 = vsel %vm1065, %v1085, %v975
        %v1106 = vsel %vm1066, %v1086, %v982
        %v1107 = vsel %vm1067, %v1087, %v989
        %v1108 = vsel %vm1068, %v1088, %v996
        %v1109 = vsel %vm1069, %v1089, %v1003
        %v1110 = vsel %vm1070, %v1090, %v1010
        %vm1111 = vcmp.eq.s32.totalorder %v1091, 15
        %vm1112 = vcmp.eq.s32.totalorder %v1092, 15
        %vm1113 = vcmp.eq.s32.totalorder %v1093, 15
        %vm1114 = vcmp.eq.s32.totalorder %v1094, 15
        %vm1115 = vcmp.eq.s32.totalorder %v1095, 15
        %vm1116 = vcmp.eq.s32.totalorder %v1096, 15
        %vm1117 = vcmp.eq.s32.totalorder %v1097, 15
        %vm1118 = vcmp.eq.s32.totalorder %v1098, 15
        %vm1119 = vcmp.eq.s32.totalorder %v1099, 15
        %vm1120 = vcmp.eq.s32.totalorder %v1100, 15
        %vm1121 = vcmp.eq.s32.totalorder %v1101, 15
        %vm1122 = vcmp.eq.s32.totalorder %v1102, 15
        %vm1123 = vcmp.eq.s32.totalorder %v1103, 15
        %vm1124 = vcmp.eq.s32.totalorder %v1104, 15
        %vm1125 = vcmp.eq.s32.totalorder %v1105, 15
        %vm1126 = vcmp.eq.s32.totalorder %v1106, 15
        %vm1127 = vcmp.eq.s32.totalorder %v1107, 15
        %vm1128 = vcmp.eq.s32.totalorder %v1108, 15
        %vm1129 = vcmp.eq.s32.totalorder %v1109, 15
        %vm1130 = vcmp.eq.s32.totalorder %v1110, 15
        %v1131 = vsel %vm1111, 0.0, 1.0
        %v1132 = vsel %vm1112, 0.0, 1.0
        %v1133 = vsel %vm1113, 0.0, 1.0
        %v1134 = vsel %vm1114, 0.0, 1.0
        %v1135 = vsel %vm1115, 0.0, 1.0
        %v1136 = vsel %vm1116, 0.0, 1.0
        %v1137 = vsel %vm1117, 0.0, 1.0
        %v1138 = vsel %vm1118, 0.0, 1.0
        %v1139 = vsel %vm1119, 0.0, 1.0
        %v1140 = vsel %vm1120, 0.0, 1.0
        %v1141 = vsel %vm1121, 0.0, 1.0
        %v1142 = vsel %vm1122, 0.0, 1.0
        %v1143 = vsel %vm1123, 0.0, 1.0
        %v1144 = vsel %vm1124, 0.0, 1.0
        %v1145 = vsel %vm1125, 0.0, 1.0
        %v1146 = vsel %vm1126, 0.0, 1.0
        %v1147 = vsel %vm1127, 0.0, 1.0
        %v1148 = vsel %vm1128, 0.0, 1.0
        %v1149 = vsel %vm1129, 0.0, 1.0
        %v1150 = vsel %vm1130, 0.0, 1.0
        %vm1151 = vcmp.eq.s32.totalorder %v1091, 0
        %vm1152 = vcmp.eq.s32.totalorder %v1092, 0
        %vm1153 = vcmp.eq.s32.totalorder %v1093, 0
        %vm1154 = vcmp.eq.s32.totalorder %v1094, 0
        %vm1155 = vcmp.eq.s32.totalorder %v1095, 0
        %vm1156 = vcmp.eq.s32.totalorder %v1096, 0
        %vm1157 = vcmp.eq.s32.totalorder %v1097, 0
        %vm1158 = vcmp.eq.s32.totalorder %v1098, 0
        %vm1159 = vcmp.eq.s32.totalorder %v1099, 0
        %vm1160 = vcmp.eq.s32.totalorder %v1100, 0
        %vm1161 = vcmp.eq.s32.totalorder %v1101, 0
        %vm1162 = vcmp.eq.s32.totalorder %v1102, 0
        %vm1163 = vcmp.eq.s32.totalorder %v1103, 0
        %vm1164 = vcmp.eq.s32.totalorder %v1104, 0
        %vm1165 = vcmp.eq.s32.totalorder %v1105, 0
        %vm1166 = vcmp.eq.s32.totalorder %v1106, 0
        %vm1167 = vcmp.eq.s32.totalorder %v1107, 0
        %vm1168 = vcmp.eq.s32.totalorder %v1108, 0
        %vm1169 = vcmp.eq.s32.totalorder %v1109, 0
        %vm1170 = vcmp.eq.s32.totalorder %v1110, 0
        %v1171 = vsel %vm1151, 0.0, 1.0
        %v1172 = vsel %vm1152, 0.0, 1.0
        %v1173 = vsel %vm1153, 0.0, 1.0
        %v1174 = vsel %vm1154, 0.0, 1.0
        %v1175 = vsel %vm1155, 0.0, 1.0
        %v1176 = vsel %vm1156, 0.0, 1.0
        %v1177 = vsel %vm1157, 0.0, 1.0
        %v1178 = vsel %vm1158, 0.0, 1.0
        %v1179 = vsel %vm1159, 0.0, 1.0
        %v1180 = vsel %vm1160, 0.0, 1.0
        %v1181 = vsel %vm1161, 0.0, 1.0
        %v1182 = vsel %vm1162, 0.0, 1.0
        %v1183 = vsel %vm1163, 0.0, 1.0
        %v1184 = vsel %vm1164, 0.0, 1.0
        %v1185 = vsel %vm1165, 0.0, 1.0
        %v1186 = vsel %vm1166, 0.0, 1.0
        %v1187 = vsel %vm1167, 0.0, 1.0
        %v1188 = vsel %vm1168, 0.0, 1.0
        %v1189 = vsel %vm1169, 0.0, 1.0
        %v1190 = vsel %vm1170, 0.0, 1.0
        %v1191 = vmul.f32 %v851, %v1131
        %v1192 = vmul.f32 %v852, %v1132
        %v1193 = vmul.f32 %v853, %v1133
        %v1194 = vmul.f32 %v854, %v1134
        %v1195 = vmul.f32 %v855, %v1135
        %v1196 = vmul.f32 %v856, %v1136
        %v1197 = vmul.f32 %v857, %v1137
        %v1198 = vmul.f32 %v858, %v1138
        %v1199 = vmul.f32 %v859, %v1139
        %v1200 = vmul.f32 %v860, %v1140
        %v1201 = vmul.f32 %v861, %v1141
        %v1202 = vmul.f32 %v862, %v1142
        %v1203 = vmul.f32 %v863, %v1143
        %v1204 = vmul.f32 %v864, %v1144
        %v1205 = vmul.f32 %v865, %v1145
        %v1206 = vmul.f32 %v866, %v1146
        %v1207 = vmul.f32 %v867, %v1147
        %v1208 = vmul.f32 %v868, %v1148
        %v1209 = vmul.f32 %v869, %v1149
        %v1210 = vmul.f32 %v870, %v1150
        %v1211 = vrot.slane %v1191, 7
        %v1212 = vrot.slane %v1192, 7
        %v1213 = vrot.slane %v1193, 7
        %v1214 = vrot.slane %v1194, 7
        %v1215 = vrot.slane %v1195, 7
        %v1216 = vrot.slane %v1196, 7
        %v1217 = vrot.slane %v1197, 7
        %v1218 = vrot.slane %v1198, 7
        %v1219 = vrot.slane %v1199, 7
        %v1220 = vrot.slane %v1200, 7
        %v1221 = vrot.slane %v1201, 7
        %v1222 = vrot.slane %v1202, 7
        %v1223 = vrot.slane %v1203, 7
        %v1224 = vrot.slane %v1204, 7
        %v1225 = vrot.slane %v1205, 7
        %v1226 = vrot.slane %v1206, 7
        %v1227 = vrot.slane %v1207, 7
        %v1228 = vrot.slane %v1208, 7
        %v1229 = vrot.slane %v1209, 7
        %v1230 = vrot.slane %v1210, 7
        %vm1231 = vcmp.lt.s32.totalorder %v725, 1
        %v1232 = vsel %vm1231, %v1229, %v1230
        %v1233 = vsel %vm1231, %v1228, %v1229
        %v1234 = vsel %vm1231, %v1227, %v1228
        %v1235 = vsel %vm1231, %v1226, %v1227
        %v1236 = vsel %vm1231, %v1225, %v1226
        %v1237 = vsel %vm1231, %v1224, %v1225
        %v1238 = vsel %vm1231, %v1223, %v1224
        %v1239 = vsel %vm1231, %v1222, %v1223
        %v1240 = vsel %vm1231, %v1221, %v1222
        %v1241 = vsel %vm1231, %v1220, %v1221
        %v1242 = vsel %vm1231, %v1219, %v1220
        %v1243 = vsel %vm1231, %v1218, %v1219
        %v1244 = vsel %vm1231, %v1217, %v1218
        %v1245 = vsel %vm1231, %v1216, %v1217
        %v1246 = vsel %vm1231, %v1215, %v1216
        %v1247 = vsel %vm1231, %v1214, %v1215
        %v1248 = vsel %vm1231, %v1213, %v1214
        %v1249 = vsel %vm1231, %v1212, %v1213
        %v1250 = vsel %vm1231, %v1211, %v1212
        %v1251 = vsel %vm1231, %v1230, %v1211
        %v1252 = vpack.c.bf16 %v1250, %v1251
        %v1253 = vpack.c.bf16 %v1248, %v1249
        %v1254 = vpack.c.bf16 %v1246, %v1247
        %v1255 = vpack.c.bf16 %v1244, %v1245
        %v1256 = vpack.c.bf16 %v1242, %v1243
        %v1257 = vpack.c.bf16 %v1240, %v1241
        %v1258 = vpack.c.bf16 %v1238, %v1239
        %v1259 = vpack.c.bf16 %v1236, %v1237
        %v1260 = vpack.c.bf16 %v1234, %v1235
        %v1261 = vpack.c.bf16 %v1232, %v1233
        %v1262 = vpack.c.bf16 %v852, %v851
        %v1263 = vpack.c.bf16 %v854, %v853
        %v1264 = vpack.c.bf16 %v856, %v855
        %v1265 = vpack.c.bf16 %v858, %v857
        %v1266 = vpack.c.bf16 %v860, %v859
        %v1267 = vpack.c.bf16 %v862, %v861
        %v1268 = vpack.c.bf16 %v864, %v863
        %v1269 = vpack.c.bf16 %v866, %v865
        %v1270 = vpack.c.bf16 %v868, %v867
        %v1271 = vpack.c.bf16 %v870, %v869
        %v1272 = vmul.f32 %v851, %v1171
        %v1273 = vmul.f32 %v852, %v1172
        %v1274 = vmul.f32 %v853, %v1173
        %v1275 = vmul.f32 %v854, %v1174
        %v1276 = vmul.f32 %v855, %v1175
        %v1277 = vmul.f32 %v856, %v1176
        %v1278 = vmul.f32 %v857, %v1177
        %v1279 = vmul.f32 %v858, %v1178
        %v1280 = vmul.f32 %v859, %v1179
        %v1281 = vmul.f32 %v860, %v1180
        %v1282 = vmul.f32 %v861, %v1181
        %v1283 = vmul.f32 %v862, %v1182
        %v1284 = vmul.f32 %v863, %v1183
        %v1285 = vmul.f32 %v864, %v1184
        %v1286 = vmul.f32 %v865, %v1185
        %v1287 = vmul.f32 %v866, %v1186
        %v1288 = vmul.f32 %v867, %v1187
        %v1289 = vmul.f32 %v868, %v1188
        %v1290 = vmul.f32 %v869, %v1189
        %v1291 = vmul.f32 %v870, %v1190
        %v1292 = vrot.slane %v1272, 1
        %v1293 = vrot.slane %v1273, 1
        %v1294 = vrot.slane %v1274, 1
        %v1295 = vrot.slane %v1275, 1
        %v1296 = vrot.slane %v1276, 1
        %v1297 = vrot.slane %v1277, 1
        %v1298 = vrot.slane %v1278, 1
        %v1299 = vrot.slane %v1279, 1
        %v1300 = vrot.slane %v1280, 1
        %v1301 = vrot.slane %v1281, 1
        %v1302 = vrot.slane %v1282, 1
        %v1303 = vrot.slane %v1283, 1
        %v1304 = vrot.slane %v1284, 1
        %v1305 = vrot.slane %v1285, 1
        %v1306 = vrot.slane %v1286, 1
        %v1307 = vrot.slane %v1287, 1
        %v1308 = vrot.slane %v1288, 1
        %v1309 = vrot.slane %v1289, 1
        %v1310 = vrot.slane %v1290, 1
        %v1311 = vrot.slane %v1291, 1
        %vm1312 = vcmp.lt.s32.totalorder %v725, 7
        %v1313 = vsel %vm1312, %v1310, %v1311
        %v1314 = vsel %vm1312, %v1309, %v1310
        %v1315 = vsel %vm1312, %v1308, %v1309
        %v1316 = vsel %vm1312, %v1307, %v1308
        %v1317 = vsel %vm1312, %v1306, %v1307
        %v1318 = vsel %vm1312, %v1305, %v1306
        %v1319 = vsel %vm1312, %v1304, %v1305
        %v1320 = vsel %vm1312, %v1303, %v1304
        %v1321 = vsel %vm1312, %v1302, %v1303
        %v1322 = vsel %vm1312, %v1301, %v1302
        %v1323 = vsel %vm1312, %v1300, %v1301
        %v1324 = vsel %vm1312, %v1299, %v1300
        %v1325 = vsel %vm1312, %v1298, %v1299
        %v1326 = vsel %vm1312, %v1297, %v1298
        %v1327 = vsel %vm1312, %v1296, %v1297
        %v1328 = vsel %vm1312, %v1295, %v1296
        %v1329 = vsel %vm1312, %v1294, %v1295
        %v1330 = vsel %vm1312, %v1293, %v1294
        %v1331 = vsel %vm1312, %v1292, %v1293
        %v1332 = vsel %vm1312, %v1311, %v1292
        %v1333 = vpack.c.bf16 %v1330, %v1331
        %v1334 = vpack.c.bf16 %v1328, %v1329
        %v1335 = vpack.c.bf16 %v1326, %v1327
        %v1336 = vpack.c.bf16 %v1324, %v1325
        %v1337 = vpack.c.bf16 %v1322, %v1323
        %v1338 = vpack.c.bf16 %v1320, %v1321
        %v1339 = vpack.c.bf16 %v1318, %v1319
        %v1340 = vpack.c.bf16 %v1316, %v1317
        %v1341 = vpack.c.bf16 %v1314, %v1315
        %v1342 = vpack.c.bf16 %v1332, %v1313
        %v1343 = vld [vmem:[%s4] sm:$0xf]
        %v1344 = vld [vmem:[%s4 + $0x4] sm:$0xf]
        %v1345 = vld [vmem:[%s4 + $0x8] sm:$0xf]
        %v1346 = vld [vmem:[%s4 + $0xc] sm:$0xf]
        %v1347 = vld [vmem:[%s4 + $0x10] sm:$0xf]
        %v1348 = vld [vmem:[%s4 + $0x14] sm:$0xf]
        %v1349 = vld [vmem:[%s4 + $0x18] sm:$0xf]
        %v1350 = vld [vmem:[%s4 + $0x1c] sm:$0xf]
        %v1355 = vunpack.c.l.b16 %v1347
        %v1356 = vunpack.c.l.b16 %v1348
        %v1357 = vunpack.c.l.b16 %v1349
        %v1358 = vunpack.c.l.b16 %v1350
        %v1359 = vpack.c.b16 %v1356, %v1355
        %v1360 = vpack.c.b16 %v1358, %v1357
        %vm1363 = vcmask 261120
        %v1365 = vsel %vm1363, %v1262, 0
        %v1368 = vsel %vm1363, %v1263, 0
        %v1371 = vsel %vm1363, %v1264, 0
        %v1374 = vsel %vm1363, %v1265, 0
        %v1377 = vsel %vm1363, %v1266, 0
        %v1380 = vsel %vm1363, %v1267, 0
        %v1383 = vsel %vm1363, %v1268, 0
        %v1386 = vsel %vm1363, %v1269, 0
        %1388 = vmatprep.subr.bf16.mxu0 0
        %1389 = vmatpush1.bf16.msra.mxu0 0
        %1390 = vmatprep.subr.bf16.mxu0 0
        %1391 = vmatpush1.bf16.msra.mxu0 0
        %1392 = vmatprep.subr.bf16.mxu0 0
        %1393 = vmatpush1.bf16.msra.mxu0 0
        %1394 = vmatprep.subr.bf16.mxu0 0
        %1395 = vmatpush1.bf16.msra.mxu0 0
        %1396 = vmatprep.subr.bf16.mxu0 0
        %1397 = vmatpush1.bf16.msra.mxu0 0
        %1398 = vmatprep.subr.bf16.mxu0 0
        %1399 = vmatpush1.bf16.msra.mxu0 0
        %1400 = vmatprep.subr.bf16.mxu0 0
        %1401 = vmatpush1.bf16.msra.mxu0 %v1360
        %1402 = vmatprep.subr.bf16.mxu0 0
        %1403 = vmatpush1.bf16.msra.mxu0 %v1359
        %1404 = vmatprep.subr.bf16.mxu0 0
        %1405 = vmatpush2.bf16.msra.mxu0 0
        %1406 = vmatprep.subr.bf16.mxu0 0
        %1407 = vmatpush2.bf16.msra.mxu0 0
        %1408 = vmatprep.subr.bf16.mxu0 0
        %1409 = vmatpush2.bf16.msra.mxu0 0
        %1410 = vmatprep.subr.bf16.mxu0 0
        %1411 = vmatpush2.bf16.msra.mxu0 0
        %1412 = vmatprep.subr.bf16.mxu0 0
        %1413 = vmatpush2.bf16.msra.mxu0 0
        %1414 = vmatprep.subr.bf16.mxu0 0
        %1415 = vmatpush2.bf16.msra.mxu0 0
        %1416 = vmatprep.subr.bf16.mxu0 0
        %1417 = vmatpush2.bf16.msra.mxu0 0
        %1418 = vmatprep.subr.bf16.mxu0 0
        %1419 = vmatpush2.bf16.msra.mxu0 0
        %1420 = vmatprep.mubr.bf16.mxu0 0
        %1421 = vmatmul.mubr.bf16.gmra.mxu0 %v1365
        %v1422 = vpop.f32.mrf.mxu0
        %v1423 = vadd.f32 0.0, %v1422
        %v1424 = vpop.f32.mrf.mxu0
        %v1425 = vpop.f32.mrf.mxu0
        %v1426 = vadd.f32 0.0, %v1425
        %v1427 = vpop.f32.mrf.mxu0
        %1428 = vmatprep.mubr.bf16.mxu0 0
        %1429 = vmatmul.mubr.bf16.gmra.mxu0 %v1368
        %v1430 = vpop.f32.mrf.mxu0
        %v1431 = vadd.f32 0.0, %v1430
        %v1432 = vpop.f32.mrf.mxu0
        %v1433 = vpop.f32.mrf.mxu0
        %v1434 = vadd.f32 0.0, %v1433
        %v1435 = vpop.f32.mrf.mxu0
        %1436 = vmatprep.mubr.bf16.mxu0 0
        %1437 = vmatmul.mubr.bf16.gmra.mxu0 %v1371
        %v1438 = vpop.f32.mrf.mxu0
        %v1439 = vadd.f32 0.0, %v1438
        %v1440 = vpop.f32.mrf.mxu0
        %v1441 = vpop.f32.mrf.mxu0
        %v1442 = vadd.f32 0.0, %v1441
        %v1443 = vpop.f32.mrf.mxu0
        %1444 = vmatprep.mubr.bf16.mxu0 0
        %1445 = vmatmul.mubr.bf16.gmra.mxu0 %v1374
        %v1446 = vpop.f32.mrf.mxu0
        %v1447 = vadd.f32 0.0, %v1446
        %v1448 = vpop.f32.mrf.mxu0
        %v1449 = vpop.f32.mrf.mxu0
        %v1450 = vadd.f32 0.0, %v1449
        %v1451 = vpop.f32.mrf.mxu0
        %1452 = vmatprep.mubr.bf16.mxu0 0
        %1453 = vmatmul.mubr.bf16.gmra.mxu0 %v1377
        %v1454 = vpop.f32.mrf.mxu0
        %v1455 = vadd.f32 0.0, %v1454
        %v1456 = vpop.f32.mrf.mxu0
        %v1457 = vpop.f32.mrf.mxu0
        %v1458 = vadd.f32 0.0, %v1457
        %v1459 = vpop.f32.mrf.mxu0
        %1460 = vmatprep.mubr.bf16.mxu0 0
        %1461 = vmatmul.mubr.bf16.gmra.mxu0 %v1380
        %v1462 = vpop.f32.mrf.mxu0
        %v1463 = vadd.f32 0.0, %v1462
        %v1464 = vpop.f32.mrf.mxu0
        %v1465 = vpop.f32.mrf.mxu0
        %v1466 = vadd.f32 0.0, %v1465
        %v1467 = vpop.f32.mrf.mxu0
        %1468 = vmatprep.mubr.bf16.mxu0 0
        %1469 = vmatmul.mubr.bf16.gmra.mxu0 %v1383
        %v1470 = vpop.f32.mrf.mxu0
        %v1471 = vadd.f32 0.0, %v1470
        %v1472 = vpop.f32.mrf.mxu0
        %v1473 = vpop.f32.mrf.mxu0
        %v1474 = vadd.f32 0.0, %v1473
        %v1475 = vpop.f32.mrf.mxu0
        %1476 = vmatprep.mubr.bf16.mxu0 0
        %1477 = vmatmul.mubr.bf16.gmra.mxu0 %v1386
        %v1478 = vpop.f32.mrf.mxu0
        %v1479 = vadd.f32 0.0, %v1478
        %v1480 = vpop.f32.mrf.mxu0
        %v1481 = vpop.f32.mrf.mxu0
        %v1482 = vadd.f32 0.0, %v1481
        %v1483 = vpop.f32.mrf.mxu0
        %1484 = vdwg.mxu0
        %v1489 = vunpack.c.l.b16 %v1343
        %v1490 = vunpack.c.l.b16 %v1344
        %v1491 = vunpack.c.l.b16 %v1345
        %v1492 = vunpack.c.l.b16 %v1346
        %v1493 = vpack.c.b16 %v1490, %v1489
        %v1494 = vpack.c.b16 %v1492, %v1491
        %v1498 = vsel %vm1363, %v1252, 0
        %v1501 = vsel %vm1363, %v1253, 0
        %v1504 = vsel %vm1363, %v1254, 0
        %v1507 = vsel %vm1363, %v1255, 0
        %v1510 = vsel %vm1363, %v1256, 0
        %v1513 = vsel %vm1363, %v1257, 0
        %v1516 = vsel %vm1363, %v1258, 0
        %v1519 = vsel %vm1363, %v1259, 0
        %1521 = vmatprep.subr.bf16.mxu0 0
        %1522 = vmatpush1.bf16.msra.mxu0 0
        %1523 = vmatprep.subr.bf16.mxu0 0
        %1524 = vmatpush1.bf16.msra.mxu0 0
        %1525 = vmatprep.subr.bf16.mxu0 0
        %1526 = vmatpush1.bf16.msra.mxu0 0
        %1527 = vmatprep.subr.bf16.mxu0 0
        %1528 = vmatpush1.bf16.msra.mxu0 0
        %1529 = vmatprep.subr.bf16.mxu0 0
        %1530 = vmatpush1.bf16.msra.mxu0 0
        %1531 = vmatprep.subr.bf16.mxu0 0
        %1532 = vmatpush1.bf16.msra.mxu0 0
        %1533 = vmatprep.subr.bf16.mxu0 0
        %1534 = vmatpush1.bf16.msra.mxu0 %v1494
        %1535 = vmatprep.subr.bf16.mxu0 0
        %1536 = vmatpush1.bf16.msra.mxu0 %v1493
        %1537 = vmatprep.subr.bf16.mxu0 0
        %1538 = vmatpush2.bf16.msra.mxu0 0
        %1539 = vmatprep.subr.bf16.mxu0 0
        %1540 = vmatpush2.bf16.msra.mxu0 0
        %1541 = vmatprep.subr.bf16.mxu0 0
        %1542 = vmatpush2.bf16.msra.mxu0 0
        %1543 = vmatprep.subr.bf16.mxu0 0
        %1544 = vmatpush2.bf16.msra.mxu0 0
        %1545 = vmatprep.subr.bf16.mxu0 0
        %1546 = vmatpush2.bf16.msra.mxu0 0
        %1547 = vmatprep.subr.bf16.mxu0 0
        %1548 = vmatpush2.bf16.msra.mxu0 0
        %1549 = vmatprep.subr.bf16.mxu0 0
        %1550 = vmatpush2.bf16.msra.mxu0 0
        %1551 = vmatprep.subr.bf16.mxu0 0
        %1552 = vmatpush2.bf16.msra.mxu0 0
        %1553 = vmatprep.mubr.bf16.mxu0 0
        %1554 = vmatmul.mubr.bf16.gmra.mxu0 %v1498
        %v1555 = vpop.f32.mrf.mxu0
        %v1556 = vadd.f32 %v1423, %v1555
        %v1557 = vpop.f32.mrf.mxu0
        %v1558 = vpop.f32.mrf.mxu0
        %v1559 = vadd.f32 %v1426, %v1558
        %v1560 = vpop.f32.mrf.mxu0
        %1561 = vmatprep.mubr.bf16.mxu0 0
        %1562 = vmatmul.mubr.bf16.gmra.mxu0 %v1501
        %v1563 = vpop.f32.mrf.mxu0
        %v1564 = vadd.f32 %v1431, %v1563
        %v1565 = vpop.f32.mrf.mxu0
        %v1566 = vpop.f32.mrf.mxu0
        %v1567 = vadd.f32 %v1434, %v1566
        %v1568 = vpop.f32.mrf.mxu0
        %1569 = vmatprep.mubr.bf16.mxu0 0
        %1570 = vmatmul.mubr.bf16.gmra.mxu0 %v1504
        %v1571 = vpop.f32.mrf.mxu0
        %v1572 = vadd.f32 %v1439, %v1571
        %v1573 = vpop.f32.mrf.mxu0
        %v1574 = vpop.f32.mrf.mxu0
        %v1575 = vadd.f32 %v1442, %v1574
        %v1576 = vpop.f32.mrf.mxu0
        %1577 = vmatprep.mubr.bf16.mxu0 0
        %1578 = vmatmul.mubr.bf16.gmra.mxu0 %v1507
        %v1579 = vpop.f32.mrf.mxu0
        %v1580 = vadd.f32 %v1447, %v1579
        %v1581 = vpop.f32.mrf.mxu0
        %v1582 = vpop.f32.mrf.mxu0
        %v1583 = vadd.f32 %v1450, %v1582
        %v1584 = vpop.f32.mrf.mxu0
        %1585 = vmatprep.mubr.bf16.mxu0 0
        %1586 = vmatmul.mubr.bf16.gmra.mxu0 %v1510
        %v1587 = vpop.f32.mrf.mxu0
        %v1588 = vadd.f32 %v1455, %v1587
        %v1589 = vpop.f32.mrf.mxu0
        %v1590 = vpop.f32.mrf.mxu0
        %v1591 = vadd.f32 %v1458, %v1590
        %v1592 = vpop.f32.mrf.mxu0
        %1593 = vmatprep.mubr.bf16.mxu0 0
        %1594 = vmatmul.mubr.bf16.gmra.mxu0 %v1513
        %v1595 = vpop.f32.mrf.mxu0
        %v1596 = vadd.f32 %v1463, %v1595
        %v1597 = vpop.f32.mrf.mxu0
        %v1598 = vpop.f32.mrf.mxu0
        %v1599 = vadd.f32 %v1466, %v1598
        %v1600 = vpop.f32.mrf.mxu0
        %1601 = vmatprep.mubr.bf16.mxu0 0
        %1602 = vmatmul.mubr.bf16.gmra.mxu0 %v1516
        %v1603 = vpop.f32.mrf.mxu0
        %v1604 = vadd.f32 %v1471, %v1603
        %v1605 = vpop.f32.mrf.mxu0
        %v1606 = vpop.f32.mrf.mxu0
        %v1607 = vadd.f32 %v1474, %v1606
        %v1608 = vpop.f32.mrf.mxu0
        %1609 = vmatprep.mubr.bf16.mxu0 0
        %1610 = vmatmul.mubr.bf16.gmra.mxu0 %v1519
        %v1611 = vpop.f32.mrf.mxu0
        %v1612 = vadd.f32 %v1479, %v1611
        %v1613 = vpop.f32.mrf.mxu0
        %v1614 = vpop.f32.mrf.mxu0
        %v1615 = vadd.f32 %v1482, %v1614
        %v1616 = vpop.f32.mrf.mxu0
        %1617 = vdwg.mxu0
        %v1618 = vld [vmem:[%s4 + $0x20] sm:$0xf]
        %v1619 = vld [vmem:[%s4 + $0x24] sm:$0xf]
        %v1620 = vld [vmem:[%s4 + $0x28] sm:$0xf]
        %v1621 = vld [vmem:[%s4 + $0x2c] sm:$0xf]
        %v1626 = vunpack.c.l.b16 %v1618
        %v1627 = vunpack.c.l.b16 %v1619
        %v1628 = vunpack.c.l.b16 %v1620
        %v1629 = vunpack.c.l.b16 %v1621
        %v1630 = vpack.c.b16 %v1627, %v1626
        %v1631 = vpack.c.b16 %v1629, %v1628
        %v1635 = vsel %vm1363, %v1333, 0
        %v1638 = vsel %vm1363, %v1334, 0
        %v1641 = vsel %vm1363, %v1335, 0
        %v1644 = vsel %vm1363, %v1336, 0
        %v1647 = vsel %vm1363, %v1337, 0
        %v1650 = vsel %vm1363, %v1338, 0
        %v1653 = vsel %vm1363, %v1339, 0
        %v1656 = vsel %vm1363, %v1340, 0
        %1658 = vmatprep.subr.bf16.mxu0 0
        %1659 = vmatpush1.bf16.msra.mxu0 0
        %1660 = vmatprep.subr.bf16.mxu0 0
        %1661 = vmatpush1.bf16.msra.mxu0 0
        %1662 = vmatprep.subr.bf16.mxu0 0
        %1663 = vmatpush1.bf16.msra.mxu0 0
        %1664 = vmatprep.subr.bf16.mxu0 0
        %1665 = vmatpush1.bf16.msra.mxu0 0
        %1666 = vmatprep.subr.bf16.mxu0 0
        %1667 = vmatpush1.bf16.msra.mxu0 0
        %1668 = vmatprep.subr.bf16.mxu0 0
        %1669 = vmatpush1.bf16.msra.mxu0 0
        %1670 = vmatprep.subr.bf16.mxu0 0
        %1671 = vmatpush1.bf16.msra.mxu0 %v1631
        %1672 = vmatprep.subr.bf16.mxu0 0
        %1673 = vmatpush1.bf16.msra.mxu0 %v1630
        %1674 = vmatprep.subr.bf16.mxu0 0
        %1675 = vmatpush2.bf16.msra.mxu0 0
        %1676 = vmatprep.subr.bf16.mxu0 0
        %1677 = vmatpush2.bf16.msra.mxu0 0
        %1678 = vmatprep.subr.bf16.mxu0 0
        %1679 = vmatpush2.bf16.msra.mxu0 0
        %1680 = vmatprep.subr.bf16.mxu0 0
        %1681 = vmatpush2.bf16.msra.mxu0 0
        %1682 = vmatprep.subr.bf16.mxu0 0
        %1683 = vmatpush2.bf16.msra.mxu0 0
        %1684 = vmatprep.subr.bf16.mxu0 0
        %1685 = vmatpush2.bf16.msra.mxu0 0
        %1686 = vmatprep.subr.bf16.mxu0 0
        %1687 = vmatpush2.bf16.msra.mxu0 0
        %1688 = vmatprep.subr.bf16.mxu0 0
        %1689 = vmatpush2.bf16.msra.mxu0 0
        %1690 = vmatprep.mubr.bf16.mxu0 0
        %1691 = vmatmul.mubr.bf16.gmra.mxu0 %v1635
        %v1692 = vpop.f32.mrf.mxu0
        %v1693 = vadd.f32 0.0, %v1692
        %v1694 = vpop.f32.mrf.mxu0
        %v1695 = vpop.f32.mrf.mxu0
        %v1696 = vadd.f32 0.0, %v1695
        %v1697 = vpop.f32.mrf.mxu0
        %1698 = vmatprep.mubr.bf16.mxu0 0
        %1699 = vmatmul.mubr.bf16.gmra.mxu0 %v1638
        %v1700 = vpop.f32.mrf.mxu0
        %v1701 = vadd.f32 0.0, %v1700
        %v1702 = vpop.f32.mrf.mxu0
        %v1703 = vpop.f32.mrf.mxu0
        %v1704 = vadd.f32 0.0, %v1703
        %v1705 = vpop.f32.mrf.mxu0
        %1706 = vmatprep.mubr.bf16.mxu0 0
        %1707 = vmatmul.mubr.bf16.gmra.mxu0 %v1641
        %v1708 = vpop.f32.mrf.mxu0
        %v1709 = vadd.f32 0.0, %v1708
        %v1710 = vpop.f32.mrf.mxu0
        %v1711 = vpop.f32.mrf.mxu0
        %v1712 = vadd.f32 0.0, %v1711
        %v1713 = vpop.f32.mrf.mxu0
        %1714 = vmatprep.mubr.bf16.mxu0 0
        %1715 = vmatmul.mubr.bf16.gmra.mxu0 %v1644
        %v1716 = vpop.f32.mrf.mxu0
        %v1717 = vadd.f32 0.0, %v1716
        %v1718 = vpop.f32.mrf.mxu0
        %v1719 = vpop.f32.mrf.mxu0
        %v1720 = vadd.f32 0.0, %v1719
        %v1721 = vpop.f32.mrf.mxu0
        %1722 = vmatprep.mubr.bf16.mxu0 0
        %1723 = vmatmul.mubr.bf16.gmra.mxu0 %v1647
        %v1724 = vpop.f32.mrf.mxu0
        %v1725 = vadd.f32 0.0, %v1724
        %v1726 = vpop.f32.mrf.mxu0
        %v1727 = vpop.f32.mrf.mxu0
        %v1728 = vadd.f32 0.0, %v1727
        %v1729 = vpop.f32.mrf.mxu0
        %1730 = vmatprep.mubr.bf16.mxu0 0
        %1731 = vmatmul.mubr.bf16.gmra.mxu0 %v1650
        %v1732 = vpop.f32.mrf.mxu0
        %v1733 = vadd.f32 0.0, %v1732
        %v1734 = vpop.f32.mrf.mxu0
        %v1735 = vpop.f32.mrf.mxu0
        %v1736 = vadd.f32 0.0, %v1735
        %v1737 = vpop.f32.mrf.mxu0
        %1738 = vmatprep.mubr.bf16.mxu0 0
        %1739 = vmatmul.mubr.bf16.gmra.mxu0 %v1653
        %v1740 = vpop.f32.mrf.mxu0
        %v1741 = vadd.f32 0.0, %v1740
        %v1742 = vpop.f32.mrf.mxu0
        %v1743 = vpop.f32.mrf.mxu0
        %v1744 = vadd.f32 0.0, %v1743
        %v1745 = vpop.f32.mrf.mxu0
        %1746 = vmatprep.mubr.bf16.mxu0 0
        %1747 = vmatmul.mubr.bf16.gmra.mxu0 %v1656
        %v1748 = vpop.f32.mrf.mxu0
        %v1749 = vadd.f32 0.0, %v1748
        %v1750 = vpop.f32.mrf.mxu0
        %v1751 = vpop.f32.mrf.mxu0
        %v1752 = vadd.f32 0.0, %v1751
        %v1753 = vpop.f32.mrf.mxu0
        %1754 = vdwg.mxu0
        %v1755 = vadd.f32 %v1556, %v1693
        %v1756 = vadd.f32 %v1559, %v1696
        %v1757 = vadd.f32 %v1564, %v1701
        %v1758 = vadd.f32 %v1567, %v1704
        %v1759 = vadd.f32 %v1572, %v1709
        %v1760 = vadd.f32 %v1575, %v1712
        %v1761 = vadd.f32 %v1580, %v1717
        %v1762 = vadd.f32 %v1583, %v1720
        %v1763 = vadd.f32 %v1588, %v1725
        %v1764 = vadd.f32 %v1591, %v1728
        %v1765 = vadd.f32 %v1596, %v1733
        %v1766 = vadd.f32 %v1599, %v1736
        %v1767 = vadd.f32 %v1604, %v1741
        %v1768 = vadd.f32 %v1607, %v1744
        %v1769 = vadd.f32 %v1612, %v1749
        %v1770 = vadd.f32 %v1615, %v1752
        %v1771 = vld [vmem:[%s4 + $0x30] sm:$0xf]
        %v1772 = vld [vmem:[%s4 + $0x34] sm:$0xf]
        %v1773 = vld [vmem:[%s4 + $0x38] sm:$0xf]
        %v1774 = vld [vmem:[%s4 + $0x3c] sm:$0xf]
        %v1779 = vunpack.c.l.b16 %v1771
        %v1780 = vunpack.c.l.b16 %v1772
        %v1781 = vunpack.c.l.b16 %v1773
        %v1782 = vunpack.c.l.b16 %v1774
        %v1783 = vpack.c.b16 %v1780, %v1779
        %v1784 = vpack.c.b16 %v1782, %v1781
        %v1788 = vsel %vm1363, %v1260, 0
        %1790 = vmatprep.subr.bf16.mxu0 0
        %1791 = vmatpush1.bf16.msra.mxu0 0
        %1792 = vmatprep.subr.bf16.mxu0 0
        %1793 = vmatpush1.bf16.msra.mxu0 0
        %1794 = vmatprep.subr.bf16.mxu0 0
        %1795 = vmatpush1.bf16.msra.mxu0 0
        %1796 = vmatprep.subr.bf16.mxu0 0
        %1797 = vmatpush1.bf16.msra.mxu0 0
        %1798 = vmatprep.subr.bf16.mxu0 0
        %1799 = vmatpush1.bf16.msra.mxu0 0
        %1800 = vmatprep.subr.bf16.mxu0 0
        %1801 = vmatpush1.bf16.msra.mxu0 0
        %1802 = vmatprep.subr.bf16.mxu0 0
        %1803 = vmatpush1.bf16.msra.mxu0 %v1784
        %1804 = vmatprep.subr.bf16.mxu0 0
        %1805 = vmatpush1.bf16.msra.mxu0 %v1783
        %1806 = vmatprep.subr.bf16.mxu0 0
        %1807 = vmatpush2.bf16.msra.mxu0 0
        %1808 = vmatprep.subr.bf16.mxu0 0
        %1809 = vmatpush2.bf16.msra.mxu0 0
        %1810 = vmatprep.subr.bf16.mxu0 0
        %1811 = vmatpush2.bf16.msra.mxu0 0
        %1812 = vmatprep.subr.bf16.mxu0 0
        %1813 = vmatpush2.bf16.msra.mxu0 0
        %1814 = vmatprep.subr.bf16.mxu0 0
        %1815 = vmatpush2.bf16.msra.mxu0 0
        %1816 = vmatprep.subr.bf16.mxu0 0
        %1817 = vmatpush2.bf16.msra.mxu0 0
        %1818 = vmatprep.subr.bf16.mxu0 0
        %1819 = vmatpush2.bf16.msra.mxu0 0
        %1820 = vmatprep.subr.bf16.mxu0 0
        %1821 = vmatpush2.bf16.msra.mxu0 0
        %1822 = vmatprep.mubr.bf16.mxu0 0
        %1823 = vmatmul.mubr.bf16.gmra.mxu0 %v1501
        %v1824 = vpop.f32.mrf.mxu0
        %v1825 = vadd.f32 0.0, %v1824
        %v1826 = vpop.f32.mrf.mxu0
        %v1827 = vpop.f32.mrf.mxu0
        %v1828 = vadd.f32 0.0, %v1827
        %v1829 = vpop.f32.mrf.mxu0
        %1830 = vmatprep.mubr.bf16.mxu0 0
        %1831 = vmatmul.mubr.bf16.gmra.mxu0 %v1504
        %v1832 = vpop.f32.mrf.mxu0
        %v1833 = vadd.f32 0.0, %v1832
        %v1834 = vpop.f32.mrf.mxu0
        %v1835 = vpop.f32.mrf.mxu0
        %v1836 = vadd.f32 0.0, %v1835
        %v1837 = vpop.f32.mrf.mxu0
        %1838 = vmatprep.mubr.bf16.mxu0 0
        %1839 = vmatmul.mubr.bf16.gmra.mxu0 %v1507
        %v1840 = vpop.f32.mrf.mxu0
        %v1841 = vadd.f32 0.0, %v1840
        %v1842 = vpop.f32.mrf.mxu0
        %v1843 = vpop.f32.mrf.mxu0
        %v1844 = vadd.f32 0.0, %v1843
        %v1845 = vpop.f32.mrf.mxu0
        %1846 = vmatprep.mubr.bf16.mxu0 0
        %1847 = vmatmul.mubr.bf16.gmra.mxu0 %v1510
        %v1848 = vpop.f32.mrf.mxu0
        %v1849 = vadd.f32 0.0, %v1848
        %v1850 = vpop.f32.mrf.mxu0
        %v1851 = vpop.f32.mrf.mxu0
        %v1852 = vadd.f32 0.0, %v1851
        %v1853 = vpop.f32.mrf.mxu0
        %1854 = vmatprep.mubr.bf16.mxu0 0
        %1855 = vmatmul.mubr.bf16.gmra.mxu0 %v1513
        %v1856 = vpop.f32.mrf.mxu0
        %v1857 = vadd.f32 0.0, %v1856
        %v1858 = vpop.f32.mrf.mxu0
        %v1859 = vpop.f32.mrf.mxu0
        %v1860 = vadd.f32 0.0, %v1859
        %v1861 = vpop.f32.mrf.mxu0
        %1862 = vmatprep.mubr.bf16.mxu0 0
        %1863 = vmatmul.mubr.bf16.gmra.mxu0 %v1516
        %v1864 = vpop.f32.mrf.mxu0
        %v1865 = vadd.f32 0.0, %v1864
        %v1866 = vpop.f32.mrf.mxu0
        %v1867 = vpop.f32.mrf.mxu0
        %v1868 = vadd.f32 0.0, %v1867
        %v1869 = vpop.f32.mrf.mxu0
        %1870 = vmatprep.mubr.bf16.mxu0 0
        %1871 = vmatmul.mubr.bf16.gmra.mxu0 %v1519
        %v1872 = vpop.f32.mrf.mxu0
        %v1873 = vadd.f32 0.0, %v1872
        %v1874 = vpop.f32.mrf.mxu0
        %v1875 = vpop.f32.mrf.mxu0
        %v1876 = vadd.f32 0.0, %v1875
        %v1877 = vpop.f32.mrf.mxu0
        %1878 = vmatprep.mubr.bf16.mxu0 0
        %1879 = vmatmul.mubr.bf16.gmra.mxu0 %v1788
        %v1880 = vpop.f32.mrf.mxu0
        %v1881 = vadd.f32 0.0, %v1880
        %v1882 = vpop.f32.mrf.mxu0
        %v1883 = vpop.f32.mrf.mxu0
        %v1884 = vadd.f32 0.0, %v1883
        %v1885 = vpop.f32.mrf.mxu0
        %1886 = vdwg.mxu0
        %v1887 = vadd.f32 %v1755, %v1825
        %v1888 = vadd.f32 %v1756, %v1828
        %v1889 = vadd.f32 %v1757, %v1833
        %v1890 = vadd.f32 %v1758, %v1836
        %v1891 = vadd.f32 %v1759, %v1841
        %v1892 = vadd.f32 %v1760, %v1844
        %v1893 = vadd.f32 %v1761, %v1849
        %v1894 = vadd.f32 %v1762, %v1852
        %v1895 = vadd.f32 %v1763, %v1857
        %v1896 = vadd.f32 %v1764, %v1860
        %v1897 = vadd.f32 %v1765, %v1865
        %v1898 = vadd.f32 %v1766, %v1868
        %v1899 = vadd.f32 %v1767, %v1873
        %v1900 = vadd.f32 %v1768, %v1876
        %v1901 = vadd.f32 %v1769, %v1881
        %v1902 = vadd.f32 %v1770, %v1884
        %v1903 = vld [vmem:[%s4 + $0x40] sm:$0xf]
        %v1904 = vld [vmem:[%s4 + $0x44] sm:$0xf]
        %v1905 = vld [vmem:[%s4 + $0x48] sm:$0xf]
        %v1906 = vld [vmem:[%s4 + $0x4c] sm:$0xf]
        %v1911 = vunpack.c.l.b16 %v1903
        %v1912 = vunpack.c.l.b16 %v1904
        %v1913 = vunpack.c.l.b16 %v1905
        %v1914 = vunpack.c.l.b16 %v1906
        %v1915 = vpack.c.b16 %v1912, %v1911
        %v1916 = vpack.c.b16 %v1914, %v1913
        %v1920 = vsel %vm1363, %v1270, 0
        %1922 = vmatprep.subr.bf16.mxu0 0
        %1923 = vmatpush1.bf16.msra.mxu0 0
        %1924 = vmatprep.subr.bf16.mxu0 0
        %1925 = vmatpush1.bf16.msra.mxu0 0
        %1926 = vmatprep.subr.bf16.mxu0 0
        %1927 = vmatpush1.bf16.msra.mxu0 0
        %1928 = vmatprep.subr.bf16.mxu0 0
        %1929 = vmatpush1.bf16.msra.mxu0 0
        %1930 = vmatprep.subr.bf16.mxu0 0
        %1931 = vmatpush1.bf16.msra.mxu0 0
        %1932 = vmatprep.subr.bf16.mxu0 0
        %1933 = vmatpush1.bf16.msra.mxu0 0
        %1934 = vmatprep.subr.bf16.mxu0 0
        %1935 = vmatpush1.bf16.msra.mxu0 %v1916
        %1936 = vmatprep.subr.bf16.mxu0 0
        %1937 = vmatpush1.bf16.msra.mxu0 %v1915
        %1938 = vmatprep.subr.bf16.mxu0 0
        %1939 = vmatpush2.bf16.msra.mxu0 0
        %1940 = vmatprep.subr.bf16.mxu0 0
        %1941 = vmatpush2.bf16.msra.mxu0 0
        %1942 = vmatprep.subr.bf16.mxu0 0
        %1943 = vmatpush2.bf16.msra.mxu0 0
        %1944 = vmatprep.subr.bf16.mxu0 0
        %1945 = vmatpush2.bf16.msra.mxu0 0
        %1946 = vmatprep.subr.bf16.mxu0 0
        %1947 = vmatpush2.bf16.msra.mxu0 0
        %1948 = vmatprep.subr.bf16.mxu0 0
        %1949 = vmatpush2.bf16.msra.mxu0 0
        %1950 = vmatprep.subr.bf16.mxu0 0
        %1951 = vmatpush2.bf16.msra.mxu0 0
        %1952 = vmatprep.subr.bf16.mxu0 0
        %1953 = vmatpush2.bf16.msra.mxu0 0
        %1954 = vmatprep.mubr.bf16.mxu0 0
        %1955 = vmatmul.mubr.bf16.gmra.mxu0 %v1368
        %v1956 = vpop.f32.mrf.mxu0
        %v1957 = vadd.f32 0.0, %v1956
        %v1958 = vpop.f32.mrf.mxu0
        %v1959 = vpop.f32.mrf.mxu0
        %v1960 = vadd.f32 0.0, %v1959
        %v1961 = vpop.f32.mrf.mxu0
        %1962 = vmatprep.mubr.bf16.mxu0 0
        %1963 = vmatmul.mubr.bf16.gmra.mxu0 %v1371
        %v1964 = vpop.f32.mrf.mxu0
        %v1965 = vadd.f32 0.0, %v1964
        %v1966 = vpop.f32.mrf.mxu0
        %v1967 = vpop.f32.mrf.mxu0
        %v1968 = vadd.f32 0.0, %v1967
        %v1969 = vpop.f32.mrf.mxu0
        %1970 = vmatprep.mubr.bf16.mxu0 0
        %1971 = vmatmul.mubr.bf16.gmra.mxu0 %v1374
        %v1972 = vpop.f32.mrf.mxu0
        %v1973 = vadd.f32 0.0, %v1972
        %v1974 = vpop.f32.mrf.mxu0
        %v1975 = vpop.f32.mrf.mxu0
        %v1976 = vadd.f32 0.0, %v1975
        %v1977 = vpop.f32.mrf.mxu0
        %1978 = vmatprep.mubr.bf16.mxu0 0
        %1979 = vmatmul.mubr.bf16.gmra.mxu0 %v1377
        %v1980 = vpop.f32.mrf.mxu0
        %v1981 = vadd.f32 0.0, %v1980
        %v1982 = vpop.f32.mrf.mxu0
        %v1983 = vpop.f32.mrf.mxu0
        %v1984 = vadd.f32 0.0, %v1983
        %v1985 = vpop.f32.mrf.mxu0
        %1986 = vmatprep.mubr.bf16.mxu0 0
        %1987 = vmatmul.mubr.bf16.gmra.mxu0 %v1380
        %v1988 = vpop.f32.mrf.mxu0
        %v1989 = vadd.f32 0.0, %v1988
        %v1990 = vpop.f32.mrf.mxu0
        %v1991 = vpop.f32.mrf.mxu0
        %v1992 = vadd.f32 0.0, %v1991
        %v1993 = vpop.f32.mrf.mxu0
        %1994 = vmatprep.mubr.bf16.mxu0 0
        %1995 = vmatmul.mubr.bf16.gmra.mxu0 %v1383
        %v1996 = vpop.f32.mrf.mxu0
        %v1997 = vadd.f32 0.0, %v1996
        %v1998 = vpop.f32.mrf.mxu0
        %v1999 = vpop.f32.mrf.mxu0
        %v2000 = vadd.f32 0.0, %v1999
        %v2001 = vpop.f32.mrf.mxu0
        %2002 = vmatprep.mubr.bf16.mxu0 0
        %2003 = vmatmul.mubr.bf16.gmra.mxu0 %v1386
        %v2004 = vpop.f32.mrf.mxu0
        %v2005 = vadd.f32 0.0, %v2004
        %v2006 = vpop.f32.mrf.mxu0
        %v2007 = vpop.f32.mrf.mxu0
        %v2008 = vadd.f32 0.0, %v2007
        %v2009 = vpop.f32.mrf.mxu0
        %2010 = vmatprep.mubr.bf16.mxu0 0
        %2011 = vmatmul.mubr.bf16.gmra.mxu0 %v1920
        %v2012 = vpop.f32.mrf.mxu0
        %v2013 = vadd.f32 0.0, %v2012
        %v2014 = vpop.f32.mrf.mxu0
        %v2015 = vpop.f32.mrf.mxu0
        %v2016 = vadd.f32 0.0, %v2015
        %v2017 = vpop.f32.mrf.mxu0
        %2018 = vdwg.mxu0
        %v2019 = vadd.f32 %v1887, %v1957
        %v2020 = vadd.f32 %v1888, %v1960
        %v2021 = vadd.f32 %v1889, %v1965
        %v2022 = vadd.f32 %v1890, %v1968
        %v2023 = vadd.f32 %v1891, %v1973
        %v2024 = vadd.f32 %v1892, %v1976
        %v2025 = vadd.f32 %v1893, %v1981
        %v2026 = vadd.f32 %v1894, %v1984
        %v2027 = vadd.f32 %v1895, %v1989
        %v2028 = vadd.f32 %v1896, %v1992
        %v2029 = vadd.f32 %v1897, %v1997
        %v2030 = vadd.f32 %v1898, %v2000
        %v2031 = vadd.f32 %v1899, %v2005
        %v2032 = vadd.f32 %v1900, %v2008
        %v2033 = vadd.f32 %v1901, %v2013
        %v2034 = vadd.f32 %v1902, %v2016
        %v2035 = vld [vmem:[%s4 + $0x50] sm:$0xf]
        %v2036 = vld [vmem:[%s4 + $0x54] sm:$0xf]
        %v2037 = vld [vmem:[%s4 + $0x58] sm:$0xf]
        %v2038 = vld [vmem:[%s4 + $0x5c] sm:$0xf]
        %v2043 = vunpack.c.l.b16 %v2035
        %v2044 = vunpack.c.l.b16 %v2036
        %v2045 = vunpack.c.l.b16 %v2037
        %v2046 = vunpack.c.l.b16 %v2038
        %v2047 = vpack.c.b16 %v2044, %v2043
        %v2048 = vpack.c.b16 %v2046, %v2045
        %v2052 = vsel %vm1363, %v1341, 0
        %2054 = vmatprep.subr.bf16.mxu0 0
        %2055 = vmatpush1.bf16.msra.mxu0 0
        %2056 = vmatprep.subr.bf16.mxu0 0
        %2057 = vmatpush1.bf16.msra.mxu0 0
        %2058 = vmatprep.subr.bf16.mxu0 0
        %2059 = vmatpush1.bf16.msra.mxu0 0
        %2060 = vmatprep.subr.bf16.mxu0 0
        %2061 = vmatpush1.bf16.msra.mxu0 0
        %2062 = vmatprep.subr.bf16.mxu0 0
        %2063 = vmatpush1.bf16.msra.mxu0 0
        %2064 = vmatprep.subr.bf16.mxu0 0
        %2065 = vmatpush1.bf16.msra.mxu0 0
        %2066 = vmatprep.subr.bf16.mxu0 0
        %2067 = vmatpush1.bf16.msra.mxu0 %v2048
        %2068 = vmatprep.subr.bf16.mxu0 0
        %2069 = vmatpush1.bf16.msra.mxu0 %v2047
        %2070 = vmatprep.subr.bf16.mxu0 0
        %2071 = vmatpush2.bf16.msra.mxu0 0
        %2072 = vmatprep.subr.bf16.mxu0 0
        %2073 = vmatpush2.bf16.msra.mxu0 0
        %2074 = vmatprep.subr.bf16.mxu0 0
        %2075 = vmatpush2.bf16.msra.mxu0 0
        %2076 = vmatprep.subr.bf16.mxu0 0
        %2077 = vmatpush2.bf16.msra.mxu0 0
        %2078 = vmatprep.subr.bf16.mxu0 0
        %2079 = vmatpush2.bf16.msra.mxu0 0
        %2080 = vmatprep.subr.bf16.mxu0 0
        %2081 = vmatpush2.bf16.msra.mxu0 0
        %2082 = vmatprep.subr.bf16.mxu0 0
        %2083 = vmatpush2.bf16.msra.mxu0 0
        %2084 = vmatprep.subr.bf16.mxu0 0
        %2085 = vmatpush2.bf16.msra.mxu0 0
        %2086 = vmatprep.mubr.bf16.mxu0 0
        %2087 = vmatmul.mubr.bf16.gmra.mxu0 %v1638
        %v2088 = vpop.f32.mrf.mxu0
        %v2089 = vadd.f32 0.0, %v2088
        %v2090 = vpop.f32.mrf.mxu0
        %v2091 = vpop.f32.mrf.mxu0
        %v2092 = vadd.f32 0.0, %v2091
        %v2093 = vpop.f32.mrf.mxu0
        %2094 = vmatprep.mubr.bf16.mxu0 0
        %2095 = vmatmul.mubr.bf16.gmra.mxu0 %v1641
        %v2096 = vpop.f32.mrf.mxu0
        %v2097 = vadd.f32 0.0, %v2096
        %v2098 = vpop.f32.mrf.mxu0
        %v2099 = vpop.f32.mrf.mxu0
        %v2100 = vadd.f32 0.0, %v2099
        %v2101 = vpop.f32.mrf.mxu0
        %2102 = vmatprep.mubr.bf16.mxu0 0
        %2103 = vmatmul.mubr.bf16.gmra.mxu0 %v1644
        %v2104 = vpop.f32.mrf.mxu0
        %v2105 = vadd.f32 0.0, %v2104
        %v2106 = vpop.f32.mrf.mxu0
        %v2107 = vpop.f32.mrf.mxu0
        %v2108 = vadd.f32 0.0, %v2107
        %v2109 = vpop.f32.mrf.mxu0
        %2110 = vmatprep.mubr.bf16.mxu0 0
        %2111 = vmatmul.mubr.bf16.gmra.mxu0 %v1647
        %v2112 = vpop.f32.mrf.mxu0
        %v2113 = vadd.f32 0.0, %v2112
        %v2114 = vpop.f32.mrf.mxu0
        %v2115 = vpop.f32.mrf.mxu0
        %v2116 = vadd.f32 0.0, %v2115
        %v2117 = vpop.f32.mrf.mxu0
        %2118 = vmatprep.mubr.bf16.mxu0 0
        %2119 = vmatmul.mubr.bf16.gmra.mxu0 %v1650
        %v2120 = vpop.f32.mrf.mxu0
        %v2121 = vadd.f32 0.0, %v2120
        %v2122 = vpop.f32.mrf.mxu0
        %v2123 = vpop.f32.mrf.mxu0
        %v2124 = vadd.f32 0.0, %v2123
        %v2125 = vpop.f32.mrf.mxu0
        %2126 = vmatprep.mubr.bf16.mxu0 0
        %2127 = vmatmul.mubr.bf16.gmra.mxu0 %v1653
        %v2128 = vpop.f32.mrf.mxu0
        %v2129 = vadd.f32 0.0, %v2128
        %v2130 = vpop.f32.mrf.mxu0
        %v2131 = vpop.f32.mrf.mxu0
        %v2132 = vadd.f32 0.0, %v2131
        %v2133 = vpop.f32.mrf.mxu0
        %2134 = vmatprep.mubr.bf16.mxu0 0
        %2135 = vmatmul.mubr.bf16.gmra.mxu0 %v1656
        %v2136 = vpop.f32.mrf.mxu0
        %v2137 = vadd.f32 0.0, %v2136
        %v2138 = vpop.f32.mrf.mxu0
        %v2139 = vpop.f32.mrf.mxu0
        %v2140 = vadd.f32 0.0, %v2139
        %v2141 = vpop.f32.mrf.mxu0
        %2142 = vmatprep.mubr.bf16.mxu0 0
        %2143 = vmatmul.mubr.bf16.gmra.mxu0 %v2052
        %v2144 = vpop.f32.mrf.mxu0
        %v2145 = vadd.f32 0.0, %v2144
        %v2146 = vpop.f32.mrf.mxu0
        %v2147 = vpop.f32.mrf.mxu0
        %v2148 = vadd.f32 0.0, %v2147
        %v2149 = vpop.f32.mrf.mxu0
        %2150 = vdwg.mxu0
        %v2151 = vadd.f32 %v2019, %v2089
        %v2152 = vadd.f32 %v2020, %v2092
        %v2153 = vadd.f32 %v2021, %v2097
        %v2154 = vadd.f32 %v2022, %v2100
        %v2155 = vadd.f32 %v2023, %v2105
        %v2156 = vadd.f32 %v2024, %v2108
        %v2157 = vadd.f32 %v2025, %v2113
        %v2158 = vadd.f32 %v2026, %v2116
        %v2159 = vadd.f32 %v2027, %v2121
        %v2160 = vadd.f32 %v2028, %v2124
        %v2161 = vadd.f32 %v2029, %v2129
        %v2162 = vadd.f32 %v2030, %v2132
        %v2163 = vadd.f32 %v2031, %v2137
        %v2164 = vadd.f32 %v2032, %v2140
        %v2165 = vadd.f32 %v2033, %v2145
        %v2166 = vadd.f32 %v2034, %v2148
        %v2167 = vld [vmem:[%s4 + $0x60] sm:$0xf]
        %v2168 = vld [vmem:[%s4 + $0x64] sm:$0xf]
        %v2169 = vld [vmem:[%s4 + $0x68] sm:$0xf]
        %v2170 = vld [vmem:[%s4 + $0x6c] sm:$0xf]
        %v2175 = vunpack.c.l.b16 %v2167
        %v2176 = vunpack.c.l.b16 %v2168
        %v2177 = vunpack.c.l.b16 %v2169
        %v2178 = vunpack.c.l.b16 %v2170
        %v2179 = vpack.c.b16 %v2176, %v2175
        %v2180 = vpack.c.b16 %v2178, %v2177
        %v2184 = vsel %vm1363, %v1261, 0
        %2186 = vmatprep.subr.bf16.mxu0 0
        %2187 = vmatpush1.bf16.msra.mxu0 0
        %2188 = vmatprep.subr.bf16.mxu0 0
        %2189 = vmatpush1.bf16.msra.mxu0 0
        %2190 = vmatprep.subr.bf16.mxu0 0
        %2191 = vmatpush1.bf16.msra.mxu0 0
        %2192 = vmatprep.subr.bf16.mxu0 0
        %2193 = vmatpush1.bf16.msra.mxu0 0
        %2194 = vmatprep.subr.bf16.mxu0 0
        %2195 = vmatpush1.bf16.msra.mxu0 0
        %2196 = vmatprep.subr.bf16.mxu0 0
        %2197 = vmatpush1.bf16.msra.mxu0 0
        %2198 = vmatprep.subr.bf16.mxu0 0
        %2199 = vmatpush1.bf16.msra.mxu0 %v2180
        %2200 = vmatprep.subr.bf16.mxu0 0
        %2201 = vmatpush1.bf16.msra.mxu0 %v2179
        %2202 = vmatprep.subr.bf16.mxu0 0
        %2203 = vmatpush2.bf16.msra.mxu0 0
        %2204 = vmatprep.subr.bf16.mxu0 0
        %2205 = vmatpush2.bf16.msra.mxu0 0
        %2206 = vmatprep.subr.bf16.mxu0 0
        %2207 = vmatpush2.bf16.msra.mxu0 0
        %2208 = vmatprep.subr.bf16.mxu0 0
        %2209 = vmatpush2.bf16.msra.mxu0 0
        %2210 = vmatprep.subr.bf16.mxu0 0
        %2211 = vmatpush2.bf16.msra.mxu0 0
        %2212 = vmatprep.subr.bf16.mxu0 0
        %2213 = vmatpush2.bf16.msra.mxu0 0
        %2214 = vmatprep.subr.bf16.mxu0 0
        %2215 = vmatpush2.bf16.msra.mxu0 0
        %2216 = vmatprep.subr.bf16.mxu0 0
        %2217 = vmatpush2.bf16.msra.mxu0 0
        %2218 = vmatprep.mubr.bf16.mxu0 0
        %2219 = vmatmul.mubr.bf16.gmra.mxu0 %v1504
        %v2220 = vpop.f32.mrf.mxu0
        %v2221 = vadd.f32 0.0, %v2220
        %v2222 = vpop.f32.mrf.mxu0
        %v2223 = vpop.f32.mrf.mxu0
        %v2224 = vadd.f32 0.0, %v2223
        %v2225 = vpop.f32.mrf.mxu0
        %2226 = vmatprep.mubr.bf16.mxu0 0
        %2227 = vmatmul.mubr.bf16.gmra.mxu0 %v1507
        %v2228 = vpop.f32.mrf.mxu0
        %v2229 = vadd.f32 0.0, %v2228
        %v2230 = vpop.f32.mrf.mxu0
        %v2231 = vpop.f32.mrf.mxu0
        %v2232 = vadd.f32 0.0, %v2231
        %v2233 = vpop.f32.mrf.mxu0
        %2234 = vmatprep.mubr.bf16.mxu0 0
        %2235 = vmatmul.mubr.bf16.gmra.mxu0 %v1510
        %v2236 = vpop.f32.mrf.mxu0
        %v2237 = vadd.f32 0.0, %v2236
        %v2238 = vpop.f32.mrf.mxu0
        %v2239 = vpop.f32.mrf.mxu0
        %v2240 = vadd.f32 0.0, %v2239
        %v2241 = vpop.f32.mrf.mxu0
        %2242 = vmatprep.mubr.bf16.mxu0 0
        %2243 = vmatmul.mubr.bf16.gmra.mxu0 %v1513
        %v2244 = vpop.f32.mrf.mxu0
        %v2245 = vadd.f32 0.0, %v2244
        %v2246 = vpop.f32.mrf.mxu0
        %v2247 = vpop.f32.mrf.mxu0
        %v2248 = vadd.f32 0.0, %v2247
        %v2249 = vpop.f32.mrf.mxu0
        %2250 = vmatprep.mubr.bf16.mxu0 0
        %2251 = vmatmul.mubr.bf16.gmra.mxu0 %v1516
        %v2252 = vpop.f32.mrf.mxu0
        %v2253 = vadd.f32 0.0, %v2252
        %v2254 = vpop.f32.mrf.mxu0
        %v2255 = vpop.f32.mrf.mxu0
        %v2256 = vadd.f32 0.0, %v2255
        %v2257 = vpop.f32.mrf.mxu0
        %2258 = vmatprep.mubr.bf16.mxu0 0
        %2259 = vmatmul.mubr.bf16.gmra.mxu0 %v1519
        %v2260 = vpop.f32.mrf.mxu0
        %v2261 = vadd.f32 0.0, %v2260
        %v2262 = vpop.f32.mrf.mxu0
        %v2263 = vpop.f32.mrf.mxu0
        %v2264 = vadd.f32 0.0, %v2263
        %v2265 = vpop.f32.mrf.mxu0
        %2266 = vmatprep.mubr.bf16.mxu0 0
        %2267 = vmatmul.mubr.bf16.gmra.mxu0 %v1788
        %v2268 = vpop.f32.mrf.mxu0
        %v2269 = vadd.f32 0.0, %v2268
        %v2270 = vpop.f32.mrf.mxu0
        %v2271 = vpop.f32.mrf.mxu0
        %v2272 = vadd.f32 0.0, %v2271
        %v2273 = vpop.f32.mrf.mxu0
        %2274 = vmatprep.mubr.bf16.mxu0 0
        %2275 = vmatmul.mubr.bf16.gmra.mxu0 %v2184
        %v2276 = vpop.f32.mrf.mxu0
        %v2277 = vadd.f32 0.0, %v2276
        %v2278 = vpop.f32.mrf.mxu0
        %v2279 = vpop.f32.mrf.mxu0
        %v2280 = vadd.f32 0.0, %v2279
        %v2281 = vpop.f32.mrf.mxu0
        %2282 = vdwg.mxu0
        %v2283 = vadd.f32 %v2151, %v2221
        %v2284 = vadd.f32 %v2152, %v2224
        %v2285 = vadd.f32 %v2153, %v2229
        %v2286 = vadd.f32 %v2154, %v2232
        %v2287 = vadd.f32 %v2155, %v2237
        %v2288 = vadd.f32 %v2156, %v2240
        %v2289 = vadd.f32 %v2157, %v2245
        %v2290 = vadd.f32 %v2158, %v2248
        %v2291 = vadd.f32 %v2159, %v2253
        %v2292 = vadd.f32 %v2160, %v2256
        %v2293 = vadd.f32 %v2161, %v2261
        %v2294 = vadd.f32 %v2162, %v2264
        %v2295 = vadd.f32 %v2163, %v2269
        %v2296 = vadd.f32 %v2164, %v2272
        %v2297 = vadd.f32 %v2165, %v2277
        %v2298 = vadd.f32 %v2166, %v2280
        %v2299 = vld [vmem:[%s4 + $0x70] sm:$0xf]
        %v2300 = vld [vmem:[%s4 + $0x74] sm:$0xf]
        %v2301 = vld [vmem:[%s4 + $0x78] sm:$0xf]
        %v2302 = vld [vmem:[%s4 + $0x7c] sm:$0xf]
        %v2307 = vunpack.c.l.b16 %v2299
        %v2308 = vunpack.c.l.b16 %v2300
        %v2309 = vunpack.c.l.b16 %v2301
        %v2310 = vunpack.c.l.b16 %v2302
        %v2311 = vpack.c.b16 %v2308, %v2307
        %v2312 = vpack.c.b16 %v2310, %v2309
        %v2316 = vsel %vm1363, %v1271, 0
        %2318 = vmatprep.subr.bf16.mxu0 0
        %2319 = vmatpush1.bf16.msra.mxu0 0
        %2320 = vmatprep.subr.bf16.mxu0 0
        %2321 = vmatpush1.bf16.msra.mxu0 0
        %2322 = vmatprep.subr.bf16.mxu0 0
        %2323 = vmatpush1.bf16.msra.mxu0 0
        %2324 = vmatprep.subr.bf16.mxu0 0
        %2325 = vmatpush1.bf16.msra.mxu0 0
        %2326 = vmatprep.subr.bf16.mxu0 0
        %2327 = vmatpush1.bf16.msra.mxu0 0
        %2328 = vmatprep.subr.bf16.mxu0 0
        %2329 = vmatpush1.bf16.msra.mxu0 0
        %2330 = vmatprep.subr.bf16.mxu0 0
        %2331 = vmatpush1.bf16.msra.mxu0 %v2312
        %2332 = vmatprep.subr.bf16.mxu0 0
        %2333 = vmatpush1.bf16.msra.mxu0 %v2311
        %2334 = vmatprep.subr.bf16.mxu0 0
        %2335 = vmatpush2.bf16.msra.mxu0 0
        %2336 = vmatprep.subr.bf16.mxu0 0
        %2337 = vmatpush2.bf16.msra.mxu0 0
        %2338 = vmatprep.subr.bf16.mxu0 0
        %2339 = vmatpush2.bf16.msra.mxu0 0
        %2340 = vmatprep.subr.bf16.mxu0 0
        %2341 = vmatpush2.bf16.msra.mxu0 0
        %2342 = vmatprep.subr.bf16.mxu0 0
        %2343 = vmatpush2.bf16.msra.mxu0 0
        %2344 = vmatprep.subr.bf16.mxu0 0
        %2345 = vmatpush2.bf16.msra.mxu0 0
        %2346 = vmatprep.subr.bf16.mxu0 0
        %2347 = vmatpush2.bf16.msra.mxu0 0
        %2348 = vmatprep.subr.bf16.mxu0 0
        %2349 = vmatpush2.bf16.msra.mxu0 0
        %2350 = vmatprep.mubr.bf16.mxu0 0
        %2351 = vmatmul.mubr.bf16.gmra.mxu0 %v1371
        %v2352 = vpop.f32.mrf.mxu0
        %v2353 = vadd.f32 0.0, %v2352
        %v2354 = vpop.f32.mrf.mxu0
        %v2355 = vpop.f32.mrf.mxu0
        %v2356 = vadd.f32 0.0, %v2355
        %v2357 = vpop.f32.mrf.mxu0
        %2358 = vmatprep.mubr.bf16.mxu0 0
        %2359 = vmatmul.mubr.bf16.gmra.mxu0 %v1374
        %v2360 = vpop.f32.mrf.mxu0
        %v2361 = vadd.f32 0.0, %v2360
        %v2362 = vpop.f32.mrf.mxu0
        %v2363 = vpop.f32.mrf.mxu0
        %v2364 = vadd.f32 0.0, %v2363
        %v2365 = vpop.f32.mrf.mxu0
        %2366 = vmatprep.mubr.bf16.mxu0 0
        %2367 = vmatmul.mubr.bf16.gmra.mxu0 %v1377
        %v2368 = vpop.f32.mrf.mxu0
        %v2369 = vadd.f32 0.0, %v2368
        %v2370 = vpop.f32.mrf.mxu0
        %v2371 = vpop.f32.mrf.mxu0
        %v2372 = vadd.f32 0.0, %v2371
        %v2373 = vpop.f32.mrf.mxu0
        %2374 = vmatprep.mubr.bf16.mxu0 0
        %2375 = vmatmul.mubr.bf16.gmra.mxu0 %v1380
        %v2376 = vpop.f32.mrf.mxu0
        %v2377 = vadd.f32 0.0, %v2376
        %v2378 = vpop.f32.mrf.mxu0
        %v2379 = vpop.f32.mrf.mxu0
        %v2380 = vadd.f32 0.0, %v2379
        %v2381 = vpop.f32.mrf.mxu0
        %2382 = vmatprep.mubr.bf16.mxu0 0
        %2383 = vmatmul.mubr.bf16.gmra.mxu0 %v1383
        %v2384 = vpop.f32.mrf.mxu0
        %v2385 = vadd.f32 0.0, %v2384
        %v2386 = vpop.f32.mrf.mxu0
        %v2387 = vpop.f32.mrf.mxu0
        %v2388 = vadd.f32 0.0, %v2387
        %v2389 = vpop.f32.mrf.mxu0
        %2390 = vmatprep.mubr.bf16.mxu0 0
        %2391 = vmatmul.mubr.bf16.gmra.mxu0 %v1386
        %v2392 = vpop.f32.mrf.mxu0
        %v2393 = vadd.f32 0.0, %v2392
        %v2394 = vpop.f32.mrf.mxu0
        %v2395 = vpop.f32.mrf.mxu0
        %v2396 = vadd.f32 0.0, %v2395
        %v2397 = vpop.f32.mrf.mxu0
        %2398 = vmatprep.mubr.bf16.mxu0 0
        %2399 = vmatmul.mubr.bf16.gmra.mxu0 %v1920
        %v2400 = vpop.f32.mrf.mxu0
        %v2401 = vadd.f32 0.0, %v2400
        %v2402 = vpop.f32.mrf.mxu0
        %v2403 = vpop.f32.mrf.mxu0
        %v2404 = vadd.f32 0.0, %v2403
        %v2405 = vpop.f32.mrf.mxu0
        %2406 = vmatprep.mubr.bf16.mxu0 0
        %2407 = vmatmul.mubr.bf16.gmra.mxu0 %v2316
        %v2408 = vpop.f32.mrf.mxu0
        %v2409 = vadd.f32 0.0, %v2408
        %v2410 = vpop.f32.mrf.mxu0
        %v2411 = vpop.f32.mrf.mxu0
        %v2412 = vadd.f32 0.0, %v2411
        %v2413 = vpop.f32.mrf.mxu0
        %2414 = vdwg.mxu0
        %v2415 = vadd.f32 %v2283, %v2353
        %v2416 = vadd.f32 %v2284, %v2356
        %v2417 = vadd.f32 %v2285, %v2361
        %v2418 = vadd.f32 %v2286, %v2364
        %v2419 = vadd.f32 %v2287, %v2369
        %v2420 = vadd.f32 %v2288, %v2372
        %v2421 = vadd.f32 %v2289, %v2377
        %v2422 = vadd.f32 %v2290, %v2380
        %v2423 = vadd.f32 %v2291, %v2385
        %v2424 = vadd.f32 %v2292, %v2388
        %v2425 = vadd.f32 %v2293, %v2393
        %v2426 = vadd.f32 %v2294, %v2396
        %v2427 = vadd.f32 %v2295, %v2401
        %v2428 = vadd.f32 %v2296, %v2404
        %v2429 = vadd.f32 %v2297, %v2409
        %v2430 = vadd.f32 %v2298, %v2412
        %v2431 = vld [vmem:[%s4 + $0x80] sm:$0xf]
        %v2432 = vld [vmem:[%s4 + $0x84] sm:$0xf]
        %v2433 = vld [vmem:[%s4 + $0x88] sm:$0xf]
        %v2434 = vld [vmem:[%s4 + $0x8c] sm:$0xf]
        %v2439 = vunpack.c.l.b16 %v2431
        %v2440 = vunpack.c.l.b16 %v2432
        %v2441 = vunpack.c.l.b16 %v2433
        %v2442 = vunpack.c.l.b16 %v2434
        %v2443 = vpack.c.b16 %v2440, %v2439
        %v2444 = vpack.c.b16 %v2442, %v2441
        %v2448 = vsel %vm1363, %v1342, 0
        %2450 = vmatprep.subr.bf16.mxu0 0
        %2451 = vmatpush1.bf16.msra.mxu0 0
        %2452 = vmatprep.subr.bf16.mxu0 0
        %2453 = vmatpush1.bf16.msra.mxu0 0
        %2454 = vmatprep.subr.bf16.mxu0 0
        %2455 = vmatpush1.bf16.msra.mxu0 0
        %2456 = vmatprep.subr.bf16.mxu0 0
        %2457 = vmatpush1.bf16.msra.mxu0 0
        %2458 = vmatprep.subr.bf16.mxu0 0
        %2459 = vmatpush1.bf16.msra.mxu0 0
        %2460 = vmatprep.subr.bf16.mxu0 0
        %2461 = vmatpush1.bf16.msra.mxu0 0
        %2462 = vmatprep.subr.bf16.mxu0 0
        %2463 = vmatpush1.bf16.msra.mxu0 %v2444
        %2464 = vmatprep.subr.bf16.mxu0 0
        %2465 = vmatpush1.bf16.msra.mxu0 %v2443
        %2466 = vmatprep.subr.bf16.mxu0 0
        %2467 = vmatpush2.bf16.msra.mxu0 0
        %2468 = vmatprep.subr.bf16.mxu0 0
        %2469 = vmatpush2.bf16.msra.mxu0 0
        %2470 = vmatprep.subr.bf16.mxu0 0
        %2471 = vmatpush2.bf16.msra.mxu0 0
        %2472 = vmatprep.subr.bf16.mxu0 0
        %2473 = vmatpush2.bf16.msra.mxu0 0
        %2474 = vmatprep.subr.bf16.mxu0 0
        %2475 = vmatpush2.bf16.msra.mxu0 0
        %2476 = vmatprep.subr.bf16.mxu0 0
        %2477 = vmatpush2.bf16.msra.mxu0 0
        %2478 = vmatprep.subr.bf16.mxu0 0
        %2479 = vmatpush2.bf16.msra.mxu0 0
        %2480 = vmatprep.subr.bf16.mxu0 0
        %2481 = vmatpush2.bf16.msra.mxu0 0
        %2482 = vmatprep.mubr.bf16.mxu0 0
        %2483 = vmatmul.mubr.bf16.gmra.mxu0 %v1641
        %v2484 = vpop.f32.mrf.mxu0
        %v2485 = vadd.f32 0.0, %v2484
        %v2486 = vpop.f32.mrf.mxu0
        %v2487 = vpop.f32.mrf.mxu0
        %v2488 = vadd.f32 0.0, %v2487
        %v2489 = vpop.f32.mrf.mxu0
        %2490 = vmatprep.mubr.bf16.mxu0 0
        %2491 = vmatmul.mubr.bf16.gmra.mxu0 %v1644
        %v2492 = vpop.f32.mrf.mxu0
        %v2493 = vadd.f32 0.0, %v2492
        %v2494 = vpop.f32.mrf.mxu0
        %v2495 = vpop.f32.mrf.mxu0
        %v2496 = vadd.f32 0.0, %v2495
        %v2497 = vpop.f32.mrf.mxu0
        %2498 = vmatprep.mubr.bf16.mxu0 0
        %2499 = vmatmul.mubr.bf16.gmra.mxu0 %v1647
        %v2500 = vpop.f32.mrf.mxu0
        %v2501 = vadd.f32 0.0, %v2500
        %v2502 = vpop.f32.mrf.mxu0
        %v2503 = vpop.f32.mrf.mxu0
        %v2504 = vadd.f32 0.0, %v2503
        %v2505 = vpop.f32.mrf.mxu0
        %2506 = vmatprep.mubr.bf16.mxu0 0
        %2507 = vmatmul.mubr.bf16.gmra.mxu0 %v1650
        %v2508 = vpop.f32.mrf.mxu0
        %v2509 = vadd.f32 0.0, %v2508
        %v2510 = vpop.f32.mrf.mxu0
        %v2511 = vpop.f32.mrf.mxu0
        %v2512 = vadd.f32 0.0, %v2511
        %v2513 = vpop.f32.mrf.mxu0
        %2514 = vmatprep.mubr.bf16.mxu0 0
        %2515 = vmatmul.mubr.bf16.gmra.mxu0 %v1653
        %v2516 = vpop.f32.mrf.mxu0
        %v2517 = vadd.f32 0.0, %v2516
        %v2518 = vpop.f32.mrf.mxu0
        %v2519 = vpop.f32.mrf.mxu0
        %v2520 = vadd.f32 0.0, %v2519
        %v2521 = vpop.f32.mrf.mxu0
        %2522 = vmatprep.mubr.bf16.mxu0 0
        %2523 = vmatmul.mubr.bf16.gmra.mxu0 %v1656
        %v2524 = vpop.f32.mrf.mxu0
        %v2525 = vadd.f32 0.0, %v2524
        %v2526 = vpop.f32.mrf.mxu0
        %v2527 = vpop.f32.mrf.mxu0
        %v2528 = vadd.f32 0.0, %v2527
        %v2529 = vpop.f32.mrf.mxu0
        %2530 = vmatprep.mubr.bf16.mxu0 0
        %2531 = vmatmul.mubr.bf16.gmra.mxu0 %v2052
        %v2532 = vpop.f32.mrf.mxu0
        %v2533 = vadd.f32 0.0, %v2532
        %v2534 = vpop.f32.mrf.mxu0
        %v2535 = vpop.f32.mrf.mxu0
        %v2536 = vadd.f32 0.0, %v2535
        %v2537 = vpop.f32.mrf.mxu0
        %2538 = vmatprep.mubr.bf16.mxu0 0
        %2539 = vmatmul.mubr.bf16.gmra.mxu0 %v2448
        %v2540 = vpop.f32.mrf.mxu0
        %v2541 = vadd.f32 0.0, %v2540
        %v2542 = vpop.f32.mrf.mxu0
        %v2543 = vpop.f32.mrf.mxu0
        %v2544 = vadd.f32 0.0, %v2543
        %v2545 = vpop.f32.mrf.mxu0
        %2546 = vdwg.mxu0
        %v2547 = vadd.f32 %v2415, %v2485
        %v2548 = vadd.f32 %v2416, %v2488
        %v2549 = vadd.f32 %v2417, %v2493
        %v2550 = vadd.f32 %v2418, %v2496
        %v2551 = vadd.f32 %v2419, %v2501
        %v2552 = vadd.f32 %v2420, %v2504
        %v2553 = vadd.f32 %v2421, %v2509
        %v2554 = vadd.f32 %v2422, %v2512
        %v2555 = vadd.f32 %v2423, %v2517
        %v2556 = vadd.f32 %v2424, %v2520
        %v2557 = vadd.f32 %v2425, %v2525
        %v2558 = vadd.f32 %v2426, %v2528
        %v2559 = vadd.f32 %v2427, %v2533
        %v2560 = vadd.f32 %v2428, %v2536
        %v2561 = vadd.f32 %v2429, %v2541
        %v2562 = vadd.f32 %v2430, %v2544
        %v2563 = vld [vmem:[%s7] sm:$0x1]
        %v2565 = vlaneseq
        %v2566 = vshrl.u32 %v2565, 7
        %v2567 = vsub.s32 0, %v2566
        %v2568 = vrot.slane %v2563, %v2567
        %v2570 = vadd.f32 %v2547, %v2568
        %v2571 = vadd.f32 %v2548, %v2568
        %v2572 = vadd.f32 %v2549, %v2568
        %v2573 = vadd.f32 %v2550, %v2568
        %v2574 = vadd.f32 %v2551, %v2568
        %v2575 = vadd.f32 %v2552, %v2568
        %v2576 = vadd.f32 %v2553, %v2568
        %v2577 = vadd.f32 %v2554, %v2568
        %v2578 = vadd.f32 %v2555, %v2568
        %v2579 = vadd.f32 %v2556, %v2568
        %v2580 = vadd.f32 %v2557, %v2568
        %v2581 = vadd.f32 %v2558, %v2568
        %v2582 = vadd.f32 %v2559, %v2568
        %v2583 = vadd.f32 %v2560, %v2568
        %v2584 = vadd.f32 %v2561, %v2568
        %v2585 = vadd.f32 %v2562, %v2568
        %v2586 = vmax.f32 %v2570, 0.0
        %v2587 = vmax.f32 %v2571, 0.0
        %v2588 = vmax.f32 %v2572, 0.0
        %v2589 = vmax.f32 %v2573, 0.0
        %v2590 = vmax.f32 %v2574, 0.0
        %v2591 = vmax.f32 %v2575, 0.0
        %v2592 = vmax.f32 %v2576, 0.0
        %v2593 = vmax.f32 %v2577, 0.0
        %v2594 = vmax.f32 %v2578, 0.0
        %v2595 = vmax.f32 %v2579, 0.0
        %v2596 = vmax.f32 %v2580, 0.0
        %v2597 = vmax.f32 %v2581, 0.0
        %v2598 = vmax.f32 %v2582, 0.0
        %v2599 = vmax.f32 %v2583, 0.0
        %v2600 = vmax.f32 %v2584, 0.0
        %v2601 = vmax.f32 %v2585, 0.0
        %v2602 = vpack.c.bf16 %v2587, %v2586
        %v2603 = vpack.c.bf16 %v2589, %v2588
        %v2604 = vpack.c.bf16 %v2591, %v2590
        %v2605 = vpack.c.bf16 %v2593, %v2592
        %v2606 = vpack.c.bf16 %v2595, %v2594
        %v2607 = vpack.c.bf16 %v2597, %v2596
        %v2608 = vpack.c.bf16 %v2599, %v2598
        %v2609 = vpack.c.bf16 %v2601, %v2600
        %v2610 = vld [vmem:[%s5] sm:$0xf]
        %v2611 = vld [vmem:[%s5 + $0x4] sm:$0xf]
        %v2612 = vld [vmem:[%s5 + $0x8] sm:$0xf]
        %v2613 = vld [vmem:[%s5 + $0xc] sm:$0xf]
        %v2614 = vld [vmem:[%s8] sm:$0x1]
        %v2616 = vlaneseq
        %v2617 = vshrl.u32 %v2616, 7
        %v2618 = vsub.s32 0, %v2617
        %v2619 = vrot.slane %v2614, %v2618
        %v2625 = vunpack.c.l.b16 %v2610
        %v2626 = vunpack.c.l.b16 %v2611
        %v2627 = vunpack.c.l.b16 %v2612
        %v2628 = vunpack.c.l.b16 %v2613
        %v2629 = vpack.c.b16 %v2626, %v2625
        %v2630 = vpack.c.b16 %v2628, %v2627
        %v2634 = vsel %vm1363, %v2602, 0
        %v2637 = vsel %vm1363, %v2603, 0
        %v2640 = vsel %vm1363, %v2604, 0
        %v2643 = vsel %vm1363, %v2605, 0
        %v2646 = vsel %vm1363, %v2606, 0
        %v2649 = vsel %vm1363, %v2607, 0
        %v2652 = vsel %vm1363, %v2608, 0
        %v2655 = vsel %vm1363, %v2609, 0
        %2657 = vmatprep.subr.bf16.mxu0 0
        %2658 = vmatpush1.bf16.msra.mxu0 0
        %2659 = vmatprep.subr.bf16.mxu0 0
        %2660 = vmatpush1.bf16.msra.mxu0 0
        %2661 = vmatprep.subr.bf16.mxu0 0
        %2662 = vmatpush1.bf16.msra.mxu0 0
        %2663 = vmatprep.subr.bf16.mxu0 0
        %2664 = vmatpush1.bf16.msra.mxu0 0
        %2665 = vmatprep.subr.bf16.mxu0 0
        %2666 = vmatpush1.bf16.msra.mxu0 0
        %2667 = vmatprep.subr.bf16.mxu0 0
        %2668 = vmatpush1.bf16.msra.mxu0 0
        %2669 = vmatprep.subr.bf16.mxu0 0
        %2670 = vmatpush1.bf16.msra.mxu0 %v2630
        %2671 = vmatprep.subr.bf16.mxu0 0
        %2672 = vmatpush1.bf16.msra.mxu0 %v2629
        %2673 = vmatprep.subr.bf16.mxu0 0
        %2674 = vmatpush2.bf16.msra.mxu0 0
        %2675 = vmatprep.subr.bf16.mxu0 0
        %2676 = vmatpush2.bf16.msra.mxu0 0
        %2677 = vmatprep.subr.bf16.mxu0 0
        %2678 = vmatpush2.bf16.msra.mxu0 0
        %2679 = vmatprep.subr.bf16.mxu0 0
        %2680 = vmatpush2.bf16.msra.mxu0 0
        %2681 = vmatprep.subr.bf16.mxu0 0
        %2682 = vmatpush2.bf16.msra.mxu0 0
        %2683 = vmatprep.subr.bf16.mxu0 0
        %2684 = vmatpush2.bf16.msra.mxu0 0
        %2685 = vmatprep.subr.bf16.mxu0 0
        %2686 = vmatpush2.bf16.msra.mxu0 0
        %2687 = vmatprep.subr.bf16.mxu0 0
        %2688 = vmatpush2.bf16.msra.mxu0 0
        %2689 = vmatprep.mubr.bf16.mxu0 0
        %2690 = vmatmul.mubr.bf16.gmra.mxu0 %v2634
        %v2691 = vpop.f32.mrf.mxu0
        %v2692 = vadd.f32 %v2619, %v2691
        %v2693 = vpop.f32.mrf.mxu0
        %v2694 = vpop.f32.mrf.mxu0
        %v2695 = vadd.f32 %v2619, %v2694
        %v2696 = vpop.f32.mrf.mxu0
        %2697 = vmatprep.mubr.bf16.mxu0 0
        %2698 = vmatmul.mubr.bf16.gmra.mxu0 %v2637
        %v2699 = vpop.f32.mrf.mxu0
        %v2700 = vadd.f32 %v2619, %v2699
        %v2701 = vpop.f32.mrf.mxu0
        %v2702 = vpop.f32.mrf.mxu0
        %v2703 = vadd.f32 %v2619, %v2702
        %v2704 = vpop.f32.mrf.mxu0
        %2705 = vmatprep.mubr.bf16.mxu0 0
        %2706 = vmatmul.mubr.bf16.gmra.mxu0 %v2640
        %v2707 = vpop.f32.mrf.mxu0
        %v2708 = vadd.f32 %v2619, %v2707
        %v2709 = vpop.f32.mrf.mxu0
        %v2710 = vpop.f32.mrf.mxu0
        %v2711 = vadd.f32 %v2619, %v2710
        %v2712 = vpop.f32.mrf.mxu0
        %2713 = vmatprep.mubr.bf16.mxu0 0
        %2714 = vmatmul.mubr.bf16.gmra.mxu0 %v2643
        %v2715 = vpop.f32.mrf.mxu0
        %v2716 = vadd.f32 %v2619, %v2715
        %v2717 = vpop.f32.mrf.mxu0
        %v2718 = vpop.f32.mrf.mxu0
        %v2719 = vadd.f32 %v2619, %v2718
        %v2720 = vpop.f32.mrf.mxu0
        %2721 = vmatprep.mubr.bf16.mxu0 0
        %2722 = vmatmul.mubr.bf16.gmra.mxu0 %v2646
        %v2723 = vpop.f32.mrf.mxu0
        %v2724 = vadd.f32 %v2619, %v2723
        %v2725 = vpop.f32.mrf.mxu0
        %v2726 = vpop.f32.mrf.mxu0
        %v2727 = vadd.f32 %v2619, %v2726
        %v2728 = vpop.f32.mrf.mxu0
        %2729 = vmatprep.mubr.bf16.mxu0 0
        %2730 = vmatmul.mubr.bf16.gmra.mxu0 %v2649
        %v2731 = vpop.f32.mrf.mxu0
        %v2732 = vadd.f32 %v2619, %v2731
        %v2733 = vpop.f32.mrf.mxu0
        %v2734 = vpop.f32.mrf.mxu0
        %v2735 = vadd.f32 %v2619, %v2734
        %v2736 = vpop.f32.mrf.mxu0
        %2737 = vmatprep.mubr.bf16.mxu0 0
        %2738 = vmatmul.mubr.bf16.gmra.mxu0 %v2652
        %v2739 = vpop.f32.mrf.mxu0
        %v2740 = vadd.f32 %v2619, %v2739
        %v2741 = vpop.f32.mrf.mxu0
        %v2742 = vpop.f32.mrf.mxu0
        %v2743 = vadd.f32 %v2619, %v2742
        %v2744 = vpop.f32.mrf.mxu0
        %2745 = vmatprep.mubr.bf16.mxu0 0
        %2746 = vmatmul.mubr.bf16.gmra.mxu0 %v2655
        %v2747 = vpop.f32.mrf.mxu0
        %v2748 = vadd.f32 %v2619, %v2747
        %v2749 = vpop.f32.mrf.mxu0
        %v2750 = vpop.f32.mrf.mxu0
        %v2751 = vadd.f32 %v2619, %v2750
        %v2752 = vpop.f32.mrf.mxu0
        %2753 = vdwg.mxu0
        %v2754 = vadd.f32 %v2692, %v490
        %v2755 = vadd.f32 %v2695, %v491
        %v2756 = vadd.f32 %v2700, %v492
        %v2757 = vadd.f32 %v2703, %v493
        %v2758 = vadd.f32 %v2708, %v494
        %v2759 = vadd.f32 %v2711, %v495
        %v2760 = vadd.f32 %v2716, %v496
        %v2761 = vadd.f32 %v2719, %v497
        %v2762 = vadd.f32 %v2724, %v498
        %v2763 = vadd.f32 %v2727, %v499
        %v2764 = vadd.f32 %v2732, %v500
        %v2765 = vadd.f32 %v2735, %v501
        %v2766 = vadd.f32 %v2740, %v502
        %v2767 = vadd.f32 %v2743, %v503
        %v2768 = vadd.f32 %v2748, %v504
        %v2769 = vadd.f32 %v2751, %v505
        %v2770 = vmax.f32 %v2754, 0.0
        %v2771 = vmax.f32 %v2755, 0.0
        %v2772 = vmax.f32 %v2756, 0.0
        %v2773 = vmax.f32 %v2757, 0.0
        %v2774 = vmax.f32 %v2758, 0.0
        %v2775 = vmax.f32 %v2759, 0.0
        %v2776 = vmax.f32 %v2760, 0.0
        %v2777 = vmax.f32 %v2761, 0.0
        %v2778 = vmax.f32 %v2762, 0.0
        %v2779 = vmax.f32 %v2763, 0.0
        %v2780 = vmax.f32 %v2764, 0.0
        %v2781 = vmax.f32 %v2765, 0.0
        %v2782 = vmax.f32 %v2766, 0.0
        %v2783 = vmax.f32 %v2767, 0.0
        %v2784 = vmax.f32 %v2768, 0.0
        %v2785 = vmax.f32 %v2769, 0.0
        %2786 = vst [vmem:[%s478] sm:$0xff] %v2770
        %2787 = vst [vmem:[%s478 + $0x8] sm:$0xff] %v2771
        %2788 = vst [vmem:[%s478 + $0x10] sm:$0xff] %v2772
        %2789 = vst [vmem:[%s478 + $0x18] sm:$0xff] %v2773
        %2790 = vst [vmem:[%s478 + $0x20] sm:$0xff] %v2774
        %2791 = vst [vmem:[%s478 + $0x28] sm:$0xff] %v2775
        %2792 = vst [vmem:[%s478 + $0x30] sm:$0xff] %v2776
        %2793 = vst [vmem:[%s478 + $0x38] sm:$0xff] %v2777
        %2794 = vst [vmem:[%s478 + $0x40] sm:$0xff] %v2778
        %2795 = vst [vmem:[%s478 + $0x48] sm:$0xff] %v2779
        %2796 = vst [vmem:[%s478 + $0x50] sm:$0xff] %v2780
        %2797 = vst [vmem:[%s478 + $0x58] sm:$0xff] %v2781
        %2798 = vst [vmem:[%s478 + $0x60] sm:$0xff] %v2782
        %2799 = vst [vmem:[%s478 + $0x68] sm:$0xff] %v2783
        %2800 = vst [vmem:[%s478 + $0x70] sm:$0xff] %v2784
        %2801 = vst [vmem:[%s478 + $0x78] sm:$0xff] %v2785
        %s2802 = sand.u32 %s277, 1
        %s2803 = scalar_lea.sflag [#allocation4], %s2802
        %s2804 = sand.u32 %s277, 1
        %s2805 = smul.addr %s2804, 128
        %s2806 = scalar_lea.vmem [#allocation8], %s2805
        // Predicated region
        $region69: #{tpu_custom_call.1} parent=55 // pred_check
          %p2807 = pneg %p287
        $region70: #{tpu_custom_call.1} parent=55 // pred_check_branch
          %2809 = sbr.rel (%p2807) target = $region72
        $region71: #{tpu_custom_call.1} parent=55 // pred_region
          %s2810 = smul.u32 8, %s34
          %s2812 = ssub.s32 2048, 2048
          %2813 = vsyncadd %s2803, %s2812
          %s2814 = smul.addr %s2810, 2
          %s2815 = smul.addr %s33, 32
          %s2816 = sadd.s32 %s2814, %s2815
          %s2817 = smul.addr %s2816, 128
          %s2818 = scalar_lea.hbm %s9, %s2817
          %s2819 = sshll.u32 %s2806, 4
          %s2820 = int_to_ptr.vmem [resolvable:$true] %s2819
          %2825 = dma.vmem_to_hbm [thread:$0]  %s2820, 2048, %s2818, %s2803, 128, 128, 8
        $region72: #{tpu_custom_call.1} parent=55 // pred_fallthru
          _
      $region56: #{tpu_custom_call.1} parent=5 // pred_fallthru
        _
      %p2826 = scmp.le.s32.totalorder 2, %s24
      // Predicated region
      $region73: #{tpu_custom_call.1} parent=5 // pred_check
        %p2827 = pneg %p2826
      $region74: #{tpu_custom_call.1} parent=5 // pred_check_branch
        %2829 = sbr.rel (%p2827) target = $region76
      $region75: #{tpu_custom_call.1} parent=5 // pred_region
        %s2830 = ssub.s32 %s24, 2
        // Predicated region
        $region77: #{tpu_custom_call.1} parent=75 // pred_check
          %p2831 = pneg %p293
        $region78: #{tpu_custom_call.1} parent=75 // pred_check_branch
          %2833 = sbr.rel (%p2831) target = $region80
        $region79: #{tpu_custom_call.1} parent=75 // pred_region
          %s2834 = sand.u32 %s278, 1
          %s2835 = scalar_lea.sflag [#allocation4], %s2834
          %s2836 = sand.u32 %s278, 1
          %s2837 = smul.addr %s2836, 128
          %s2838 = scalar_lea.vmem [#allocation8], %s2837
          %2839 = dma.done %s2835, 2048
        $region80: #{tpu_custom_call.1} parent=75 // pred_fallthru
          _
      $region76: #{tpu_custom_call.1} parent=5 // pred_fallthru
        _
    $region6: #{tpu_custom_call.1} parent=1 // loop_footer
      %s28 = sadd.s32 1, %s24
    $region7: #{tpu_custom_call.1} parent=1 // loop_footer_branch
      %23 = sbr.rel target = $region3
    $region8: #{tpu_custom_call.1} parent=1 // loop_exit
      _
    %2840 = vsyncpa [#allocation3], 1
    %s2841 = scalar_lea.sflag [#allocation3], 1
    %2842 = vsyncpa %s2841, 1
    %2843 = vsyncpa [#allocation6], 1
    %s2844 = scalar_lea.sflag [#allocation6], 1
    %2845 = vsyncpa %s2844, 1
    %2846 = vsyncpa [#allocation4], 1
    %s2847 = scalar_lea.sflag [#allocation4], 1
    %2848 = vsyncpa %s2847, 1

</llo_original>
